<compile_context>
chip_gen: v6e
topology: v6e:2x2x1
jax: 0.10.0
libtpu: 0.0.40
codegen_flags: <defaults>
</compile_context>

<pallas_src>
import functools

import jax
import jax.numpy as jnp
from jax.experimental import pallas as pl
from jax.experimental.pallas import tpu as pltpu


def mha_kernel(q_ref, k_ref, v_ref, wq_ref, wk_ref, wv_ref, wfc_ref,
               gamma_ref, beta_ref, o_ref, y_stage, *, n_head, d_kv, eps,
               compute_dtype):
    H, dv = n_head, d_kv
    BT, L, d_model = q_ref.shape
    hidden = H * dv
    cdt = compute_dtype
    f32 = jnp.float32

    # ---- Projections: fold the batch tile into the matmul M dim (BT*L rows);
    # one 2-D matmul per projection against the original (d_model, H*dv)
    # weights.  Weights arrive pre-scaled (1/temperature folded into Wq) and
    # pre-cast to the MXU operand dtype; only activations are cast here.
    q2 = q_ref[...].reshape(BT * L, d_model).astype(cdt)
    k2 = k_ref[...].reshape(BT * L, d_model).astype(cdt)
    v2 = v_ref[...].reshape(BT * L, d_model).astype(cdt)

    qp = jnp.dot(q2, wq_ref[...], preferred_element_type=f32).astype(cdt)
    kp = jnp.dot(k2, wk_ref[...], preferred_element_type=f32).astype(cdt)
    vp = jnp.dot(v2, wv_ref[...], preferred_element_type=f32).astype(cdt)

    # ---- Head split: static dv-lane slices + leading-dim concat (h-major
    # merged batch), all layout-cheap; no broadcast copies of activations.
    def split_heads(p):                               # p: (BT*L, H*dv)
        return jnp.concatenate(
            [p[:, h * dv:(h + 1) * dv].reshape(BT, L, dv) for h in range(H)],
            axis=0)                                   # (H*BT, L, dv), h-major

    qh = split_heads(qp)
    kh = split_heads(kp)
    vh = split_heads(vp)                              # single cdt copy of v

    # ---- Scores + softmax for every (head, batch) pair in one batched matmul.
    scores = jnp.einsum('bld,bmd->blm', qh, kh, preferred_element_type=f32)
    m = jnp.max(scores, axis=-1, keepdims=True)
    e = jnp.exp(scores - m)                           # f32 on every chip gen
    s = jnp.sum(e, axis=-1, keepdims=True)
    if compute_dtype == jnp.float32:
        attn = e / s                                  # exact: 1e-4 parity path
    else:
        attn = e * pl.reciprocal(s, approx=True)      # EUP slot, ~free
    attn_c = attn.astype(cdt)
    # TODO(synk): attention dropout (p=0.2, training only) / mask / returning
    #             attn are not implemented.

    # ---- out_h = v_h^T @ attn_h @ v_h as two batched contractions over all
    # (h, b) pairs (no per-index transposes, no serialized tiny matmuls).
    tmp = jnp.einsum('bld,blm->bdm', vh, attn_c,
                     preferred_element_type=f32)      # (H*BT, dv, L)
    oh = jnp.einsum('bdm,bmf->bdf', tmp.astype(cdt), vh,
                    preferred_element_type=f32)       # (H*BT, dv, dv)

    # ---- fc in the original concat form: lane-concat the H per-head results
    # (one static dv->H*dv lane merge) and do a single matmul with Wfc.
    out_cat = jnp.concatenate([oh[h * BT:(h + 1) * BT] for h in range(H)],
                              axis=-1)                # (BT, dv, H*dv)
    y = jnp.dot(out_cat.reshape(BT * dv, hidden).astype(cdt), wfc_ref[...],
                preferred_element_type=f32)           # (BT*dv, dv)

    # ---- LayerNorm over last dim (biased variance, eps inside rsqrt) + affine.
    mu = jnp.mean(y, axis=-1, keepdims=True)
    var = jnp.mean((y - mu) ** 2, axis=-1, keepdims=True)
    out = (y - mu) * jax.lax.rsqrt(var + eps) * gamma_ref[...] + beta_ref[...]

    # ---- Lane-dense output: relayout (BT*dv, dv) -> (BT, dv*dv) by staging
    # the result in VMEM and filling the 256-lane output block row-wise
    # (ref indexing only), so the output DMA writes a dense block.
    y_stage[...] = out.reshape(BT, dv, dv)
    for r in range(dv):
        o_ref[:, r * dv:(r + 1) * dv] = y_stage[:, r, :].astype(o_ref.dtype)


def multi_head_attention(q, k, v, params, *, n_head, d_kv, b_tile=None,
                         compute_dtype=jnp.bfloat16):
    sz_c, len_q, d_model = q.shape
    _, len_k, _ = k.shape
    _, len_v, _ = v.shape
    assert len_q == len_k == len_v, "reference module assumes equal seq lengths"
    L = len_q
    H, dv = n_head, d_kv
    hidden = H * dv

    wq, wk, wv, wfc, gamma, beta = params
    assert wq.shape == (d_model, hidden) and wfc.shape == (hidden, dv)

    # ---- MXU-driven batch tiling: target M = b_tile*L ~ 256 (covers >=128 on
    # v5e too).  One fat step beats many half-empty ones (0.35us fixed cost per
    # grid step); degenerate divisibility (e.g. prime sz_c) falls back to a
    # single big step instead of a per-batch-element grid.
    if b_tile is None:
        target_rows = 256
        max_bt = max(1, target_rows // max(L, 1))
        if sz_c <= max_bt:
            b_tile = sz_c                       # grid=(1,): single-TC optimum
        else:
            divs = [d for d in range(1, max_bt + 1) if sz_c % d == 0]
            best = max(divs)
            b_tile = best if best * 2 >= max_bt else sz_c
    assert sz_c % b_tile == 0
    grid = (sz_c // b_tile,)

    # ---- Grid-invariant weight prep hoisted out of the kernel: fold
    # 1/temperature into Wq once and pre-cast matmul weights to the MXU operand
    # dtype (halves their DMA / double-buffer footprint on the bf16 path).
    # gamma/beta stay f32: they scale the f32 LayerNorm output on the VPU.
    inv_temp = 1.0 / (float(d_kv) ** 0.5)
    wq_s = (wq * inv_temp).astype(compute_dtype)
    wk_s = wk.astype(compute_dtype)
    wv_s = wv.astype(compute_dtype)
    wfc_s = wfc.astype(compute_dtype)

    kernel = functools.partial(mha_kernel, n_head=H, d_kv=dv, eps=1e-6,
                               compute_dtype=compute_dtype)

    # ---- VMEM budget (double-buffered q/k/v/weight blocks + output block +
    # staging scratch); only raise the scoped limit if a large b_tile needs it,
    # capped well inside the v7x 64 MiB physical budget.
    w_bytes = jnp.dtype(compute_dtype).itemsize
    est = (2 * (3 * b_tile * L * d_model * 4
                + (3 * d_model * hidden + hidden * dv) * w_bytes
                + 2 * dv * 4
                + b_tile * dv * dv * 4)
           + b_tile * dv * dv * 4)
    vmem_limit = None if est < (24 << 20) else min(2 * est, 60 << 20)

    out_flat = pl.pallas_call(
        kernel,
        out_shape=jax.ShapeDtypeStruct((sz_c, dv * dv), jnp.float32),
        grid_spec=pltpu.PrefetchScalarGridSpec(
            num_scalar_prefetch=0,
            grid=grid,
            in_specs=[
                pl.BlockSpec((b_tile, L, d_model), lambda b: (b, 0, 0)),
                pl.BlockSpec((b_tile, L, d_model), lambda b: (b, 0, 0)),
                pl.BlockSpec((b_tile, L, d_model), lambda b: (b, 0, 0)),
                pl.BlockSpec((d_model, hidden), lambda b: (0, 0)),
                pl.BlockSpec((d_model, hidden), lambda b: (0, 0)),
                pl.BlockSpec((d_model, hidden), lambda b: (0, 0)),
                pl.BlockSpec((hidden, dv), lambda b: (0, 0)),
                pl.BlockSpec((1, dv), lambda b: (0, 0)),
                pl.BlockSpec((1, dv), lambda b: (0, 0)),
            ],
            out_specs=pl.BlockSpec((b_tile, dv * dv), lambda b: (b, 0)),
            scratch_shapes=[pltpu.VMEM((b_tile, dv, dv), jnp.float32)],
        ),
        compiler_params=pltpu.CompilerParams(
            dimension_semantics=("parallel",),
            vmem_limit_bytes=vmem_limit),
    )(q, k, v, wq_s, wk_s, wv_s, wfc_s, gamma, beta)

    # Lane-dense (sz_c, dv*dv) kernel output -> module's (sz_c, dv, dv).
    return out_flat.reshape(sz_c, dv, dv)


def reference(q, k, v, params, *, n_head, d_kv):
    """Pure-JAX reproduction of the PyTorch forward (inference), for checking."""
    wq, wk, wv, wfc, gamma, beta = params
    sz_c, L, _ = q.shape
    temp = float(d_kv) ** 0.5

    def proj(x, w):
        return (x @ w).reshape(sz_c, L, n_head, d_kv).transpose(0, 2, 1, 3)

    qh, kh, vh = proj(q, wq), proj(k, wk), proj(v, wv)          # (B, H, L, dv)
    attn = jax.nn.softmax((qh / temp) @ kh.transpose(0, 1, 3, 2), axis=-1)
    out = vh.transpose(0, 1, 3, 2) @ attn @ vh                   # (B, H, dv, dv)
    out = out.transpose(0, 2, 1, 3).reshape(sz_c, d_kv, n_head * d_kv)
    y = out @ wfc                                                # (B, dv, dv)
    mu = y.mean(-1, keepdims=True)
    var = ((y - mu) ** 2).mean(-1, keepdims=True)
    return (y - mu) / jnp.sqrt(var + 1e-6) * gamma + beta


if __name__ == "__main__":
    # Small shapes consistent with the module; b_tile auto-selects sz_c here
    # (M = sz_c*L = 32 <= 256), so the whole batch runs as one grid step.
    sz_c, seq_len, d_model = 4, 8, 32
    n_head, d_kv = 2, 16
    hidden = n_head * d_kv

    key = jax.random.PRNGKey(0)
    ks = jax.random.split(key, 8)
    q = jax.random.normal(ks[0], (sz_c, seq_len, d_model), jnp.float32)
    k = jax.random.normal(ks[1], (sz_c, seq_len, d_model), jnp.float32)
    v = jax.random.normal(ks[2], (sz_c, seq_len, d_model), jnp.float32)

    scale = 0.1
    wq = scale * jax.random.normal(ks[3], (d_model, hidden), jnp.float32)
    wk = scale * jax.random.normal(ks[4], (d_model, hidden), jnp.float32)
    wv = scale * jax.random.normal(ks[5], (d_model, hidden), jnp.float32)
    wfc = scale * jax.random.normal(ks[6], (hidden, d_kv), jnp.float32)
    gamma = jnp.ones((1, d_kv), jnp.float32)
    beta = jnp.zeros((1, d_kv), jnp.float32)
    params = (wq, wk, wv, wfc, gamma, beta)

    ref = reference(q, k, v, params, n_head=n_head, d_kv=d_kv)

    # f32 validation path: exact module semantics (tight tolerance).
    out_f32 = multi_head_attention(q, k, v, params, n_head=n_head, d_kv=d_kv,
                                   compute_dtype=jnp.float32)
    out_f32 = jax.block_until_ready(out_f32)
    assert out_f32.shape == (sz_c, d_kv, d_kv)
    assert jnp.allclose(out_f32, ref, atol=1e-4, rtol=1e-4), \
        "f32 kernel mismatch vs pure-JAX reference"

    # bf16-operand fast path (f32 accumulation, approx softmax reciprocal):
    # looser tolerance accounts for bf16 operand rounding.
    out_bf16 = multi_head_attention(q, k, v, params, n_head=n_head, d_kv=d_kv,
                                    compute_dtype=jnp.bfloat16)
    out_bf16 = jax.block_until_ready(out_bf16)
    assert jnp.allclose(out_bf16, ref, atol=1e-1, rtol=1e-1), \
        "bf16 kernel mismatch vs pure-JAX reference"

    print("KERNEL_OK")
</pallas_src>

<mosaic_0001>
module attributes {stable_mosaic.version = 11 : i64} {
  func.func @mha_kernel(%arg0: i32, %arg1: memref<4x8x32xf32, #tpu.memory_space<vmem>>, %arg2: memref<4x8x32xf32, #tpu.memory_space<vmem>>, %arg3: memref<4x8x32xf32, #tpu.memory_space<vmem>>, %arg4: memref<32x32xf32, #tpu.memory_space<vmem>>, %arg5: memref<32x32xf32, #tpu.memory_space<vmem>>, %arg6: memref<32x32xf32, #tpu.memory_space<vmem>>, %arg7: memref<32x16xf32, #tpu.memory_space<vmem>>, %arg8: memref<1x16xf32, #tpu.memory_space<vmem>>, %arg9: memref<1x16xf32, #tpu.memory_space<vmem>>, %arg10: memref<4x256xf32, #tpu.memory_space<vmem>>, %arg11: memref<4x16x16xf32, #tpu.memory_space<vmem>>) attributes {dimension_semantics = [#tpu.dimension_semantics<parallel>], iteration_bounds = array<i64: 1>, scalar_prefetch = 0 : i64, scratch_operands = 1 : i64, tpu.core_type = #tpu.core_type<tc>, window_params = [{transform_indices = @transform_0, window_bounds = array<i64: 4, 8, 32>}, {transform_indices = @transform_1, window_bounds = array<i64: 4, 8, 32>}, {transform_indices = @transform_2, window_bounds = array<i64: 4, 8, 32>}, {pipeline_mode = #tpu.pipeline_mode<synchronous>, transform_indices = @transform_3, window_bounds = array<i64: 32, 32>}, {pipeline_mode = #tpu.pipeline_mode<synchronous>, transform_indices = @transform_4, window_bounds = array<i64: 32, 32>}, {pipeline_mode = #tpu.pipeline_mode<synchronous>, transform_indices = @transform_5, window_bounds = array<i64: 32, 32>}, {pipeline_mode = #tpu.pipeline_mode<synchronous>, transform_indices = @transform_6, window_bounds = array<i64: 32, 16>}, {pipeline_mode = #tpu.pipeline_mode<synchronous>, transform_indices = @transform_7, window_bounds = array<i64: 1, 16>}, {pipeline_mode = #tpu.pipeline_mode<synchronous>, transform_indices = @transform_8, window_bounds = array<i64: 1, 16>}, {transform_indices = @transform_9, window_bounds = array<i64: 4, 256>}]} {
    %c0 = arith.constant 0 : index
    %c0_0 = arith.constant 0 : index
    %c0_1 = arith.constant 0 : index
    %0 = vector.load %arg1[%c0, %c0_0, %c0_1] : memref<4x8x32xf32, #tpu.memory_space<vmem>>, vector<4x8x32xf32>
    %1 = vector.shape_cast %0 : vector<4x8x32xf32> to vector<32x32xf32>
    %c0_2 = arith.constant 0 : index
    %c0_3 = arith.constant 0 : index
    %c0_4 = arith.constant 0 : index
    %2 = vector.load %arg2[%c0_2, %c0_3, %c0_4] : memref<4x8x32xf32, #tpu.memory_space<vmem>>, vector<4x8x32xf32>
    %3 = vector.shape_cast %2 : vector<4x8x32xf32> to vector<32x32xf32>
    %c0_5 = arith.constant 0 : index
    %c0_6 = arith.constant 0 : index
    %c0_7 = arith.constant 0 : index
    %4 = vector.load %arg3[%c0_5, %c0_6, %c0_7] : memref<4x8x32xf32, #tpu.memory_space<vmem>>, vector<4x8x32xf32>
    %5 = vector.shape_cast %4 : vector<4x8x32xf32> to vector<32x32xf32>
    %c0_8 = arith.constant 0 : index
    %c0_9 = arith.constant 0 : index
    %6 = vector.load %arg4[%c0_8, %c0_9] : memref<32x32xf32, #tpu.memory_space<vmem>>, vector<32x32xf32>
    %cst = arith.constant dense<0.000000e+00> : vector<32x32xf32>
    %7 = tpu.matmul %1, %6, %cst {dimension_numbers = #tpu.dot_dimension_numbers<[1], [0], [0], [1], [0, 0, 1, 1], [], []>} : vector<32x32xf32>, vector<32x32xf32>, vector<32x32xf32> -> vector<32x32xf32>
    %c0_10 = arith.constant 0 : index
    %c0_11 = arith.constant 0 : index
    %8 = vector.load %arg5[%c0_10, %c0_11] : memref<32x32xf32, #tpu.memory_space<vmem>>, vector<32x32xf32>
    %cst_12 = arith.constant dense<0.000000e+00> : vector<32x32xf32>
    %9 = tpu.matmul %3, %8, %cst_12 {dimension_numbers = #tpu.dot_dimension_numbers<[1], [0], [0], [1], [0, 0, 1, 1], [], []>} : vector<32x32xf32>, vector<32x32xf32>, vector<32x32xf32> -> vector<32x32xf32>
    %c0_13 = arith.constant 0 : index
    %c0_14 = arith.constant 0 : index
    %10 = vector.load %arg6[%c0_13, %c0_14] : memref<32x32xf32, #tpu.memory_space<vmem>>, vector<32x32xf32>
    %cst_15 = arith.constant dense<0.000000e+00> : vector<32x32xf32>
    %11 = tpu.matmul %5, %10, %cst_15 {dimension_numbers = #tpu.dot_dimension_numbers<[1], [0], [0], [1], [0, 0, 1, 1], [], []>} : vector<32x32xf32>, vector<32x32xf32>, vector<32x32xf32> -> vector<32x32xf32>
    %12 = vector.extract_strided_slice %7 {offsets = [0, 0], sizes = [32, 16], strides = [1, 1]} : vector<32x32xf32> to vector<32x16xf32>
    %13 = vector.shape_cast %12 : vector<32x16xf32> to vector<4x8x16xf32>
    %14 = vector.extract_strided_slice %7 {offsets = [0, 16], sizes = [32, 16], strides = [1, 1]} : vector<32x32xf32> to vector<32x16xf32>
    %15 = vector.shape_cast %14 : vector<32x16xf32> to vector<4x8x16xf32>
    %16 = tpu.concatenate %13, %15 in 0 : vector<4x8x16xf32>, vector<4x8x16xf32> -> vector<8x8x16xf32>
    %17 = vector.extract_strided_slice %9 {offsets = [0, 0], sizes = [32, 16], strides = [1, 1]} : vector<32x32xf32> to vector<32x16xf32>
    %18 = vector.shape_cast %17 : vector<32x16xf32> to vector<4x8x16xf32>
    %19 = vector.extract_strided_slice %9 {offsets = [0, 16], sizes = [32, 16], strides = [1, 1]} : vector<32x32xf32> to vector<32x16xf32>
    %20 = vector.shape_cast %19 : vector<32x16xf32> to vector<4x8x16xf32>
    %21 = tpu.concatenate %18, %20 in 0 : vector<4x8x16xf32>, vector<4x8x16xf32> -> vector<8x8x16xf32>
    %22 = vector.extract_strided_slice %11 {offsets = [0, 0], sizes = [32, 16], strides = [1, 1]} : vector<32x32xf32> to vector<32x16xf32>
    %23 = vector.shape_cast %22 : vector<32x16xf32> to vector<4x8x16xf32>
    %24 = vector.extract_strided_slice %11 {offsets = [0, 16], sizes = [32, 16], strides = [1, 1]} : vector<32x32xf32> to vector<32x16xf32>
    %25 = vector.shape_cast %24 : vector<32x16xf32> to vector<4x8x16xf32>
    %26 = tpu.concatenate %23, %25 in 0 : vector<4x8x16xf32>, vector<4x8x16xf32> -> vector<8x8x16xf32>
    "tpu.trace_start"() <{level = 10 : i32, message = "bld,bmd->blm"}> : () -> ()
    %cst_16 = arith.constant dense<0.000000e+00> : vector<8x8x8xf32>
    %27 = tpu.matmul %16, %21, %cst_16 {dimension_numbers = #tpu.dot_dimension_numbers<[2], [2], [1], [1], [0, 0, 0, 1, 1, 1], [0], [0]>} : vector<8x8x16xf32>, vector<8x8x16xf32>, vector<8x8x8xf32> -> vector<8x8x8xf32>
    "tpu.trace_stop"() : () -> ()
    %cst_17 = arith.constant dense<0xFF800000> : vector<8x8xf32>
    %28 = vector.multi_reduction <maximumf>, %27, %cst_17 [2] : vector<8x8x8xf32> to vector<8x8xf32>
    %29 = vector.shape_cast %28 : vector<8x8xf32> to vector<8x8x1xf32>
    %30 = vector.broadcast %29 : vector<8x8x1xf32> to vector<8x8x8xf32>
    %31 = arith.subf %27, %30 : vector<8x8x8xf32>
    %32 = math.exp %31 : vector<8x8x8xf32>
    %cst_18 = arith.constant dense<0.000000e+00> : vector<8x8xf32>
    %33 = vector.multi_reduction <add>, %32, %cst_18 [2] : vector<8x8x8xf32> to vector<8x8xf32>
    %34 = vector.shape_cast %33 : vector<8x8xf32> to vector<8x8x1xf32>
    %35 = vector.broadcast %34 : vector<8x8x1xf32> to vector<8x8x8xf32>
    %36 = arith.divf %32, %35 : vector<8x8x8xf32>
    "tpu.trace_start"() <{level = 10 : i32, message = "bld,blm->bdm"}> : () -> ()
    %cst_19 = arith.constant dense<0.000000e+00> : vector<8x16x8xf32>
    %37 = tpu.matmul %26, %36, %cst_19 {dimension_numbers = #tpu.dot_dimension_numbers<[1], [1], [2], [2], [0, 0, 0, 2, 1, 2], [0], [0]>} : vector<8x8x16xf32>, vector<8x8x8xf32>, vector<8x16x8xf32> -> vector<8x16x8xf32>
    "tpu.trace_stop"() : () -> ()
    "tpu.trace_start"() <{level = 10 : i32, message = "bdm,bmf->bdf"}> : () -> ()
    %cst_20 = arith.constant dense<0.000000e+00> : vector<8x16x16xf32>
    %38 = tpu.matmul %37, %26, %cst_20 {dimension_numbers = #tpu.dot_dimension_numbers<[2], [1], [1], [2], [0, 0, 0, 1, 1, 2], [0], [0]>} : vector<8x16x8xf32>, vector<8x8x16xf32>, vector<8x16x16xf32> -> vector<8x16x16xf32>
    "tpu.trace_stop"() : () -> ()
    %39 = vector.extract_strided_slice %38 {offsets = [0, 0, 0], sizes = [4, 16, 16], strides = [1, 1, 1]} : vector<8x16x16xf32> to vector<4x16x16xf32>
    %40 = vector.extract_strided_slice %38 {offsets = [4, 0, 0], sizes = [4, 16, 16], strides = [1, 1, 1]} : vector<8x16x16xf32> to vector<4x16x16xf32>
    %41 = tpu.concatenate %39, %40 in 2 : vector<4x16x16xf32>, vector<4x16x16xf32> -> vector<4x16x32xf32>
    %42 = vector.shape_cast %41 : vector<4x16x32xf32> to vector<64x32xf32>
    %c0_21 = arith.constant 0 : index
    %c0_22 = arith.constant 0 : index
    %43 = vector.load %arg7[%c0_21, %c0_22] : memref<32x16xf32, #tpu.memory_space<vmem>>, vector<32x16xf32>
    %cst_23 = arith.constant dense<0.000000e+00> : vector<64x16xf32>
    %44 = tpu.matmul %42, %43, %cst_23 {dimension_numbers = #tpu.dot_dimension_numbers<[1], [0], [0], [1], [0, 0, 1, 1], [], []>} : vector<64x32xf32>, vector<32x16xf32>, vector<64x16xf32> -> vector<64x16xf32>
    %cst_24 = arith.constant dense<0.000000e+00> : vector<64xf32>
    %45 = vector.multi_reduction <add>, %44, %cst_24 [1] : vector<64x16xf32> to vector<64xf32>
    %46 = vector.shape_cast %45 : vector<64xf32> to vector<64x1xf32>
    %cst_25 = arith.constant 1.600000e+01 : f32
    %47 = vector.broadcast %cst_25 : f32 to vector<64x1xf32>
    %48 = arith.divf %46, %47 : vector<64x1xf32>
    %49 = vector.broadcast %48 : vector<64x1xf32> to vector<64x16xf32>
    %50 = arith.subf %44, %49 : vector<64x16xf32>
    %51 = arith.mulf %50, %50 : vector<64x16xf32>
    %cst_26 = arith.constant dense<0.000000e+00> : vector<64xf32>
    %52 = vector.multi_reduction <add>, %51, %cst_26 [1] : vector<64x16xf32> to vector<64xf32>
    %53 = vector.shape_cast %52 : vector<64xf32> to vector<64x1xf32>
    %cst_27 = arith.constant 1.600000e+01 : f32
    %54 = vector.broadcast %cst_27 : f32 to vector<64x1xf32>
    %55 = arith.divf %53, %54 : vector<64x1xf32>
    %56 = vector.broadcast %48 : vector<64x1xf32> to vector<64x16xf32>
    %57 = arith.subf %44, %56 : vector<64x16xf32>
    %cst_28 = arith.constant 9.99999997E-7 : f32
    %58 = vector.broadcast %cst_28 : f32 to vector<64x1xf32>
    %59 = arith.addf %55, %58 : vector<64x1xf32>
    %60 = math.rsqrt %59 : vector<64x1xf32>
    %61 = vector.broadcast %60 : vector<64x1xf32> to vector<64x16xf32>
    %62 = arith.mulf %57, %61 : vector<64x16xf32>
    %c0_29 = arith.constant 0 : index
    %c0_30 = arith.constant 0 : index
    %63 = vector.load %arg8[%c0_29, %c0_30] : memref<1x16xf32, #tpu.memory_space<vmem>>, vector<1x16xf32>
    %64 = vector.broadcast %63 : vector<1x16xf32> to vector<64x16xf32>
    %65 = arith.mulf %62, %64 : vector<64x16xf32>
    %c0_31 = arith.constant 0 : index
    %c0_32 = arith.constant 0 : index
    %66 = vector.load %arg9[%c0_31, %c0_32] : memref<1x16xf32, #tpu.memory_space<vmem>>, vector<1x16xf32>
    %67 = vector.broadcast %66 : vector<1x16xf32> to vector<64x16xf32>
    %68 = arith.addf %65, %67 : vector<64x16xf32>
    %69 = vector.shape_cast %68 : vector<64x16xf32> to vector<4x16x16xf32>
    %c0_33 = arith.constant 0 : index
    %c0_34 = arith.constant 0 : index
    %c0_35 = arith.constant 0 : index
    %70 = vector.load %arg11[%c0_33, %c0_34, %c0_35] : memref<4x16x16xf32, #tpu.memory_space<vmem>>, vector<4x16x16xf32>
    tpu.vector_store %arg11[%c0_33, %c0_34, %c0_35], %69 {strides = array<i32>} : memref<4x16x16xf32, #tpu.memory_space<vmem>>, vector<4x16x16xf32>,
    %c0_36 = arith.constant 0 : index
    %c0_37 = arith.constant 0 : index
    %c0_38 = arith.constant 0 : index
    %71 = vector.load %arg11[%c0_36, %c0_37, %c0_38] : memref<4x16x16xf32, #tpu.memory_space<vmem>>, vector<4x1x16xf32>
    %72 = vector.shape_cast %71 : vector<4x1x16xf32> to vector<4x16xf32>
    %c0_39 = arith.constant 0 : index
    %c0_40 = arith.constant 0 : index
    %73 = vector.load %arg10[%c0_39, %c0_40] : memref<4x256xf32, #tpu.memory_space<vmem>>, vector<4x16xf32>
    tpu.vector_store %arg10[%c0_39, %c0_40], %72 {strides = array<i32>} : memref<4x256xf32, #tpu.memory_space<vmem>>, vector<4x16xf32>,
    %c0_41 = arith.constant 0 : index
    %c1 = arith.constant 1 : index
    %c0_42 = arith.constant 0 : index
    %74 = vector.load %arg11[%c0_41, %c1, %c0_42] : memref<4x16x16xf32, #tpu.memory_space<vmem>>, vector<4x1x16xf32>
    %75 = vector.shape_cast %74 : vector<4x1x16xf32> to vector<4x16xf32>
    %c0_43 = arith.constant 0 : index
    %c16 = arith.constant 16 : index
    %76 = vector.load %arg10[%c0_43, %c16] : memref<4x256xf32, #tpu.memory_space<vmem>>, vector<4x16xf32>
    tpu.vector_store %arg10[%c0_43, %c16], %75 {strides = array<i32>} : memref<4x256xf32, #tpu.memory_space<vmem>>, vector<4x16xf32>,
    %c0_44 = arith.constant 0 : index
    %c2 = arith.constant 2 : index
    %c0_45 = arith.constant 0 : index
    %77 = vector.load %arg11[%c0_44, %c2, %c0_45] : memref<4x16x16xf32, #tpu.memory_space<vmem>>, vector<4x1x16xf32>
    %78 = vector.shape_cast %77 : vector<4x1x16xf32> to vector<4x16xf32>
    %c0_46 = arith.constant 0 : index
    %c32 = arith.constant 32 : index
    %79 = vector.load %arg10[%c0_46, %c32] : memref<4x256xf32, #tpu.memory_space<vmem>>, vector<4x16xf32>
    tpu.vector_store %arg10[%c0_46, %c32], %78 {strides = array<i32>} : memref<4x256xf32, #tpu.memory_space<vmem>>, vector<4x16xf32>,
    %c0_47 = arith.constant 0 : index
    %c3 = arith.constant 3 : index
    %c0_48 = arith.constant 0 : index
    %80 = vector.load %arg11[%c0_47, %c3, %c0_48] : memref<4x16x16xf32, #tpu.memory_space<vmem>>, vector<4x1x16xf32>
    %81 = vector.shape_cast %80 : vector<4x1x16xf32> to vector<4x16xf32>
    %c0_49 = arith.constant 0 : index
    %c48 = arith.constant 48 : index
    %82 = vector.load %arg10[%c0_49, %c48] : memref<4x256xf32, #tpu.memory_space<vmem>>, vector<4x16xf32>
    tpu.vector_store %arg10[%c0_49, %c48], %81 {strides = array<i32>} : memref<4x256xf32, #tpu.memory_space<vmem>>, vector<4x16xf32>,
    %c0_50 = arith.constant 0 : index
    %c4 = arith.constant 4 : index
    %c0_51 = arith.constant 0 : index
    %83 = vector.load %arg11[%c0_50, %c4, %c0_51] : memref<4x16x16xf32, #tpu.memory_space<vmem>>, vector<4x1x16xf32>
    %84 = vector.shape_cast %83 : vector<4x1x16xf32> to vector<4x16xf32>
    %c0_52 = arith.constant 0 : index
    %c64 = arith.constant 64 : index
    %85 = vector.load %arg10[%c0_52, %c64] : memref<4x256xf32, #tpu.memory_space<vmem>>, vector<4x16xf32>
    tpu.vector_store %arg10[%c0_52, %c64], %84 {strides = array<i32>} : memref<4x256xf32, #tpu.memory_space<vmem>>, vector<4x16xf32>,
    %c0_53 = arith.constant 0 : index
    %c5 = arith.constant 5 : index
    %c0_54 = arith.constant 0 : index
    %86 = vector.load %arg11[%c0_53, %c5, %c0_54] : memref<4x16x16xf32, #tpu.memory_space<vmem>>, vector<4x1x16xf32>
    %87 = vector.shape_cast %86 : vector<4x1x16xf32> to vector<4x16xf32>
    %c0_55 = arith.constant 0 : index
    %c80 = arith.constant 80 : index
    %88 = vector.load %arg10[%c0_55, %c80] : memref<4x256xf32, #tpu.memory_space<vmem>>, vector<4x16xf32>
    tpu.vector_store %arg10[%c0_55, %c80], %87 {strides = array<i32>} : memref<4x256xf32, #tpu.memory_space<vmem>>, vector<4x16xf32>,
    %c0_56 = arith.constant 0 : index
    %c6 = arith.constant 6 : index
    %c0_57 = arith.constant 0 : index
    %89 = vector.load %arg11[%c0_56, %c6, %c0_57] : memref<4x16x16xf32, #tpu.memory_space<vmem>>, vector<4x1x16xf32>
    %90 = vector.shape_cast %89 : vector<4x1x16xf32> to vector<4x16xf32>
    %c0_58 = arith.constant 0 : index
    %c96 = arith.constant 96 : index
    %91 = vector.load %arg10[%c0_58, %c96] : memref<4x256xf32, #tpu.memory_space<vmem>>, vector<4x16xf32>
    tpu.vector_store %arg10[%c0_58, %c96], %90 {strides = array<i32>} : memref<4x256xf32, #tpu.memory_space<vmem>>, vector<4x16xf32>,
    %c0_59 = arith.constant 0 : index
    %c7 = arith.constant 7 : index
    %c0_60 = arith.constant 0 : index
    %92 = vector.load %arg11[%c0_59, %c7, %c0_60] : memref<4x16x16xf32, #tpu.memory_space<vmem>>, vector<4x1x16xf32>
    %93 = vector.shape_cast %92 : vector<4x1x16xf32> to vector<4x16xf32>
    %c0_61 = arith.constant 0 : index
    %c112 = arith.constant 112 : index
    %94 = vector.load %arg10[%c0_61, %c112] : memref<4x256xf32, #tpu.memory_space<vmem>>, vector<4x16xf32>
    tpu.vector_store %arg10[%c0_61, %c112], %93 {strides = array<i32>} : memref<4x256xf32, #tpu.memory_space<vmem>>, vector<4x16xf32>,
    %c0_62 = arith.constant 0 : index
    %c8 = arith.constant 8 : index
    %c0_63 = arith.constant 0 : index
    %95 = vector.load %arg11[%c0_62, %c8, %c0_63] : memref<4x16x16xf32, #tpu.memory_space<vmem>>, vector<4x1x16xf32>
    %96 = vector.shape_cast %95 : vector<4x1x16xf32> to vector<4x16xf32>
    %c0_64 = arith.constant 0 : index
    %c128 = arith.constant 128 : index
    %97 = vector.load %arg10[%c0_64, %c128] : memref<4x256xf32, #tpu.memory_space<vmem>>, vector<4x16xf32>
    tpu.vector_store %arg10[%c0_64, %c128], %96 {strides = array<i32>} : memref<4x256xf32, #tpu.memory_space<vmem>>, vector<4x16xf32>,
    %c0_65 = arith.constant 0 : index
    %c9 = arith.constant 9 : index
    %c0_66 = arith.constant 0 : index
    %98 = vector.load %arg11[%c0_65, %c9, %c0_66] : memref<4x16x16xf32, #tpu.memory_space<vmem>>, vector<4x1x16xf32>
    %99 = vector.shape_cast %98 : vector<4x1x16xf32> to vector<4x16xf32>
    %c0_67 = arith.constant 0 : index
    %c144 = arith.constant 144 : index
    %100 = vector.load %arg10[%c0_67, %c144] : memref<4x256xf32, #tpu.memory_space<vmem>>, vector<4x16xf32>
    tpu.vector_store %arg10[%c0_67, %c144], %99 {strides = array<i32>} : memref<4x256xf32, #tpu.memory_space<vmem>>, vector<4x16xf32>,
    %c0_68 = arith.constant 0 : index
    %c10 = arith.constant 10 : index
    %c0_69 = arith.constant 0 : index
    %101 = vector.load %arg11[%c0_68, %c10, %c0_69] : memref<4x16x16xf32, #tpu.memory_space<vmem>>, vector<4x1x16xf32>
    %102 = vector.shape_cast %101 : vector<4x1x16xf32> to vector<4x16xf32>
    %c0_70 = arith.constant 0 : index
    %c160 = arith.constant 160 : index
    %103 = vector.load %arg10[%c0_70, %c160] : memref<4x256xf32, #tpu.memory_space<vmem>>, vector<4x16xf32>
    tpu.vector_store %arg10[%c0_70, %c160], %102 {strides = array<i32>} : memref<4x256xf32, #tpu.memory_space<vmem>>, vector<4x16xf32>,
    %c0_71 = arith.constant 0 : index
    %c11 = arith.constant 11 : index
    %c0_72 = arith.constant 0 : index
    %104 = vector.load %arg11[%c0_71, %c11, %c0_72] : memref<4x16x16xf32, #tpu.memory_space<vmem>>, vector<4x1x16xf32>
    %105 = vector.shape_cast %104 : vector<4x1x16xf32> to vector<4x16xf32>
    %c0_73 = arith.constant 0 : index
    %c176 = arith.constant 176 : index
    %106 = vector.load %arg10[%c0_73, %c176] : memref<4x256xf32, #tpu.memory_space<vmem>>, vector<4x16xf32>
    tpu.vector_store %arg10[%c0_73, %c176], %105 {strides = array<i32>} : memref<4x256xf32, #tpu.memory_space<vmem>>, vector<4x16xf32>,
    %c0_74 = arith.constant 0 : index
    %c12 = arith.constant 12 : index
    %c0_75 = arith.constant 0 : index
    %107 = vector.load %arg11[%c0_74, %c12, %c0_75] : memref<4x16x16xf32, #tpu.memory_space<vmem>>, vector<4x1x16xf32>
    %108 = vector.shape_cast %107 : vector<4x1x16xf32> to vector<4x16xf32>
    %c0_76 = arith.constant 0 : index
    %c192 = arith.constant 192 : index
    %109 = vector.load %arg10[%c0_76, %c192] : memref<4x256xf32, #tpu.memory_space<vmem>>, vector<4x16xf32>
    tpu.vector_store %arg10[%c0_76, %c192], %108 {strides = array<i32>} : memref<4x256xf32, #tpu.memory_space<vmem>>, vector<4x16xf32>,
    %c0_77 = arith.constant 0 : index
    %c13 = arith.constant 13 : index
    %c0_78 = arith.constant 0 : index
    %110 = vector.load %arg11[%c0_77, %c13, %c0_78] : memref<4x16x16xf32, #tpu.memory_space<vmem>>, vector<4x1x16xf32>
    %111 = vector.shape_cast %110 : vector<4x1x16xf32> to vector<4x16xf32>
    %c0_79 = arith.constant 0 : index
    %c208 = arith.constant 208 : index
    %112 = vector.load %arg10[%c0_79, %c208] : memref<4x256xf32, #tpu.memory_space<vmem>>, vector<4x16xf32>
    tpu.vector_store %arg10[%c0_79, %c208], %111 {strides = array<i32>} : memref<4x256xf32, #tpu.memory_space<vmem>>, vector<4x16xf32>,
    %c0_80 = arith.constant 0 : index
    %c14 = arith.constant 14 : index
    %c0_81 = arith.constant 0 : index
    %113 = vector.load %arg11[%c0_80, %c14, %c0_81] : memref<4x16x16xf32, #tpu.memory_space<vmem>>, vector<4x1x16xf32>
    %114 = vector.shape_cast %113 : vector<4x1x16xf32> to vector<4x16xf32>
    %c0_82 = arith.constant 0 : index
    %c224 = arith.constant 224 : index
    %115 = vector.load %arg10[%c0_82, %c224] : memref<4x256xf32, #tpu.memory_space<vmem>>, vector<4x16xf32>
    tpu.vector_store %arg10[%c0_82, %c224], %114 {strides = array<i32>} : memref<4x256xf32, #tpu.memory_space<vmem>>, vector<4x16xf32>,
    %c0_83 = arith.constant 0 : index
    %c15 = arith.constant 15 : index
    %c0_84 = arith.constant 0 : index
    %116 = vector.load %arg11[%c0_83, %c15, %c0_84] : memref<4x16x16xf32, #tpu.memory_space<vmem>>, vector<4x1x16xf32>
    %117 = vector.shape_cast %116 : vector<4x1x16xf32> to vector<4x16xf32>
    %c0_85 = arith.constant 0 : index
    %c240 = arith.constant 240 : index
    %118 = vector.load %arg10[%c0_85, %c240] : memref<4x256xf32, #tpu.memory_space<vmem>>, vector<4x16xf32>
    tpu.vector_store %arg10[%c0_85, %c240], %117 {strides = array<i32>} : memref<4x256xf32, #tpu.memory_space<vmem>>, vector<4x16xf32>,
    return
  }
  func.func @transform_0(%arg0: i32) -> (i32, i32, i32) {
    %c0_i32 = arith.constant 0 : i32
    %c0_i32_0 = arith.constant 0 : i32
    %c0_i32_1 = arith.constant 0 : i32
    return %arg0, %c0_i32, %c0_i32_0 : i32, i32, i32
  }
  func.func @transform_1(%arg0: i32) -> (i32, i32, i32) {
    %c0_i32 = arith.constant 0 : i32
    %c0_i32_0 = arith.constant 0 : i32
    %c0_i32_1 = arith.constant 0 : i32
    return %arg0, %c0_i32, %c0_i32_0 : i32, i32, i32
  }
  func.func @transform_2(%arg0: i32) -> (i32, i32, i32) {
    %c0_i32 = arith.constant 0 : i32
    %c0_i32_0 = arith.constant 0 : i32
    %c0_i32_1 = arith.constant 0 : i32
    return %arg0, %c0_i32, %c0_i32_0 : i32, i32, i32
  }
  func.func @transform_3(%arg0: i32) -> (i32, i32) {
    %c0_i32 = arith.constant 0 : i32
    %c0_i32_0 = arith.constant 0 : i32
    %c0_i32_1 = arith.constant 0 : i32
    return %c0_i32, %c0_i32_0 : i32, i32
  }
  func.func @transform_4(%arg0: i32) -> (i32, i32) {
    %c0_i32 = arith.constant 0 : i32
    %c0_i32_0 = arith.constant 0 : i32
    %c0_i32_1 = arith.constant 0 : i32
    return %c0_i32, %c0_i32_0 : i32, i32
  }
  func.func @transform_5(%arg0: i32) -> (i32, i32) {
    %c0_i32 = arith.constant 0 : i32
    %c0_i32_0 = arith.constant 0 : i32
    %c0_i32_1 = arith.constant 0 : i32
    return %c0_i32, %c0_i32_0 : i32, i32
  }
  func.func @transform_6(%arg0: i32) -> (i32, i32) {
    %c0_i32 = arith.constant 0 : i32
    %c0_i32_0 = arith.constant 0 : i32
    %c0_i32_1 = arith.constant 0 : i32
    return %c0_i32, %c0_i32_0 : i32, i32
  }
  func.func @transform_7(%arg0: i32) -> (i32, i32) {
    %c0_i32 = arith.constant 0 : i32
    %c0_i32_0 = arith.constant 0 : i32
    %c0_i32_1 = arith.constant 0 : i32
    return %c0_i32, %c0_i32_0 : i32, i32
  }
  func.func @transform_8(%arg0: i32) -> (i32, i32) {
    %c0_i32 = arith.constant 0 : i32
    %c0_i32_0 = arith.constant 0 : i32
    %c0_i32_1 = arith.constant 0 : i32
    return %c0_i32, %c0_i32_0 : i32, i32
  }
  func.func @transform_9(%arg0: i32) -> (i32, i32) {
    %c0_i32 = arith.constant 0 : i32
    %c0_i32_0 = arith.constant 0 : i32
    return %arg0, %c0_i32 : i32, i32
  }
}

</mosaic_0001>

<llo_original>
// kernel: tpu_custom_call.1
$region0: #{tpu_custom_call.1}
  #allocation0 [shape = 'u32[]', space=smem, size = 0x4, offset = 0x4, fixed_abs, tag = 'smem constant byte address 0x4 - core index']
  #allocation1 [shape = 'u32[144,128]{1,0:T(1,128)}', space=vmem, size = 0x12000, scoped, tag = 'internal scratch']
  #allocation2 [shape = 'f32[4,16,16]{2,1,0:T(8,128)}', space=vmem, size = 0x8000, scoped, tag = 'scratch operand']
  %s0 = inlined_call_operand.vmem [shape: f32[4,8,32], index: 0, kind: input, shape index: {}]
  %s1 = inlined_call_operand.hbm [shape: f32[4,8,32], index: 1, kind: input, shape index: {}]
  %s2 = inlined_call_operand.hbm [shape: f32[4,8,32], index: 2, kind: input, shape index: {}]
  %s3 = inlined_call_operand.hbm [shape: f32[32,32], index: 3, kind: input, shape index: {}]
  %s4 = inlined_call_operand.hbm [shape: f32[32,32], index: 4, kind: input, shape index: {}]
  %s5 = inlined_call_operand.hbm [shape: f32[32,32], index: 5, kind: input, shape index: {}]
  %s6 = inlined_call_operand.vmem [shape: f32[32,16], index: 6, kind: input, shape index: {}]
  %s7 = inlined_call_operand.vmem [shape: f32[1,16], index: 7, kind: input, shape index: {}]
  %s8 = inlined_call_operand.vmem [shape: f32[1,16], index: 8, kind: input, shape index: {}]
  %s9 = inlined_call_operand.hbm [shape: f32[4,256], index: 9, kind: output, shape index: {}]
  %s10 = sld [smem:[#allocation0]]
  $region66: #{tpu_custom_call.1} parent=0
    _
  %s12 = ssub.s32 1, %s10
  %s13 = scalar_select 0, %s12, %s10
  $region1: #{tpu_custom_call.1} parent=0
    #allocation3 [shape = 'u8[16384]{0}', space=vmem, size = 0x4000, scoped, tag = 'input window, operand 1, single buffered']
    #allocation4 [shape = 's32[1]{0}', space=sflag, size = 0x4, scoped, tag = 'scoped memory for tpu_custom_call.1']
    #allocation5 [shape = 's32[1]{0}', space=sflag, size = 0x4, scoped, tag = 'scoped memory for tpu_custom_call.1']
    #allocation6 [shape = 'u8[16384]{0}', space=vmem, size = 0x4000, scoped, tag = 'input window, operand 2, single buffered']
    #allocation7 [shape = 's32[1]{0}', space=sflag, size = 0x4, scoped, tag = 'scoped memory for tpu_custom_call.1']
    #allocation8 [shape = 'u8[16384]{0}', space=vmem, size = 0x4000, scoped, tag = 'input window, operand 3, single buffered']
    #allocation9 [shape = 'u8[16384]{0}', space=vmem, size = 0x4000, scoped, tag = 'input window, operand 4, single buffered']
    #allocation10 [shape = 's32[1]{0}', space=sflag, size = 0x4, scoped, tag = 'scoped memory for tpu_custom_call.1']
    #allocation11 [shape = 'u8[16384]{0}', space=vmem, size = 0x4000, scoped, tag = 'input window, operand 5, single buffered']
    #allocation12 [shape = 'u8[4096]{0}', space=vmem, size = 0x1000, scoped, tag = 'output window, operand 0, single buffered']
    %14 = vsyncpa [#allocation4], 0
    %15 = vsyncpa [#allocation7], 0
    %16 = vsyncpa [#allocation10], 0
    %17 = vsyncpa [#allocation5], 0
    // Predicated region
    $region2: #{tpu_custom_call.1} parent=1 // pred_check
      _
    $region3: #{tpu_custom_call.1} parent=1 // pred_check_branch
      %19 = sbr.rel (0) target = $region5
    $region4: #{tpu_custom_call.1} parent=1 // pred_region
      _
    $region5: #{tpu_custom_call.1} parent=1 // pred_fallthru
      _
    // Predicated region
    $region6: #{tpu_custom_call.1} parent=1 // pred_check
      _
    $region7: #{tpu_custom_call.1} parent=1 // pred_check_branch
      %21 = sbr.rel (0) target = $region9
    $region8: #{tpu_custom_call.1} parent=1 // pred_region
      %s23 = ssub.s32 512, 512
      %24 = vsyncadd [#allocation4], %s23
      %s25 = sshll.u32 [#allocation3], 4
      %s26 = int_to_ptr.vmem [resolvable:$true] %s25
      %31 = dma.hbm_to_vmem [thread:$0]  %s1, 512, %s26, [#allocation4], 128, 128, 8
    $region9: #{tpu_custom_call.1} parent=1 // pred_fallthru
      _
    // Predicated region
    $region10: #{tpu_custom_call.1} parent=1 // pred_check
      _
    $region11: #{tpu_custom_call.1} parent=1 // pred_check_branch
      %33 = sbr.rel (0) target = $region13
    $region12: #{tpu_custom_call.1} parent=1 // pred_region
      %s35 = ssub.s32 512, 512
      %36 = vsyncadd [#allocation7], %s35
      %s37 = sshll.u32 [#allocation6], 4
      %s38 = int_to_ptr.vmem [resolvable:$true] %s37
      %43 = dma.hbm_to_vmem [thread:$0]  %s2, 512, %s38, [#allocation7], 128, 128, 8
    $region13: #{tpu_custom_call.1} parent=1 // pred_fallthru
      _
    // Predicated region
    $region14: #{tpu_custom_call.1} parent=1 // pred_check
      _
    $region15: #{tpu_custom_call.1} parent=1 // pred_check_branch
      %45 = sbr.rel (0) target = $region17
    $region16: #{tpu_custom_call.1} parent=1 // pred_region
      %s47 = ssub.s32 512, 512
      %48 = vsyncadd [#allocation7], %s47
      %s49 = sshll.u32 [#allocation8], 4
      %s50 = int_to_ptr.vmem [resolvable:$true] %s49
      %55 = dma.hbm_to_vmem [thread:$0]  %s3, 512, %s50, [#allocation7], 128, 128, 8
    $region17: #{tpu_custom_call.1} parent=1 // pred_fallthru
      _
    // Predicated region
    $region18: #{tpu_custom_call.1} parent=1 // pred_check
      _
    $region19: #{tpu_custom_call.1} parent=1 // pred_check_branch
      %57 = sbr.rel (0) target = $region21
    $region20: #{tpu_custom_call.1} parent=1 // pred_region
      %s59 = ssub.s32 512, 512
      %60 = vsyncadd [#allocation10], %s59
      %s61 = sshll.u32 [#allocation9], 4
      %s62 = int_to_ptr.vmem [resolvable:$true] %s61
      %67 = dma.hbm_to_vmem [thread:$0]  %s4, 512, %s62, [#allocation10], 128, 128, 8
    $region21: #{tpu_custom_call.1} parent=1 // pred_fallthru
      _
    // Predicated region
    $region22: #{tpu_custom_call.1} parent=1 // pred_check
      _
    $region23: #{tpu_custom_call.1} parent=1 // pred_check_branch
      %69 = sbr.rel (0) target = $region25
    $region24: #{tpu_custom_call.1} parent=1 // pred_region
      %s71 = ssub.s32 512, 512
      %72 = vsyncadd [#allocation10], %s71
      %s73 = sshll.u32 [#allocation11], 4
      %s74 = int_to_ptr.vmem [resolvable:$true] %s73
      %79 = dma.hbm_to_vmem [thread:$0]  %s5, 512, %s74, [#allocation10], 128, 128, 8
    $region25: #{tpu_custom_call.1} parent=1 // pred_fallthru
      _
    // Predicated region
    $region26: #{tpu_custom_call.1} parent=1 // pred_check
      _
    $region27: #{tpu_custom_call.1} parent=1 // pred_check_branch
      %81 = sbr.rel (0) target = $region29
    $region28: #{tpu_custom_call.1} parent=1 // pred_region
      _
    $region29: #{tpu_custom_call.1} parent=1 // pred_fallthru
      _
    // Predicated region
    $region30: #{tpu_custom_call.1} parent=1 // pred_check
      _
    $region31: #{tpu_custom_call.1} parent=1 // pred_check_branch
      %83 = sbr.rel (0) target = $region33
    $region32: #{tpu_custom_call.1} parent=1 // pred_region
      _
    $region33: #{tpu_custom_call.1} parent=1 // pred_fallthru
      _
    // Predicated region
    $region34: #{tpu_custom_call.1} parent=1 // pred_check
      _
    $region35: #{tpu_custom_call.1} parent=1 // pred_check_branch
      %85 = sbr.rel (0) target = $region37
    $region36: #{tpu_custom_call.1} parent=1 // pred_region
      _
    $region37: #{tpu_custom_call.1} parent=1 // pred_fallthru
      _
    // Predicated region
    $region38: #{tpu_custom_call.1} parent=1 // pred_check
      _
    $region39: #{tpu_custom_call.1} parent=1 // pred_check_branch
      %87 = sbr.rel (0) target = $region41
    $region40: #{tpu_custom_call.1} parent=1 // pred_region
      %88 = dma.done [#allocation4], 512
    $region41: #{tpu_custom_call.1} parent=1 // pred_fallthru
      _
    // Predicated region
    $region42: #{tpu_custom_call.1} parent=1 // pred_check
      _
    $region43: #{tpu_custom_call.1} parent=1 // pred_check_branch
      %90 = sbr.rel (0) target = $region45
    $region44: #{tpu_custom_call.1} parent=1 // pred_region
      %91 = dma.done [#allocation7], 512
    $region45: #{tpu_custom_call.1} parent=1 // pred_fallthru
      _
    // Predicated region
    $region46: #{tpu_custom_call.1} parent=1 // pred_check
      _
    $region47: #{tpu_custom_call.1} parent=1 // pred_check_branch
      %93 = sbr.rel (0) target = $region49
    $region48: #{tpu_custom_call.1} parent=1 // pred_region
      %94 = dma.done [#allocation7], 512
    $region49: #{tpu_custom_call.1} parent=1 // pred_fallthru
      _
    // Predicated region
    $region50: #{tpu_custom_call.1} parent=1 // pred_check
      _
    $region51: #{tpu_custom_call.1} parent=1 // pred_check_branch
      %96 = sbr.rel (0) target = $region53
    $region52: #{tpu_custom_call.1} parent=1 // pred_region
      %97 = dma.done [#allocation10], 512
    $region53: #{tpu_custom_call.1} parent=1 // pred_fallthru
      _
    // Predicated region
    $region54: #{tpu_custom_call.1} parent=1 // pred_check
      _
    $region55: #{tpu_custom_call.1} parent=1 // pred_check_branch
      %99 = sbr.rel (0) target = $region57
    $region56: #{tpu_custom_call.1} parent=1 // pred_region
      %100 = dma.done [#allocation10], 512
    $region57: #{tpu_custom_call.1} parent=1 // pred_fallthru
      _
    %v101 = vld [vmem:[%s0] sm:$0xff]
    %v102 = vld [vmem:[%s0 + $0x8] sm:$0xff]
    %v103 = vld [vmem:[%s0 + $0x10] sm:$0xff]
    %v104 = vld [vmem:[%s0 + $0x18] sm:$0xff]
    %v105 = vld [vmem:[#allocation3] sm:$0xff]
    %v106 = vld [vmem:[#allocation3 + $0x8] sm:$0xff]
    %v107 = vld [vmem:[#allocation3 + $0x10] sm:$0xff]
    %v108 = vld [vmem:[#allocation3 + $0x18] sm:$0xff]
    %v109 = vld [vmem:[#allocation6] sm:$0xff]
    %v110 = vld [vmem:[#allocation6 + $0x8] sm:$0xff]
    %v111 = vld [vmem:[#allocation6 + $0x10] sm:$0xff]
    %v112 = vld [vmem:[#allocation6 + $0x18] sm:$0xff]
    %v113 = vld [vmem:[#allocation8] sm:$0xff]
    %v114 = vld [vmem:[#allocation8 + $0x8] sm:$0xff]
    %v115 = vld [vmem:[#allocation8 + $0x10] sm:$0xff]
    %v116 = vld [vmem:[#allocation8 + $0x18] sm:$0xff]
    %vm117 = vcmask 261120
    %v119 = vsel %vm117, %v101, 0
    %v122 = vsel %vm117, %v102, 0
    %v125 = vsel %vm117, %v103, 0
    %v128 = vsel %vm117, %v104, 0
    %130 = vmatprep.subr.mxu0 0.0
    %131 = vmatpush1.msra.mxu0 0.0
    %132 = vmatprep.subr.mxu0 0.0
    %133 = vmatpush1.msra.mxu0 0.0
    %134 = vmatprep.subr.mxu0 0.0
    %135 = vmatpush1.msra.mxu0 0.0
    %136 = vmatprep.subr.mxu0 0.0
    %137 = vmatpush1.msra.mxu0 0.0
    %138 = vmatprep.subr.mxu0 0.0
    %139 = vmatpush1.msra.mxu0 0.0
    %140 = vmatprep.subr.mxu0 0.0
    %141 = vmatpush1.msra.mxu0 0.0
    %142 = vmatprep.subr.mxu0 0.0
    %143 = vmatpush1.msra.mxu0 0.0
    %144 = vmatprep.subr.mxu0 0.0
    %145 = vmatpush1.msra.mxu0 0.0
    %146 = vmatprep.subr.mxu0 0.0
    %147 = vmatpush1.msra.mxu0 0.0
    %148 = vmatprep.subr.mxu0 0.0
    %149 = vmatpush1.msra.mxu0 0.0
    %150 = vmatprep.subr.mxu0 0.0
    %151 = vmatpush1.msra.mxu0 0.0
    %152 = vmatprep.subr.mxu0 0.0
    %153 = vmatpush1.msra.mxu0 0.0
    %154 = vmatprep.subr.mxu0 0.0
    %155 = vmatpush1.msra.mxu0 %v116
    %156 = vmatprep.subr.mxu0 0.0
    %157 = vmatpush1.msra.mxu0 %v115
    %158 = vmatprep.subr.mxu0 0.0
    %159 = vmatpush1.msra.mxu0 %v114
    %160 = vmatprep.subr.mxu0 0.0
    %161 = vmatpush1.msra.mxu0 %v113
    %162 = vmatprep.subr.mxu0 0.0
    %163 = vmatpush2.msra.mxu0 0.0
    %164 = vmatprep.subr.mxu0 0.0
    %165 = vmatpush2.msra.mxu0 0.0
    %166 = vmatprep.subr.mxu0 0.0
    %167 = vmatpush2.msra.mxu0 0.0
    %168 = vmatprep.subr.mxu0 0.0
    %169 = vmatpush2.msra.mxu0 0.0
    %170 = vmatprep.subr.mxu0 0.0
    %171 = vmatpush2.msra.mxu0 0.0
    %172 = vmatprep.subr.mxu0 0.0
    %173 = vmatpush2.msra.mxu0 0.0
    %174 = vmatprep.subr.mxu0 0.0
    %175 = vmatpush2.msra.mxu0 0.0
    %176 = vmatprep.subr.mxu0 0.0
    %177 = vmatpush2.msra.mxu0 0.0
    %178 = vmatprep.subr.mxu0 0.0
    %179 = vmatpush2.msra.mxu0 0.0
    %180 = vmatprep.subr.mxu0 0.0
    %181 = vmatpush2.msra.mxu0 0.0
    %182 = vmatprep.subr.mxu0 0.0
    %183 = vmatpush2.msra.mxu0 0.0
    %184 = vmatprep.subr.mxu0 0.0
    %185 = vmatpush2.msra.mxu0 0.0
    %186 = vmatprep.subr.mxu0 0.0
    %187 = vmatpush2.msra.mxu0 0.0
    %188 = vmatprep.subr.mxu0 0.0
    %189 = vmatpush2.msra.mxu0 0.0
    %190 = vmatprep.subr.mxu0 0.0
    %191 = vmatpush2.msra.mxu0 0.0
    %192 = vmatprep.subr.mxu0 0.0
    %193 = vmatpush2.msra.mxu0 0.0
    %194 = vmatprep.mubr.f32.mxu0 0.0
    %195 = vmatmul.mubr.f32.gmra.mxu0 %v119
    %v196 = vpop.f32.mrf.mxu0
    %v197 = vadd.f32 0.0, %v196
    %v198 = vpop.f32.mrf.mxu0
    %199 = vmatprep.mubr.f32.mxu0 0.0
    %200 = vmatmul.mubr.f32.gmra.mxu0 %v122
    %v201 = vpop.f32.mrf.mxu0
    %v202 = vadd.f32 0.0, %v201
    %v203 = vpop.f32.mrf.mxu0
    %204 = vmatprep.mubr.f32.mxu0 0.0
    %205 = vmatmul.mubr.f32.gmra.mxu0 %v125
    %v206 = vpop.f32.mrf.mxu0
    %v207 = vadd.f32 0.0, %v206
    %v208 = vpop.f32.mrf.mxu0
    %209 = vmatprep.mubr.f32.mxu0 0.0
    %210 = vmatmul.mubr.f32.gmra.mxu0 %v128
    %v211 = vpop.f32.mrf.mxu0
    %v212 = vadd.f32 0.0, %v211
    %v213 = vpop.f32.mrf.mxu0
    %214 = vdwg.mxu0
    %v215 = vld [vmem:[#allocation9] sm:$0xff]
    %v216 = vld [vmem:[#allocation9 + $0x8] sm:$0xff]
    %v217 = vld [vmem:[#allocation9 + $0x10] sm:$0xff]
    %v218 = vld [vmem:[#allocation9 + $0x18] sm:$0xff]
    %v220 = vsel %vm117, %v105, 0
    %v223 = vsel %vm117, %v106, 0
    %v226 = vsel %vm117, %v107, 0
    %v229 = vsel %vm117, %v108, 0
    %231 = vmatprep.subr.mxu0 0.0
    %232 = vmatpush1.msra.mxu0 0.0
    %233 = vmatprep.subr.mxu0 0.0
    %234 = vmatpush1.msra.mxu0 0.0
    %235 = vmatprep.subr.mxu0 0.0
    %236 = vmatpush1.msra.mxu0 0.0
    %237 = vmatprep.subr.mxu0 0.0
    %238 = vmatpush1.msra.mxu0 0.0
    %239 = vmatprep.subr.mxu0 0.0
    %240 = vmatpush1.msra.mxu0 0.0
    %241 = vmatprep.subr.mxu0 0.0
    %242 = vmatpush1.msra.mxu0 0.0
    %243 = vmatprep.subr.mxu0 0.0
    %244 = vmatpush1.msra.mxu0 0.0
    %245 = vmatprep.subr.mxu0 0.0
    %246 = vmatpush1.msra.mxu0 0.0
    %247 = vmatprep.subr.mxu0 0.0
    %248 = vmatpush1.msra.mxu0 0.0
    %249 = vmatprep.subr.mxu0 0.0
    %250 = vmatpush1.msra.mxu0 0.0
    %251 = vmatprep.subr.mxu0 0.0
    %252 = vmatpush1.msra.mxu0 0.0
    %253 = vmatprep.subr.mxu0 0.0
    %254 = vmatpush1.msra.mxu0 0.0
    %255 = vmatprep.subr.mxu0 0.0
    %256 = vmatpush1.msra.mxu0 %v218
    %257 = vmatprep.subr.mxu0 0.0
    %258 = vmatpush1.msra.mxu0 %v217
    %259 = vmatprep.subr.mxu0 0.0
    %260 = vmatpush1.msra.mxu0 %v216
    %261 = vmatprep.subr.mxu0 0.0
    %262 = vmatpush1.msra.mxu0 %v215
    %263 = vmatprep.subr.mxu0 0.0
    %264 = vmatpush2.msra.mxu0 0.0
    %265 = vmatprep.subr.mxu0 0.0
    %266 = vmatpush2.msra.mxu0 0.0
    %267 = vmatprep.subr.mxu0 0.0
    %268 = vmatpush2.msra.mxu0 0.0
    %269 = vmatprep.subr.mxu0 0.0
    %270 = vmatpush2.msra.mxu0 0.0
    %271 = vmatprep.subr.mxu0 0.0
    %272 = vmatpush2.msra.mxu0 0.0
    %273 = vmatprep.subr.mxu0 0.0
    %274 = vmatpush2.msra.mxu0 0.0
    %275 = vmatprep.subr.mxu0 0.0
    %276 = vmatpush2.msra.mxu0 0.0
    %277 = vmatprep.subr.mxu0 0.0
    %278 = vmatpush2.msra.mxu0 0.0
    %279 = vmatprep.subr.mxu0 0.0
    %280 = vmatpush2.msra.mxu0 0.0
    %281 = vmatprep.subr.mxu0 0.0
    %282 = vmatpush2.msra.mxu0 0.0
    %283 = vmatprep.subr.mxu0 0.0
    %284 = vmatpush2.msra.mxu0 0.0
    %285 = vmatprep.subr.mxu0 0.0
    %286 = vmatpush2.msra.mxu0 0.0
    %287 = vmatprep.subr.mxu0 0.0
    %288 = vmatpush2.msra.mxu0 0.0
    %289 = vmatprep.subr.mxu0 0.0
    %290 = vmatpush2.msra.mxu0 0.0
    %291 = vmatprep.subr.mxu0 0.0
    %292 = vmatpush2.msra.mxu0 0.0
    %293 = vmatprep.subr.mxu0 0.0
    %294 = vmatpush2.msra.mxu0 0.0
    %295 = vmatprep.mubr.f32.mxu0 0.0
    %296 = vmatmul.mubr.f32.gmra.mxu0 %v220
    %v297 = vpop.f32.mrf.mxu0
    %v298 = vadd.f32 0.0, %v297
    %v299 = vpop.f32.mrf.mxu0
    %300 = vmatprep.mubr.f32.mxu0 0.0
    %301 = vmatmul.mubr.f32.gmra.mxu0 %v223
    %v302 = vpop.f32.mrf.mxu0
    %v303 = vadd.f32 0.0, %v302
    %v304 = vpop.f32.mrf.mxu0
    %305 = vmatprep.mubr.f32.mxu0 0.0
    %306 = vmatmul.mubr.f32.gmra.mxu0 %v226
    %v307 = vpop.f32.mrf.mxu0
    %v308 = vadd.f32 0.0, %v307
    %v309 = vpop.f32.mrf.mxu0
    %310 = vmatprep.mubr.f32.mxu0 0.0
    %311 = vmatmul.mubr.f32.gmra.mxu0 %v229
    %v312 = vpop.f32.mrf.mxu0
    %v313 = vadd.f32 0.0, %v312
    %v314 = vpop.f32.mrf.mxu0
    %315 = vdwg.mxu0
    %v316 = vld [vmem:[#allocation11] sm:$0xff]
    %v317 = vld [vmem:[#allocation11 + $0x8] sm:$0xff]
    %v318 = vld [vmem:[#allocation11 + $0x10] sm:$0xff]
    %v319 = vld [vmem:[#allocation11 + $0x18] sm:$0xff]
    %v321 = vsel %vm117, %v109, 0
    %v324 = vsel %vm117, %v110, 0
    %v327 = vsel %vm117, %v111, 0
    %v330 = vsel %vm117, %v112, 0
    %332 = vmatprep.subr.mxu0 0.0
    %333 = vmatpush1.msra.mxu0 0.0
    %334 = vmatprep.subr.mxu0 0.0
    %335 = vmatpush1.msra.mxu0 0.0
    %336 = vmatprep.subr.mxu0 0.0
    %337 = vmatpush1.msra.mxu0 0.0
    %338 = vmatprep.subr.mxu0 0.0
    %339 = vmatpush1.msra.mxu0 0.0
    %340 = vmatprep.subr.mxu0 0.0
    %341 = vmatpush1.msra.mxu0 0.0
    %342 = vmatprep.subr.mxu0 0.0
    %343 = vmatpush1.msra.mxu0 0.0
    %344 = vmatprep.subr.mxu0 0.0
    %345 = vmatpush1.msra.mxu0 0.0
    %346 = vmatprep.subr.mxu0 0.0
    %347 = vmatpush1.msra.mxu0 0.0
    %348 = vmatprep.subr.mxu0 0.0
    %349 = vmatpush1.msra.mxu0 0.0
    %350 = vmatprep.subr.mxu0 0.0
    %351 = vmatpush1.msra.mxu0 0.0
    %352 = vmatprep.subr.mxu0 0.0
    %353 = vmatpush1.msra.mxu0 0.0
    %354 = vmatprep.subr.mxu0 0.0
    %355 = vmatpush1.msra.mxu0 0.0
    %356 = vmatprep.subr.mxu0 0.0
    %357 = vmatpush1.msra.mxu0 %v319
    %358 = vmatprep.subr.mxu0 0.0
    %359 = vmatpush1.msra.mxu0 %v318
    %360 = vmatprep.subr.mxu0 0.0
    %361 = vmatpush1.msra.mxu0 %v317
    %362 = vmatprep.subr.mxu0 0.0
    %363 = vmatpush1.msra.mxu0 %v316
    %364 = vmatprep.subr.mxu0 0.0
    %365 = vmatpush2.msra.mxu0 0.0
    %366 = vmatprep.subr.mxu0 0.0
    %367 = vmatpush2.msra.mxu0 0.0
    %368 = vmatprep.subr.mxu0 0.0
    %369 = vmatpush2.msra.mxu0 0.0
    %370 = vmatprep.subr.mxu0 0.0
    %371 = vmatpush2.msra.mxu0 0.0
    %372 = vmatprep.subr.mxu0 0.0
    %373 = vmatpush2.msra.mxu0 0.0
    %374 = vmatprep.subr.mxu0 0.0
    %375 = vmatpush2.msra.mxu0 0.0
    %376 = vmatprep.subr.mxu0 0.0
    %377 = vmatpush2.msra.mxu0 0.0
    %378 = vmatprep.subr.mxu0 0.0
    %379 = vmatpush2.msra.mxu0 0.0
    %380 = vmatprep.subr.mxu0 0.0
    %381 = vmatpush2.msra.mxu0 0.0
    %382 = vmatprep.subr.mxu0 0.0
    %383 = vmatpush2.msra.mxu0 0.0
    %384 = vmatprep.subr.mxu0 0.0
    %385 = vmatpush2.msra.mxu0 0.0
    %386 = vmatprep.subr.mxu0 0.0
    %387 = vmatpush2.msra.mxu0 0.0
    %388 = vmatprep.subr.mxu0 0.0
    %389 = vmatpush2.msra.mxu0 0.0
    %390 = vmatprep.subr.mxu0 0.0
    %391 = vmatpush2.msra.mxu0 0.0
    %392 = vmatprep.subr.mxu0 0.0
    %393 = vmatpush2.msra.mxu0 0.0
    %394 = vmatprep.subr.mxu0 0.0
    %395 = vmatpush2.msra.mxu0 0.0
    %396 = vmatprep.mubr.f32.mxu0 0.0
    %397 = vmatmul.mubr.f32.gmra.mxu0 %v321
    %v398 = vpop.f32.mrf.mxu0
    %v399 = vadd.f32 0.0, %v398
    %v400 = vpop.f32.mrf.mxu0
    %401 = vmatprep.mubr.f32.mxu0 0.0
    %402 = vmatmul.mubr.f32.gmra.mxu0 %v324
    %v403 = vpop.f32.mrf.mxu0
    %v404 = vadd.f32 0.0, %v403
    %v405 = vpop.f32.mrf.mxu0
    %406 = vmatprep.mubr.f32.mxu0 0.0
    %407 = vmatmul.mubr.f32.gmra.mxu0 %v327
    %v408 = vpop.f32.mrf.mxu0
    %v409 = vadd.f32 0.0, %v408
    %v410 = vpop.f32.mrf.mxu0
    %411 = vmatprep.mubr.f32.mxu0 0.0
    %412 = vmatmul.mubr.f32.gmra.mxu0 %v330
    %v413 = vpop.f32.mrf.mxu0
    %v414 = vadd.f32 0.0, %v413
    %v415 = vpop.f32.mrf.mxu0
    %416 = vdwg.mxu0
    %421 = vrot.lane.b32.xlu0 %v197, 112
    %v422 = vpop.permute.xlu0 %421
    %423 = vrot.lane.b32.xlu0 %v202, 112
    %v424 = vpop.permute.xlu0 %423
    %425 = vrot.lane.b32.xlu0 %v207, 112
    %v426 = vpop.permute.xlu0 %425
    %427 = vrot.lane.b32.xlu0 %v212, 112
    %v428 = vpop.permute.xlu0 %427
    %433 = vrot.lane.b32.xlu0 %v298, 112
    %v434 = vpop.permute.xlu0 %433
    %435 = vrot.lane.b32.xlu0 %v303, 112
    %v436 = vpop.permute.xlu0 %435
    %437 = vrot.lane.b32.xlu0 %v308, 112
    %v438 = vpop.permute.xlu0 %437
    %439 = vrot.lane.b32.xlu0 %v313, 112
    %v440 = vpop.permute.xlu0 %439
    %445 = vrot.lane.b32.xlu0 %v399, 112
    %v446 = vpop.permute.xlu0 %445
    %447 = vrot.lane.b32.xlu0 %v404, 112
    %v448 = vpop.permute.xlu0 %447
    %449 = vrot.lane.b32.xlu0 %v409, 112
    %v450 = vpop.permute.xlu0 %449
    %451 = vrot.lane.b32.xlu0 %v414, 112
    %v452 = vpop.permute.xlu0 %451
    %vm457 = vcmask 130048
    %v458 = vsel %vm457, %v197, 0
    %v460 = vsel %vm457, %v298, 0
    %462 = vmatprep.subr.mxu0 0.0
    %463 = vmatpush1.xpose.msra.mxu0 0.0
    %464 = vmatprep.subr.mxu0 0.0
    %465 = vmatpush1.xpose.msra.mxu0 0.0
    %466 = vmatprep.subr.mxu0 0.0
    %467 = vmatpush1.xpose.msra.mxu0 0.0
    %468 = vmatprep.subr.mxu0 0.0
    %469 = vmatpush1.xpose.msra.mxu0 0.0
    %470 = vmatprep.subr.mxu0 0.0
    %471 = vmatpush1.xpose.msra.mxu0 0.0
    %472 = vmatprep.subr.mxu0 0.0
    %473 = vmatpush1.xpose.msra.mxu0 0.0
    %474 = vmatprep.subr.mxu0 0.0
    %475 = vmatpush1.xpose.msra.mxu0 0.0
    %476 = vmatprep.subr.mxu0 0.0
    %477 = vmatpush1.xpose.msra.mxu0 0.0
    %478 = vmatprep.subr.mxu0 0.0
    %479 = vmatpush1.xpose.msra.mxu0 0.0
    %480 = vmatprep.subr.mxu0 0.0
    %481 = vmatpush1.xpose.msra.mxu0 0.0
    %482 = vmatprep.subr.mxu0 0.0
    %483 = vmatpush1.xpose.msra.mxu0 0.0
    %484 = vmatprep.subr.mxu0 0.0
    %485 = vmatpush1.xpose.msra.mxu0 0.0
    %486 = vmatprep.subr.mxu0 0.0
    %487 = vmatpush1.xpose.msra.mxu0 0.0
    %488 = vmatprep.subr.mxu0 0.0
    %489 = vmatpush1.xpose.msra.mxu0 0.0
    %490 = vmatprep.subr.mxu0 0.0
    %491 = vmatpush1.xpose.msra.mxu0 0.0
    %492 = vmatprep.subr.mxu0 0.0
    %493 = vmatpush1.xpose.msra.mxu0 %v460
    %494 = vmatprep.subr.mxu0 0.0
    %495 = vmatpush2.xpose.msra.mxu0 0.0
    %496 = vmatprep.subr.mxu0 0.0
    %497 = vmatpush2.xpose.msra.mxu0 0.0
    %498 = vmatprep.subr.mxu0 0.0
    %499 = vmatpush2.xpose.msra.mxu0 0.0
    %500 = vmatprep.subr.mxu0 0.0
    %501 = vmatpush2.xpose.msra.mxu0 0.0
    %502 = vmatprep.subr.mxu0 0.0
    %503 = vmatpush2.xpose.msra.mxu0 0.0
    %504 = vmatprep.subr.mxu0 0.0
    %505 = vmatpush2.xpose.msra.mxu0 0.0
    %506 = vmatprep.subr.mxu0 0.0
    %507 = vmatpush2.xpose.msra.mxu0 0.0
    %508 = vmatprep.subr.mxu0 0.0
    %509 = vmatpush2.xpose.msra.mxu0 0.0
    %510 = vmatprep.subr.mxu0 0.0
    %511 = vmatpush2.xpose.msra.mxu0 0.0
    %512 = vmatprep.subr.mxu0 0.0
    %513 = vmatpush2.xpose.msra.mxu0 0.0
    %514 = vmatprep.subr.mxu0 0.0
    %515 = vmatpush2.xpose.msra.mxu0 0.0
    %516 = vmatprep.subr.mxu0 0.0
    %517 = vmatpush2.xpose.msra.mxu0 0.0
    %518 = vmatprep.subr.mxu0 0.0
    %519 = vmatpush2.xpose.msra.mxu0 0.0
    %520 = vmatprep.subr.mxu0 0.0
    %521 = vmatpush2.xpose.msra.mxu0 0.0
    %522 = vmatprep.subr.mxu0 0.0
    %523 = vmatpush2.xpose.msra.mxu0 0.0
    %524 = vmatprep.subr.mxu0 0.0
    %525 = vmatpush2.xpose.msra.mxu0 0.0
    %526 = vmatprep.mubr.f32.mxu0 0.0
    %527 = vmatmul.mubr.f32.gmra.mxu0 %v458
    %v528 = vpop.f32.mrf.mxu0
    %v529 = vadd.f32 0.0, %v528
    %v530 = vpop.f32.mrf.mxu0
    %531 = vdwg.mxu0
    %v532 = vsel %vm457, %v202, 0
    %v534 = vsel %vm457, %v303, 0
    %536 = vmatprep.subr.mxu0 0.0
    %537 = vmatpush1.xpose.msra.mxu0 0.0
    %538 = vmatprep.subr.mxu0 0.0
    %539 = vmatpush1.xpose.msra.mxu0 0.0
    %540 = vmatprep.subr.mxu0 0.0
    %541 = vmatpush1.xpose.msra.mxu0 0.0
    %542 = vmatprep.subr.mxu0 0.0
    %543 = vmatpush1.xpose.msra.mxu0 0.0
    %544 = vmatprep.subr.mxu0 0.0
    %545 = vmatpush1.xpose.msra.mxu0 0.0
    %546 = vmatprep.subr.mxu0 0.0
    %547 = vmatpush1.xpose.msra.mxu0 0.0
    %548 = vmatprep.subr.mxu0 0.0
    %549 = vmatpush1.xpose.msra.mxu0 0.0
    %550 = vmatprep.subr.mxu0 0.0
    %551 = vmatpush1.xpose.msra.mxu0 0.0
    %552 = vmatprep.subr.mxu0 0.0
    %553 = vmatpush1.xpose.msra.mxu0 0.0
    %554 = vmatprep.subr.mxu0 0.0
    %555 = vmatpush1.xpose.msra.mxu0 0.0
    %556 = vmatprep.subr.mxu0 0.0
    %557 = vmatpush1.xpose.msra.mxu0 0.0
    %558 = vmatprep.subr.mxu0 0.0
    %559 = vmatpush1.xpose.msra.mxu0 0.0
    %560 = vmatprep.subr.mxu0 0.0
    %561 = vmatpush1.xpose.msra.mxu0 0.0
    %562 = vmatprep.subr.mxu0 0.0
    %563 = vmatpush1.xpose.msra.mxu0 0.0
    %564 = vmatprep.subr.mxu0 0.0
    %565 = vmatpush1.xpose.msra.mxu0 0.0
    %566 = vmatprep.subr.mxu0 0.0
    %567 = vmatpush1.xpose.msra.mxu0 %v534
    %568 = vmatprep.subr.mxu0 0.0
    %569 = vmatpush2.xpose.msra.mxu0 0.0
    %570 = vmatprep.subr.mxu0 0.0
    %571 = vmatpush2.xpose.msra.mxu0 0.0
    %572 = vmatprep.subr.mxu0 0.0
    %573 = vmatpush2.xpose.msra.mxu0 0.0
    %574 = vmatprep.subr.mxu0 0.0
    %575 = vmatpush2.xpose.msra.mxu0 0.0
    %576 = vmatprep.subr.mxu0 0.0
    %577 = vmatpush2.xpose.msra.mxu0 0.0
    %578 = vmatprep.subr.mxu0 0.0
    %579 = vmatpush2.xpose.msra.mxu0 0.0
    %580 = vmatprep.subr.mxu0 0.0
    %581 = vmatpush2.xpose.msra.mxu0 0.0
    %582 = vmatprep.subr.mxu0 0.0
    %583 = vmatpush2.xpose.msra.mxu0 0.0
    %584 = vmatprep.subr.mxu0 0.0
    %585 = vmatpush2.xpose.msra.mxu0 0.0
    %586 = vmatprep.subr.mxu0 0.0
    %587 = vmatpush2.xpose.msra.mxu0 0.0
    %588 = vmatprep.subr.mxu0 0.0
    %589 = vmatpush2.xpose.msra.mxu0 0.0
    %590 = vmatprep.subr.mxu0 0.0
    %591 = vmatpush2.xpose.msra.mxu0 0.0
    %592 = vmatprep.subr.mxu0 0.0
    %593 = vmatpush2.xpose.msra.mxu0 0.0
    %594 = vmatprep.subr.mxu0 0.0
    %595 = vmatpush2.xpose.msra.mxu0 0.0
    %596 = vmatprep.subr.mxu0 0.0
    %597 = vmatpush2.xpose.msra.mxu0 0.0
    %598 = vmatprep.subr.mxu0 0.0
    %599 = vmatpush2.xpose.msra.mxu0 0.0
    %600 = vmatprep.mubr.f32.mxu0 0.0
    %601 = vmatmul.mubr.f32.gmra.mxu0 %v532
    %v602 = vpop.f32.mrf.mxu0
    %v603 = vadd.f32 0.0, %v602
    %v604 = vpop.f32.mrf.mxu0
    %605 = vdwg.mxu0
    %v606 = vsel %vm457, %v207, 0
    %v608 = vsel %vm457, %v308, 0
    %610 = vmatprep.subr.mxu0 0.0
    %611 = vmatpush1.xpose.msra.mxu0 0.0
    %612 = vmatprep.subr.mxu0 0.0
    %613 = vmatpush1.xpose.msra.mxu0 0.0
    %614 = vmatprep.subr.mxu0 0.0
    %615 = vmatpush1.xpose.msra.mxu0 0.0
    %616 = vmatprep.subr.mxu0 0.0
    %617 = vmatpush1.xpose.msra.mxu0 0.0
    %618 = vmatprep.subr.mxu0 0.0
    %619 = vmatpush1.xpose.msra.mxu0 0.0
    %620 = vmatprep.subr.mxu0 0.0
    %621 = vmatpush1.xpose.msra.mxu0 0.0
    %622 = vmatprep.subr.mxu0 0.0
    %623 = vmatpush1.xpose.msra.mxu0 0.0
    %624 = vmatprep.subr.mxu0 0.0
    %625 = vmatpush1.xpose.msra.mxu0 0.0
    %626 = vmatprep.subr.mxu0 0.0
    %627 = vmatpush1.xpose.msra.mxu0 0.0
    %628 = vmatprep.subr.mxu0 0.0
    %629 = vmatpush1.xpose.msra.mxu0 0.0
    %630 = vmatprep.subr.mxu0 0.0
    %631 = vmatpush1.xpose.msra.mxu0 0.0
    %632 = vmatprep.subr.mxu0 0.0
    %633 = vmatpush1.xpose.msra.mxu0 0.0
    %634 = vmatprep.subr.mxu0 0.0
    %635 = vmatpush1.xpose.msra.mxu0 0.0
    %636 = vmatprep.subr.mxu0 0.0
    %637 = vmatpush1.xpose.msra.mxu0 0.0
    %638 = vmatprep.subr.mxu0 0.0
    %639 = vmatpush1.xpose.msra.mxu0 0.0
    %640 = vmatprep.subr.mxu0 0.0
    %641 = vmatpush1.xpose.msra.mxu0 %v608
    %642 = vmatprep.subr.mxu0 0.0
    %643 = vmatpush2.xpose.msra.mxu0 0.0
    %644 = vmatprep.subr.mxu0 0.0
    %645 = vmatpush2.xpose.msra.mxu0 0.0
    %646 = vmatprep.subr.mxu0 0.0
    %647 = vmatpush2.xpose.msra.mxu0 0.0
    %648 = vmatprep.subr.mxu0 0.0
    %649 = vmatpush2.xpose.msra.mxu0 0.0
    %650 = vmatprep.subr.mxu0 0.0
    %651 = vmatpush2.xpose.msra.mxu0 0.0
    %652 = vmatprep.subr.mxu0 0.0
    %653 = vmatpush2.xpose.msra.mxu0 0.0
    %654 = vmatprep.subr.mxu0 0.0
    %655 = vmatpush2.xpose.msra.mxu0 0.0
    %656 = vmatprep.subr.mxu0 0.0
    %657 = vmatpush2.xpose.msra.mxu0 0.0
    %658 = vmatprep.subr.mxu0 0.0
    %659 = vmatpush2.xpose.msra.mxu0 0.0
    %660 = vmatprep.subr.mxu0 0.0
    %661 = vmatpush2.xpose.msra.mxu0 0.0
    %662 = vmatprep.subr.mxu0 0.0
    %663 = vmatpush2.xpose.msra.mxu0 0.0
    %664 = vmatprep.subr.mxu0 0.0
    %665 = vmatpush2.xpose.msra.mxu0 0.0
    %666 = vmatprep.subr.mxu0 0.0
    %667 = vmatpush2.xpose.msra.mxu0 0.0
    %668 = vmatprep.subr.mxu0 0.0
    %669 = vmatpush2.xpose.msra.mxu0 0.0
    %670 = vmatprep.subr.mxu0 0.0
    %671 = vmatpush2.xpose.msra.mxu0 0.0
    %672 = vmatprep.subr.mxu0 0.0
    %673 = vmatpush2.xpose.msra.mxu0 0.0
    %674 = vmatprep.mubr.f32.mxu0 0.0
    %675 = vmatmul.mubr.f32.gmra.mxu0 %v606
    %v676 = vpop.f32.mrf.mxu0
    %v677 = vadd.f32 0.0, %v676
    %v678 = vpop.f32.mrf.mxu0
    %679 = vdwg.mxu0
    %v680 = vsel %vm457, %v212, 0
    %v682 = vsel %vm457, %v313, 0
    %684 = vmatprep.subr.mxu0 0.0
    %685 = vmatpush1.xpose.msra.mxu0 0.0
    %686 = vmatprep.subr.mxu0 0.0
    %687 = vmatpush1.xpose.msra.mxu0 0.0
    %688 = vmatprep.subr.mxu0 0.0
    %689 = vmatpush1.xpose.msra.mxu0 0.0
    %690 = vmatprep.subr.mxu0 0.0
    %691 = vmatpush1.xpose.msra.mxu0 0.0
    %692 = vmatprep.subr.mxu0 0.0
    %693 = vmatpush1.xpose.msra.mxu0 0.0
    %694 = vmatprep.subr.mxu0 0.0
    %695 = vmatpush1.xpose.msra.mxu0 0.0
    %696 = vmatprep.subr.mxu0 0.0
    %697 = vmatpush1.xpose.msra.mxu0 0.0
    %698 = vmatprep.subr.mxu0 0.0
    %699 = vmatpush1.xpose.msra.mxu0 0.0
    %700 = vmatprep.subr.mxu0 0.0
    %701 = vmatpush1.xpose.msra.mxu0 0.0
    %702 = vmatprep.subr.mxu0 0.0
    %703 = vmatpush1.xpose.msra.mxu0 0.0
    %704 = vmatprep.subr.mxu0 0.0
    %705 = vmatpush1.xpose.msra.mxu0 0.0
    %706 = vmatprep.subr.mxu0 0.0
    %707 = vmatpush1.xpose.msra.mxu0 0.0
    %708 = vmatprep.subr.mxu0 0.0
    %709 = vmatpush1.xpose.msra.mxu0 0.0
    %710 = vmatprep.subr.mxu0 0.0
    %711 = vmatpush1.xpose.msra.mxu0 0.0
    %712 = vmatprep.subr.mxu0 0.0
    %713 = vmatpush1.xpose.msra.mxu0 0.0
    %714 = vmatprep.subr.mxu0 0.0
    %715 = vmatpush1.xpose.msra.mxu0 %v682
    %716 = vmatprep.subr.mxu0 0.0
    %717 = vmatpush2.xpose.msra.mxu0 0.0
    %718 = vmatprep.subr.mxu0 0.0
    %719 = vmatpush2.xpose.msra.mxu0 0.0
    %720 = vmatprep.subr.mxu0 0.0
    %721 = vmatpush2.xpose.msra.mxu0 0.0
    %722 = vmatprep.subr.mxu0 0.0
    %723 = vmatpush2.xpose.msra.mxu0 0.0
    %724 = vmatprep.subr.mxu0 0.0
    %725 = vmatpush2.xpose.msra.mxu0 0.0
    %726 = vmatprep.subr.mxu0 0.0
    %727 = vmatpush2.xpose.msra.mxu0 0.0
    %728 = vmatprep.subr.mxu0 0.0
    %729 = vmatpush2.xpose.msra.mxu0 0.0
    %730 = vmatprep.subr.mxu0 0.0
    %731 = vmatpush2.xpose.msra.mxu0 0.0
    %732 = vmatprep.subr.mxu0 0.0
    %733 = vmatpush2.xpose.msra.mxu0 0.0
    %734 = vmatprep.subr.mxu0 0.0
    %735 = vmatpush2.xpose.msra.mxu0 0.0
    %736 = vmatprep.subr.mxu0 0.0
    %737 = vmatpush2.xpose.msra.mxu0 0.0
    %738 = vmatprep.subr.mxu0 0.0
    %739 = vmatpush2.xpose.msra.mxu0 0.0
    %740 = vmatprep.subr.mxu0 0.0
    %741 = vmatpush2.xpose.msra.mxu0 0.0
    %742 = vmatprep.subr.mxu0 0.0
    %743 = vmatpush2.xpose.msra.mxu0 0.0
    %744 = vmatprep.subr.mxu0 0.0
    %745 = vmatpush2.xpose.msra.mxu0 0.0
    %746 = vmatprep.subr.mxu0 0.0
    %747 = vmatpush2.xpose.msra.mxu0 0.0
    %748 = vmatprep.mubr.f32.mxu0 0.0
    %749 = vmatmul.mubr.f32.gmra.mxu0 %v680
    %v750 = vpop.f32.mrf.mxu0
    %v751 = vadd.f32 0.0, %v750
    %v752 = vpop.f32.mrf.mxu0
    %753 = vdwg.mxu0
    %v754 = vsel %vm457, %v422, 0
    %v756 = vsel %vm457, %v434, 0
    %758 = vmatprep.subr.mxu0 0.0
    %759 = vmatpush1.xpose.msra.mxu0 0.0
    %760 = vmatprep.subr.mxu0 0.0
    %761 = vmatpush1.xpose.msra.mxu0 0.0
    %762 = vmatprep.subr.mxu0 0.0
    %763 = vmatpush1.xpose.msra.mxu0 0.0
    %764 = vmatprep.subr.mxu0 0.0
    %765 = vmatpush1.xpose.msra.mxu0 0.0
    %766 = vmatprep.subr.mxu0 0.0
    %767 = vmatpush1.xpose.msra.mxu0 0.0
    %768 = vmatprep.subr.mxu0 0.0
    %769 = vmatpush1.xpose.msra.mxu0 0.0
    %770 = vmatprep.subr.mxu0 0.0
    %771 = vmatpush1.xpose.msra.mxu0 0.0
    %772 = vmatprep.subr.mxu0 0.0
    %773 = vmatpush1.xpose.msra.mxu0 0.0
    %774 = vmatprep.subr.mxu0 0.0
    %775 = vmatpush1.xpose.msra.mxu0 0.0
    %776 = vmatprep.subr.mxu0 0.0
    %777 = vmatpush1.xpose.msra.mxu0 0.0
    %778 = vmatprep.subr.mxu0 0.0
    %779 = vmatpush1.xpose.msra.mxu0 0.0
    %780 = vmatprep.subr.mxu0 0.0
    %781 = vmatpush1.xpose.msra.mxu0 0.0
    %782 = vmatprep.subr.mxu0 0.0
    %783 = vmatpush1.xpose.msra.mxu0 0.0
    %784 = vmatprep.subr.mxu0 0.0
    %785 = vmatpush1.xpose.msra.mxu0 0.0
    %786 = vmatprep.subr.mxu0 0.0
    %787 = vmatpush1.xpose.msra.mxu0 0.0
    %788 = vmatprep.subr.mxu0 0.0
    %789 = vmatpush1.xpose.msra.mxu0 %v756
    %790 = vmatprep.subr.mxu0 0.0
    %791 = vmatpush2.xpose.msra.mxu0 0.0
    %792 = vmatprep.subr.mxu0 0.0
    %793 = vmatpush2.xpose.msra.mxu0 0.0
    %794 = vmatprep.subr.mxu0 0.0
    %795 = vmatpush2.xpose.msra.mxu0 0.0
    %796 = vmatprep.subr.mxu0 0.0
    %797 = vmatpush2.xpose.msra.mxu0 0.0
    %798 = vmatprep.subr.mxu0 0.0
    %799 = vmatpush2.xpose.msra.mxu0 0.0
    %800 = vmatprep.subr.mxu0 0.0
    %801 = vmatpush2.xpose.msra.mxu0 0.0
    %802 = vmatprep.subr.mxu0 0.0
    %803 = vmatpush2.xpose.msra.mxu0 0.0
    %804 = vmatprep.subr.mxu0 0.0
    %805 = vmatpush2.xpose.msra.mxu0 0.0
    %806 = vmatprep.subr.mxu0 0.0
    %807 = vmatpush2.xpose.msra.mxu0 0.0
    %808 = vmatprep.subr.mxu0 0.0
    %809 = vmatpush2.xpose.msra.mxu0 0.0
    %810 = vmatprep.subr.mxu0 0.0
    %811 = vmatpush2.xpose.msra.mxu0 0.0
    %812 = vmatprep.subr.mxu0 0.0
    %813 = vmatpush2.xpose.msra.mxu0 0.0
    %814 = vmatprep.subr.mxu0 0.0
    %815 = vmatpush2.xpose.msra.mxu0 0.0
    %816 = vmatprep.subr.mxu0 0.0
    %817 = vmatpush2.xpose.msra.mxu0 0.0
    %818 = vmatprep.subr.mxu0 0.0
    %819 = vmatpush2.xpose.msra.mxu0 0.0
    %820 = vmatprep.subr.mxu0 0.0
    %821 = vmatpush2.xpose.msra.mxu0 0.0
    %822 = vmatprep.mubr.f32.mxu0 0.0
    %823 = vmatmul.mubr.f32.gmra.mxu0 %v754
    %v824 = vpop.f32.mrf.mxu0
    %v825 = vadd.f32 0.0, %v824
    %v826 = vpop.f32.mrf.mxu0
    %827 = vdwg.mxu0
    %v828 = vsel %vm457, %v424, 0
    %v830 = vsel %vm457, %v436, 0
    %832 = vmatprep.subr.mxu0 0.0
    %833 = vmatpush1.xpose.msra.mxu0 0.0
    %834 = vmatprep.subr.mxu0 0.0
    %835 = vmatpush1.xpose.msra.mxu0 0.0
    %836 = vmatprep.subr.mxu0 0.0
    %837 = vmatpush1.xpose.msra.mxu0 0.0
    %838 = vmatprep.subr.mxu0 0.0
    %839 = vmatpush1.xpose.msra.mxu0 0.0
    %840 = vmatprep.subr.mxu0 0.0
    %841 = vmatpush1.xpose.msra.mxu0 0.0
    %842 = vmatprep.subr.mxu0 0.0
    %843 = vmatpush1.xpose.msra.mxu0 0.0
    %844 = vmatprep.subr.mxu0 0.0
    %845 = vmatpush1.xpose.msra.mxu0 0.0
    %846 = vmatprep.subr.mxu0 0.0
    %847 = vmatpush1.xpose.msra.mxu0 0.0
    %848 = vmatprep.subr.mxu0 0.0
    %849 = vmatpush1.xpose.msra.mxu0 0.0
    %850 = vmatprep.subr.mxu0 0.0
    %851 = vmatpush1.xpose.msra.mxu0 0.0
    %852 = vmatprep.subr.mxu0 0.0
    %853 = vmatpush1.xpose.msra.mxu0 0.0
    %854 = vmatprep.subr.mxu0 0.0
    %855 = vmatpush1.xpose.msra.mxu0 0.0
    %856 = vmatprep.subr.mxu0 0.0
    %857 = vmatpush1.xpose.msra.mxu0 0.0
    %858 = vmatprep.subr.mxu0 0.0
    %859 = vmatpush1.xpose.msra.mxu0 0.0
    %860 = vmatprep.subr.mxu0 0.0
    %861 = vmatpush1.xpose.msra.mxu0 0.0
    %862 = vmatprep.subr.mxu0 0.0
    %863 = vmatpush1.xpose.msra.mxu0 %v830
    %864 = vmatprep.subr.mxu0 0.0
    %865 = vmatpush2.xpose.msra.mxu0 0.0
    %866 = vmatprep.subr.mxu0 0.0
    %867 = vmatpush2.xpose.msra.mxu0 0.0
    %868 = vmatprep.subr.mxu0 0.0
    %869 = vmatpush2.xpose.msra.mxu0 0.0
    %870 = vmatprep.subr.mxu0 0.0
    %871 = vmatpush2.xpose.msra.mxu0 0.0
    %872 = vmatprep.subr.mxu0 0.0
    %873 = vmatpush2.xpose.msra.mxu0 0.0
    %874 = vmatprep.subr.mxu0 0.0
    %875 = vmatpush2.xpose.msra.mxu0 0.0
    %876 = vmatprep.subr.mxu0 0.0
    %877 = vmatpush2.xpose.msra.mxu0 0.0
    %878 = vmatprep.subr.mxu0 0.0
    %879 = vmatpush2.xpose.msra.mxu0 0.0
    %880 = vmatprep.subr.mxu0 0.0
    %881 = vmatpush2.xpose.msra.mxu0 0.0
    %882 = vmatprep.subr.mxu0 0.0
    %883 = vmatpush2.xpose.msra.mxu0 0.0
    %884 = vmatprep.subr.mxu0 0.0
    %885 = vmatpush2.xpose.msra.mxu0 0.0
    %886 = vmatprep.subr.mxu0 0.0
    %887 = vmatpush2.xpose.msra.mxu0 0.0
    %888 = vmatprep.subr.mxu0 0.0
    %889 = vmatpush2.xpose.msra.mxu0 0.0
    %890 = vmatprep.subr.mxu0 0.0
    %891 = vmatpush2.xpose.msra.mxu0 0.0
    %892 = vmatprep.subr.mxu0 0.0
    %893 = vmatpush2.xpose.msra.mxu0 0.0
    %894 = vmatprep.subr.mxu0 0.0
    %895 = vmatpush2.xpose.msra.mxu0 0.0
    %896 = vmatprep.mubr.f32.mxu0 0.0
    %897 = vmatmul.mubr.f32.gmra.mxu0 %v828
    %v898 = vpop.f32.mrf.mxu0
    %v899 = vadd.f32 0.0, %v898
    %v900 = vpop.f32.mrf.mxu0
    %901 = vdwg.mxu0
    %v902 = vsel %vm457, %v426, 0
    %v904 = vsel %vm457, %v438, 0
    %906 = vmatprep.subr.mxu0 0.0
    %907 = vmatpush1.xpose.msra.mxu0 0.0
    %908 = vmatprep.subr.mxu0 0.0
    %909 = vmatpush1.xpose.msra.mxu0 0.0
    %910 = vmatprep.subr.mxu0 0.0
    %911 = vmatpush1.xpose.msra.mxu0 0.0
    %912 = vmatprep.subr.mxu0 0.0
    %913 = vmatpush1.xpose.msra.mxu0 0.0
    %914 = vmatprep.subr.mxu0 0.0
    %915 = vmatpush1.xpose.msra.mxu0 0.0
    %916 = vmatprep.subr.mxu0 0.0
    %917 = vmatpush1.xpose.msra.mxu0 0.0
    %918 = vmatprep.subr.mxu0 0.0
    %919 = vmatpush1.xpose.msra.mxu0 0.0
    %920 = vmatprep.subr.mxu0 0.0
    %921 = vmatpush1.xpose.msra.mxu0 0.0
    %922 = vmatprep.subr.mxu0 0.0
    %923 = vmatpush1.xpose.msra.mxu0 0.0
    %924 = vmatprep.subr.mxu0 0.0
    %925 = vmatpush1.xpose.msra.mxu0 0.0
    %926 = vmatprep.subr.mxu0 0.0
    %927 = vmatpush1.xpose.msra.mxu0 0.0
    %928 = vmatprep.subr.mxu0 0.0
    %929 = vmatpush1.xpose.msra.mxu0 0.0
    %930 = vmatprep.subr.mxu0 0.0
    %931 = vmatpush1.xpose.msra.mxu0 0.0
    %932 = vmatprep.subr.mxu0 0.0
    %933 = vmatpush1.xpose.msra.mxu0 0.0
    %934 = vmatprep.subr.mxu0 0.0
    %935 = vmatpush1.xpose.msra.mxu0 0.0
    %936 = vmatprep.subr.mxu0 0.0
    %937 = vmatpush1.xpose.msra.mxu0 %v904
    %938 = vmatprep.subr.mxu0 0.0
    %939 = vmatpush2.xpose.msra.mxu0 0.0
    %940 = vmatprep.subr.mxu0 0.0
    %941 = vmatpush2.xpose.msra.mxu0 0.0
    %942 = vmatprep.subr.mxu0 0.0
    %943 = vmatpush2.xpose.msra.mxu0 0.0
    %944 = vmatprep.subr.mxu0 0.0
    %945 = vmatpush2.xpose.msra.mxu0 0.0
    %946 = vmatprep.subr.mxu0 0.0
    %947 = vmatpush2.xpose.msra.mxu0 0.0
    %948 = vmatprep.subr.mxu0 0.0
    %949 = vmatpush2.xpose.msra.mxu0 0.0
    %950 = vmatprep.subr.mxu0 0.0
    %951 = vmatpush2.xpose.msra.mxu0 0.0
    %952 = vmatprep.subr.mxu0 0.0
    %953 = vmatpush2.xpose.msra.mxu0 0.0
    %954 = vmatprep.subr.mxu0 0.0
    %955 = vmatpush2.xpose.msra.mxu0 0.0
    %956 = vmatprep.subr.mxu0 0.0
    %957 = vmatpush2.xpose.msra.mxu0 0.0
    %958 = vmatprep.subr.mxu0 0.0
    %959 = vmatpush2.xpose.msra.mxu0 0.0
    %960 = vmatprep.subr.mxu0 0.0
    %961 = vmatpush2.xpose.msra.mxu0 0.0
    %962 = vmatprep.subr.mxu0 0.0
    %963 = vmatpush2.xpose.msra.mxu0 0.0
    %964 = vmatprep.subr.mxu0 0.0
    %965 = vmatpush2.xpose.msra.mxu0 0.0
    %966 = vmatprep.subr.mxu0 0.0
    %967 = vmatpush2.xpose.msra.mxu0 0.0
    %968 = vmatprep.subr.mxu0 0.0
    %969 = vmatpush2.xpose.msra.mxu0 0.0
    %970 = vmatprep.mubr.f32.mxu0 0.0
    %971 = vmatmul.mubr.f32.gmra.mxu0 %v902
    %v972 = vpop.f32.mrf.mxu0
    %v973 = vadd.f32 0.0, %v972
    %v974 = vpop.f32.mrf.mxu0
    %975 = vdwg.mxu0
    %v976 = vsel %vm457, %v428, 0
    %v978 = vsel %vm457, %v440, 0
    %980 = vmatprep.subr.mxu0 0.0
    %981 = vmatpush1.xpose.msra.mxu0 0.0
    %982 = vmatprep.subr.mxu0 0.0
    %983 = vmatpush1.xpose.msra.mxu0 0.0
    %984 = vmatprep.subr.mxu0 0.0
    %985 = vmatpush1.xpose.msra.mxu0 0.0
    %986 = vmatprep.subr.mxu0 0.0
    %987 = vmatpush1.xpose.msra.mxu0 0.0
    %988 = vmatprep.subr.mxu0 0.0
    %989 = vmatpush1.xpose.msra.mxu0 0.0
    %990 = vmatprep.subr.mxu0 0.0
    %991 = vmatpush1.xpose.msra.mxu0 0.0
    %992 = vmatprep.subr.mxu0 0.0
    %993 = vmatpush1.xpose.msra.mxu0 0.0
    %994 = vmatprep.subr.mxu0 0.0
    %995 = vmatpush1.xpose.msra.mxu0 0.0
    %996 = vmatprep.subr.mxu0 0.0
    %997 = vmatpush1.xpose.msra.mxu0 0.0
    %998 = vmatprep.subr.mxu0 0.0
    %999 = vmatpush1.xpose.msra.mxu0 0.0
    %1000 = vmatprep.subr.mxu0 0.0
    %1001 = vmatpush1.xpose.msra.mxu0 0.0
    %1002 = vmatprep.subr.mxu0 0.0
    %1003 = vmatpush1.xpose.msra.mxu0 0.0
    %1004 = vmatprep.subr.mxu0 0.0
    %1005 = vmatpush1.xpose.msra.mxu0 0.0
    %1006 = vmatprep.subr.mxu0 0.0
    %1007 = vmatpush1.xpose.msra.mxu0 0.0
    %1008 = vmatprep.subr.mxu0 0.0
    %1009 = vmatpush1.xpose.msra.mxu0 0.0
    %1010 = vmatprep.subr.mxu0 0.0
    %1011 = vmatpush1.xpose.msra.mxu0 %v978
    %1012 = vmatprep.subr.mxu0 0.0
    %1013 = vmatpush2.xpose.msra.mxu0 0.0
    %1014 = vmatprep.subr.mxu0 0.0
    %1015 = vmatpush2.xpose.msra.mxu0 0.0
    %1016 = vmatprep.subr.mxu0 0.0
    %1017 = vmatpush2.xpose.msra.mxu0 0.0
    %1018 = vmatprep.subr.mxu0 0.0
    %1019 = vmatpush2.xpose.msra.mxu0 0.0
    %1020 = vmatprep.subr.mxu0 0.0
    %1021 = vmatpush2.xpose.msra.mxu0 0.0
    %1022 = vmatprep.subr.mxu0 0.0
    %1023 = vmatpush2.xpose.msra.mxu0 0.0
    %1024 = vmatprep.subr.mxu0 0.0
    %1025 = vmatpush2.xpose.msra.mxu0 0.0
    %1026 = vmatprep.subr.mxu0 0.0
    %1027 = vmatpush2.xpose.msra.mxu0 0.0
    %1028 = vmatprep.subr.mxu0 0.0
    %1029 = vmatpush2.xpose.msra.mxu0 0.0
    %1030 = vmatprep.subr.mxu0 0.0
    %1031 = vmatpush2.xpose.msra.mxu0 0.0
    %1032 = vmatprep.subr.mxu0 0.0
    %1033 = vmatpush2.xpose.msra.mxu0 0.0
    %1034 = vmatprep.subr.mxu0 0.0
    %1035 = vmatpush2.xpose.msra.mxu0 0.0
    %1036 = vmatprep.subr.mxu0 0.0
    %1037 = vmatpush2.xpose.msra.mxu0 0.0
    %1038 = vmatprep.subr.mxu0 0.0
    %1039 = vmatpush2.xpose.msra.mxu0 0.0
    %1040 = vmatprep.subr.mxu0 0.0
    %1041 = vmatpush2.xpose.msra.mxu0 0.0
    %1042 = vmatprep.subr.mxu0 0.0
    %1043 = vmatpush2.xpose.msra.mxu0 0.0
    %1044 = vmatprep.mubr.f32.mxu0 0.0
    %1045 = vmatmul.mubr.f32.gmra.mxu0 %v976
    %v1046 = vpop.f32.mrf.mxu0
    %v1047 = vadd.f32 0.0, %v1046
    %v1048 = vpop.f32.mrf.mxu0
    %1049 = vdwg.mxu0
    %vm1050 = vcmask 64512
    %v1051 = vsel %vm1050, %v529, -inf
    %1052 = vmax.xlane.f32.xlu0 %v1051
    %v1053 = vpop.xlane.xlu0 %1052
    %v1054 = vsel %vm1050, %v603, -inf
    %1055 = vmax.xlane.f32.xlu0 %v1054
    %v1056 = vpop.xlane.xlu0 %1055
    %v1057 = vsel %vm1050, %v677, -inf
    %1058 = vmax.xlane.f32.xlu0 %v1057
    %v1059 = vpop.xlane.xlu0 %1058
    %v1060 = vsel %vm1050, %v751, -inf
    %1061 = vmax.xlane.f32.xlu0 %v1060
    %v1062 = vpop.xlane.xlu0 %1061
    %v1063 = vsel %vm1050, %v825, -inf
    %1064 = vmax.xlane.f32.xlu0 %v1063
    %v1065 = vpop.xlane.xlu0 %1064
    %v1066 = vsel %vm1050, %v899, -inf
    %1067 = vmax.xlane.f32.xlu0 %v1066
    %v1068 = vpop.xlane.xlu0 %1067
    %v1069 = vsel %vm1050, %v973, -inf
    %1070 = vmax.xlane.f32.xlu0 %v1069
    %v1071 = vpop.xlane.xlu0 %1070
    %v1072 = vsel %vm1050, %v1047, -inf
    %1073 = vmax.xlane.f32.xlu0 %v1072
    %v1074 = vpop.xlane.xlu0 %1073
    %v1075 = vsub.f32 %v529, %v1053
    %v1076 = vsub.f32 %v603, %v1056
    %v1077 = vsub.f32 %v677, %v1059
    %v1078 = vsub.f32 %v751, %v1062
    %v1079 = vsub.f32 %v825, %v1065
    %v1080 = vsub.f32 %v899, %v1068
    %v1081 = vsub.f32 %v973, %v1071
    %v1082 = vsub.f32 %v1047, %v1074
    %v1083 = vmul.f32 %v1075, 1.442695
    %v1084 = vpow.pop %v1083
    %v1085 = vmul.f32 %v1076, 1.442695
    %v1086 = vpow.pop %v1085
    %v1087 = vmul.f32 %v1077, 1.442695
    %v1088 = vpow.pop %v1087
    %v1089 = vmul.f32 %v1078, 1.442695
    %v1090 = vpow.pop %v1089
    %v1091 = vmul.f32 %v1079, 1.442695
    %v1092 = vpow.pop %v1091
    %v1093 = vmul.f32 %v1080, 1.442695
    %v1094 = vpow.pop %v1093
    %v1095 = vmul.f32 %v1081, 1.442695
    %v1096 = vpow.pop %v1095
    %v1097 = vmul.f32 %v1082, 1.442695
    %v1098 = vpow.pop %v1097
    %v1099 = vsel %vm1050, %v1084, 0.0
    %1100 = vadd.xlane.f32.xlu0 %v1099
    %v1101 = vpop.xlane.xlu0 %1100
    %v1102 = vsel %vm1050, %v1086, 0.0
    %1103 = vadd.xlane.f32.xlu0 %v1102
    %v1104 = vpop.xlane.xlu0 %1103
    %v1105 = vsel %vm1050, %v1088, 0.0
    %1106 = vadd.xlane.f32.xlu0 %v1105
    %v1107 = vpop.xlane.xlu0 %1106
    %v1108 = vsel %vm1050, %v1090, 0.0
    %1109 = vadd.xlane.f32.xlu0 %v1108
    %v1110 = vpop.xlane.xlu0 %1109
    %v1111 = vsel %vm1050, %v1092, 0.0
    %1112 = vadd.xlane.f32.xlu0 %v1111
    %v1113 = vpop.xlane.xlu0 %1112
    %v1114 = vsel %vm1050, %v1094, 0.0
    %1115 = vadd.xlane.f32.xlu0 %v1114
    %v1116 = vpop.xlane.xlu0 %1115
    %v1117 = vsel %vm1050, %v1096, 0.0
    %1118 = vadd.xlane.f32.xlu0 %v1117
    %v1119 = vpop.xlane.xlu0 %1118
    %v1120 = vsel %vm1050, %v1098, 0.0
    %1121 = vadd.xlane.f32.xlu0 %v1120
    %v1122 = vpop.xlane.xlu0 %1121
    %v1123 = vrcp.pop %v1101
    %v1124 = vmul.f32 %v1084, %v1123
    %v1125 = vrcp.pop %v1104
    %v1126 = vmul.f32 %v1086, %v1125
    %v1127 = vrcp.pop %v1107
    %v1128 = vmul.f32 %v1088, %v1127
    %v1129 = vrcp.pop %v1110
    %v1130 = vmul.f32 %v1090, %v1129
    %v1131 = vrcp.pop %v1113
    %v1132 = vmul.f32 %v1092, %v1131
    %v1133 = vrcp.pop %v1116
    %v1134 = vmul.f32 %v1094, %v1133
    %v1135 = vrcp.pop %v1119
    %v1136 = vmul.f32 %v1096, %v1135
    %v1137 = vrcp.pop %v1122
    %v1138 = vmul.f32 %v1098, %v1137
    %1139 = vxpose.xlu0.b32.start [1/16] %v399, 128
    %1140 = vxpose.xlu0.b32.cont [2/16] 0.0, 128
    %1141 = vxpose.xlu0.b32.cont [3/16] 0.0, 128
    %1142 = vxpose.xlu0.b32.cont [4/16] 0.0, 128
    %1143 = vxpose.xlu0.b32.cont [5/16] 0.0, 128
    %1144 = vxpose.xlu0.b32.cont [6/16] 0.0, 128
    %1145 = vxpose.xlu0.b32.cont [7/16] 0.0, 128
    %1146 = vxpose.xlu0.b32.cont [8/16] 0.0, 128
    %1147 = vxpose.xlu0.b32.cont [9/16] 0.0, 128
    %1148 = vxpose.xlu0.b32.cont [10/16] 0.0, 128
    %1149 = vxpose.xlu0.b32.cont [11/16] 0.0, 128
    %1150 = vxpose.xlu0.b32.cont [12/16] 0.0, 128
    %1151 = vxpose.xlu0.b32.cont [13/16] 0.0, 128
    %1152 = vxpose.xlu0.b32.cont [14/16] 0.0, 128
    %1153 = vxpose.xlu0.b32.cont [15/16] 0.0, 128
    %1154 = vxpose.xlu0.b32.end [16/16] 0.0, 128
    %v1155 = vpop.trf.xlu0
    %v1156 = vpop.trf.xlu0
    %v1157 = vpop.trf.xlu0
    %v1158 = vpop.trf.xlu0
    %v1159 = vpop.trf.xlu0
    %v1160 = vpop.trf.xlu0
    %v1161 = vpop.trf.xlu0
    %v1162 = vpop.trf.xlu0
    %v1163 = vpop.trf.xlu0
    %v1164 = vpop.trf.xlu0
    %v1165 = vpop.trf.xlu0
    %v1166 = vpop.trf.xlu0
    %v1167 = vpop.trf.xlu0
    %v1168 = vpop.trf.xlu0
    %v1169 = vpop.trf.xlu0
    %v1170 = vpop.trf.xlu0
    %v1172 = vsel %vm1050, %v1155, 0
    %v1175 = vsel %vm1050, %v1156, 0
    %1177 = vmatprep.subr.mxu0 0.0
    %1178 = vmatpush1.msra.mxu0 0.0
    %1179 = vmatprep.subr.mxu0 0.0
    %1180 = vmatpush1.msra.mxu0 0.0
    %1181 = vmatprep.subr.mxu0 0.0
    %1182 = vmatpush1.msra.mxu0 0.0
    %1183 = vmatprep.subr.mxu0 0.0
    %1184 = vmatpush1.msra.mxu0 0.0
    %1185 = vmatprep.subr.mxu0 0.0
    %1186 = vmatpush1.msra.mxu0 0.0
    %1187 = vmatprep.subr.mxu0 0.0
    %1188 = vmatpush1.msra.mxu0 0.0
    %1189 = vmatprep.subr.mxu0 0.0
    %1190 = vmatpush1.msra.mxu0 0.0
    %1191 = vmatprep.subr.mxu0 0.0
    %1192 = vmatpush1.msra.mxu0 0.0
    %1193 = vmatprep.subr.mxu0 0.0
    %1194 = vmatpush1.msra.mxu0 0.0
    %1195 = vmatprep.subr.mxu0 0.0
    %1196 = vmatpush1.msra.mxu0 0.0
    %1197 = vmatprep.subr.mxu0 0.0
    %1198 = vmatpush1.msra.mxu0 0.0
    %1199 = vmatprep.subr.mxu0 0.0
    %1200 = vmatpush1.msra.mxu0 0.0
    %1201 = vmatprep.subr.mxu0 0.0
    %1202 = vmatpush1.msra.mxu0 0.0
    %1203 = vmatprep.subr.mxu0 0.0
    %1204 = vmatpush1.msra.mxu0 0.0
    %1205 = vmatprep.subr.mxu0 0.0
    %1206 = vmatpush1.msra.mxu0 0.0
    %1207 = vmatprep.subr.mxu0 0.0
    %1208 = vmatpush1.msra.mxu0 %v1124
    %1209 = vmatprep.subr.mxu0 0.0
    %1210 = vmatpush2.msra.mxu0 0.0
    %1211 = vmatprep.subr.mxu0 0.0
    %1212 = vmatpush2.msra.mxu0 0.0
    %1213 = vmatprep.subr.mxu0 0.0
    %1214 = vmatpush2.msra.mxu0 0.0
    %1215 = vmatprep.subr.mxu0 0.0
    %1216 = vmatpush2.msra.mxu0 0.0
    %1217 = vmatprep.subr.mxu0 0.0
    %1218 = vmatpush2.msra.mxu0 0.0
    %1219 = vmatprep.subr.mxu0 0.0
    %1220 = vmatpush2.msra.mxu0 0.0
    %1221 = vmatprep.subr.mxu0 0.0
    %1222 = vmatpush2.msra.mxu0 0.0
    %1223 = vmatprep.subr.mxu0 0.0
    %1224 = vmatpush2.msra.mxu0 0.0
    %1225 = vmatprep.subr.mxu0 0.0
    %1226 = vmatpush2.msra.mxu0 0.0
    %1227 = vmatprep.subr.mxu0 0.0
    %1228 = vmatpush2.msra.mxu0 0.0
    %1229 = vmatprep.subr.mxu0 0.0
    %1230 = vmatpush2.msra.mxu0 0.0
    %1231 = vmatprep.subr.mxu0 0.0
    %1232 = vmatpush2.msra.mxu0 0.0
    %1233 = vmatprep.subr.mxu0 0.0
    %1234 = vmatpush2.msra.mxu0 0.0
    %1235 = vmatprep.subr.mxu0 0.0
    %1236 = vmatpush2.msra.mxu0 0.0
    %1237 = vmatprep.subr.mxu0 0.0
    %1238 = vmatpush2.msra.mxu0 0.0
    %1239 = vmatprep.subr.mxu0 0.0
    %1240 = vmatpush2.msra.mxu0 0.0
    %1241 = vmatprep.mubr.f32.mxu0 0.0
    %1242 = vmatmul.mubr.f32.gmra.mxu0 %v1172
    %v1243 = vpop.f32.mrf.mxu0
    %v1244 = vadd.f32 0.0, %v1243
    %v1245 = vpop.f32.mrf.mxu0
    %1246 = vmatprep.mubr.f32.mxu0 0.0
    %1247 = vmatmul.mubr.f32.gmra.mxu0 %v1175
    %v1248 = vpop.f32.mrf.mxu0
    %v1249 = vadd.f32 0.0, %v1248
    %v1250 = vpop.f32.mrf.mxu0
    %1251 = vdwg.mxu0
    %1252 = vxpose.xlu0.b32.start [1/16] %v404, 128
    %1253 = vxpose.xlu0.b32.cont [2/16] 0.0, 128
    %1254 = vxpose.xlu0.b32.cont [3/16] 0.0, 128
    %1255 = vxpose.xlu0.b32.cont [4/16] 0.0, 128
    %1256 = vxpose.xlu0.b32.cont [5/16] 0.0, 128
    %1257 = vxpose.xlu0.b32.cont [6/16] 0.0, 128
    %1258 = vxpose.xlu0.b32.cont [7/16] 0.0, 128
    %1259 = vxpose.xlu0.b32.cont [8/16] 0.0, 128
    %1260 = vxpose.xlu0.b32.cont [9/16] 0.0, 128
    %1261 = vxpose.xlu0.b32.cont [10/16] 0.0, 128
    %1262 = vxpose.xlu0.b32.cont [11/16] 0.0, 128
    %1263 = vxpose.xlu0.b32.cont [12/16] 0.0, 128
    %1264 = vxpose.xlu0.b32.cont [13/16] 0.0, 128
    %1265 = vxpose.xlu0.b32.cont [14/16] 0.0, 128
    %1266 = vxpose.xlu0.b32.cont [15/16] 0.0, 128
    %1267 = vxpose.xlu0.b32.end [16/16] 0.0, 128
    %v1268 = vpop.trf.xlu0
    %v1269 = vpop.trf.xlu0
    %v1270 = vpop.trf.xlu0
    %v1271 = vpop.trf.xlu0
    %v1272 = vpop.trf.xlu0
    %v1273 = vpop.trf.xlu0
    %v1274 = vpop.trf.xlu0
    %v1275 = vpop.trf.xlu0
    %v1276 = vpop.trf.xlu0
    %v1277 = vpop.trf.xlu0
    %v1278 = vpop.trf.xlu0
    %v1279 = vpop.trf.xlu0
    %v1280 = vpop.trf.xlu0
    %v1281 = vpop.trf.xlu0
    %v1282 = vpop.trf.xlu0
    %v1283 = vpop.trf.xlu0
    %v1285 = vsel %vm1050, %v1268, 0
    %v1288 = vsel %vm1050, %v1269, 0
    %1290 = vmatprep.subr.mxu0 0.0
    %1291 = vmatpush1.msra.mxu0 0.0
    %1292 = vmatprep.subr.mxu0 0.0
    %1293 = vmatpush1.msra.mxu0 0.0
    %1294 = vmatprep.subr.mxu0 0.0
    %1295 = vmatpush1.msra.mxu0 0.0
    %1296 = vmatprep.subr.mxu0 0.0
    %1297 = vmatpush1.msra.mxu0 0.0
    %1298 = vmatprep.subr.mxu0 0.0
    %1299 = vmatpush1.msra.mxu0 0.0
    %1300 = vmatprep.subr.mxu0 0.0
    %1301 = vmatpush1.msra.mxu0 0.0
    %1302 = vmatprep.subr.mxu0 0.0
    %1303 = vmatpush1.msra.mxu0 0.0
    %1304 = vmatprep.subr.mxu0 0.0
    %1305 = vmatpush1.msra.mxu0 0.0
    %1306 = vmatprep.subr.mxu0 0.0
    %1307 = vmatpush1.msra.mxu0 0.0
    %1308 = vmatprep.subr.mxu0 0.0
    %1309 = vmatpush1.msra.mxu0 0.0
    %1310 = vmatprep.subr.mxu0 0.0
    %1311 = vmatpush1.msra.mxu0 0.0
    %1312 = vmatprep.subr.mxu0 0.0
    %1313 = vmatpush1.msra.mxu0 0.0
    %1314 = vmatprep.subr.mxu0 0.0
    %1315 = vmatpush1.msra.mxu0 0.0
    %1316 = vmatprep.subr.mxu0 0.0
    %1317 = vmatpush1.msra.mxu0 0.0
    %1318 = vmatprep.subr.mxu0 0.0
    %1319 = vmatpush1.msra.mxu0 0.0
    %1320 = vmatprep.subr.mxu0 0.0
    %1321 = vmatpush1.msra.mxu0 %v1126
    %1322 = vmatprep.subr.mxu0 0.0
    %1323 = vmatpush2.msra.mxu0 0.0
    %1324 = vmatprep.subr.mxu0 0.0
    %1325 = vmatpush2.msra.mxu0 0.0
    %1326 = vmatprep.subr.mxu0 0.0
    %1327 = vmatpush2.msra.mxu0 0.0
    %1328 = vmatprep.subr.mxu0 0.0
    %1329 = vmatpush2.msra.mxu0 0.0
    %1330 = vmatprep.subr.mxu0 0.0
    %1331 = vmatpush2.msra.mxu0 0.0
    %1332 = vmatprep.subr.mxu0 0.0
    %1333 = vmatpush2.msra.mxu0 0.0
    %1334 = vmatprep.subr.mxu0 0.0
    %1335 = vmatpush2.msra.mxu0 0.0
    %1336 = vmatprep.subr.mxu0 0.0
    %1337 = vmatpush2.msra.mxu0 0.0
    %1338 = vmatprep.subr.mxu0 0.0
    %1339 = vmatpush2.msra.mxu0 0.0
    %1340 = vmatprep.subr.mxu0 0.0
    %1341 = vmatpush2.msra.mxu0 0.0
    %1342 = vmatprep.subr.mxu0 0.0
    %1343 = vmatpush2.msra.mxu0 0.0
    %1344 = vmatprep.subr.mxu0 0.0
    %1345 = vmatpush2.msra.mxu0 0.0
    %1346 = vmatprep.subr.mxu0 0.0
    %1347 = vmatpush2.msra.mxu0 0.0
    %1348 = vmatprep.subr.mxu0 0.0
    %1349 = vmatpush2.msra.mxu0 0.0
    %1350 = vmatprep.subr.mxu0 0.0
    %1351 = vmatpush2.msra.mxu0 0.0
    %1352 = vmatprep.subr.mxu0 0.0
    %1353 = vmatpush2.msra.mxu0 0.0
    %1354 = vmatprep.mubr.f32.mxu0 0.0
    %1355 = vmatmul.mubr.f32.gmra.mxu0 %v1285
    %v1356 = vpop.f32.mrf.mxu0
    %v1357 = vadd.f32 0.0, %v1356
    %v1358 = vpop.f32.mrf.mxu0
    %1359 = vmatprep.mubr.f32.mxu0 0.0
    %1360 = vmatmul.mubr.f32.gmra.mxu0 %v1288
    %v1361 = vpop.f32.mrf.mxu0
    %v1362 = vadd.f32 0.0, %v1361
    %v1363 = vpop.f32.mrf.mxu0
    %1364 = vdwg.mxu0
    %1365 = vxpose.xlu0.b32.start [1/16] %v409, 128
    %1366 = vxpose.xlu0.b32.cont [2/16] 0.0, 128
    %1367 = vxpose.xlu0.b32.cont [3/16] 0.0, 128
    %1368 = vxpose.xlu0.b32.cont [4/16] 0.0, 128
    %1369 = vxpose.xlu0.b32.cont [5/16] 0.0, 128
    %1370 = vxpose.xlu0.b32.cont [6/16] 0.0, 128
    %1371 = vxpose.xlu0.b32.cont [7/16] 0.0, 128
    %1372 = vxpose.xlu0.b32.cont [8/16] 0.0, 128
    %1373 = vxpose.xlu0.b32.cont [9/16] 0.0, 128
    %1374 = vxpose.xlu0.b32.cont [10/16] 0.0, 128
    %1375 = vxpose.xlu0.b32.cont [11/16] 0.0, 128
    %1376 = vxpose.xlu0.b32.cont [12/16] 0.0, 128
    %1377 = vxpose.xlu0.b32.cont [13/16] 0.0, 128
    %1378 = vxpose.xlu0.b32.cont [14/16] 0.0, 128
    %1379 = vxpose.xlu0.b32.cont [15/16] 0.0, 128
    %1380 = vxpose.xlu0.b32.end [16/16] 0.0, 128
    %v1381 = vpop.trf.xlu0
    %v1382 = vpop.trf.xlu0
    %v1383 = vpop.trf.xlu0
    %v1384 = vpop.trf.xlu0
    %v1385 = vpop.trf.xlu0
    %v1386 = vpop.trf.xlu0
    %v1387 = vpop.trf.xlu0
    %v1388 = vpop.trf.xlu0
    %v1389 = vpop.trf.xlu0
    %v1390 = vpop.trf.xlu0
    %v1391 = vpop.trf.xlu0
    %v1392 = vpop.trf.xlu0
    %v1393 = vpop.trf.xlu0
    %v1394 = vpop.trf.xlu0
    %v1395 = vpop.trf.xlu0
    %v1396 = vpop.trf.xlu0
    %v1398 = vsel %vm1050, %v1381, 0
    %v1401 = vsel %vm1050, %v1382, 0
    %1403 = vmatprep.subr.mxu0 0.0
    %1404 = vmatpush1.msra.mxu0 0.0
    %1405 = vmatprep.subr.mxu0 0.0
    %1406 = vmatpush1.msra.mxu0 0.0
    %1407 = vmatprep.subr.mxu0 0.0
    %1408 = vmatpush1.msra.mxu0 0.0
    %1409 = vmatprep.subr.mxu0 0.0
    %1410 = vmatpush1.msra.mxu0 0.0
    %1411 = vmatprep.subr.mxu0 0.0
    %1412 = vmatpush1.msra.mxu0 0.0
    %1413 = vmatprep.subr.mxu0 0.0
    %1414 = vmatpush1.msra.mxu0 0.0
    %1415 = vmatprep.subr.mxu0 0.0
    %1416 = vmatpush1.msra.mxu0 0.0
    %1417 = vmatprep.subr.mxu0 0.0
    %1418 = vmatpush1.msra.mxu0 0.0
    %1419 = vmatprep.subr.mxu0 0.0
    %1420 = vmatpush1.msra.mxu0 0.0
    %1421 = vmatprep.subr.mxu0 0.0
    %1422 = vmatpush1.msra.mxu0 0.0
    %1423 = vmatprep.subr.mxu0 0.0
    %1424 = vmatpush1.msra.mxu0 0.0
    %1425 = vmatprep.subr.mxu0 0.0
    %1426 = vmatpush1.msra.mxu0 0.0
    %1427 = vmatprep.subr.mxu0 0.0
    %1428 = vmatpush1.msra.mxu0 0.0
    %1429 = vmatprep.subr.mxu0 0.0
    %1430 = vmatpush1.msra.mxu0 0.0
    %1431 = vmatprep.subr.mxu0 0.0
    %1432 = vmatpush1.msra.mxu0 0.0
    %1433 = vmatprep.subr.mxu0 0.0
    %1434 = vmatpush1.msra.mxu0 %v1128
    %1435 = vmatprep.subr.mxu0 0.0
    %1436 = vmatpush2.msra.mxu0 0.0
    %1437 = vmatprep.subr.mxu0 0.0
    %1438 = vmatpush2.msra.mxu0 0.0
    %1439 = vmatprep.subr.mxu0 0.0
    %1440 = vmatpush2.msra.mxu0 0.0
    %1441 = vmatprep.subr.mxu0 0.0
    %1442 = vmatpush2.msra.mxu0 0.0
    %1443 = vmatprep.subr.mxu0 0.0
    %1444 = vmatpush2.msra.mxu0 0.0
    %1445 = vmatprep.subr.mxu0 0.0
    %1446 = vmatpush2.msra.mxu0 0.0
    %1447 = vmatprep.subr.mxu0 0.0
    %1448 = vmatpush2.msra.mxu0 0.0
    %1449 = vmatprep.subr.mxu0 0.0
    %1450 = vmatpush2.msra.mxu0 0.0
    %1451 = vmatprep.subr.mxu0 0.0
    %1452 = vmatpush2.msra.mxu0 0.0
    %1453 = vmatprep.subr.mxu0 0.0
    %1454 = vmatpush2.msra.mxu0 0.0
    %1455 = vmatprep.subr.mxu0 0.0
    %1456 = vmatpush2.msra.mxu0 0.0
    %1457 = vmatprep.subr.mxu0 0.0
    %1458 = vmatpush2.msra.mxu0 0.0
    %1459 = vmatprep.subr.mxu0 0.0
    %1460 = vmatpush2.msra.mxu0 0.0
    %1461 = vmatprep.subr.mxu0 0.0
    %1462 = vmatpush2.msra.mxu0 0.0
    %1463 = vmatprep.subr.mxu0 0.0
    %1464 = vmatpush2.msra.mxu0 0.0
    %1465 = vmatprep.subr.mxu0 0.0
    %1466 = vmatpush2.msra.mxu0 0.0
    %1467 = vmatprep.mubr.f32.mxu0 0.0
    %1468 = vmatmul.mubr.f32.gmra.mxu0 %v1398
    %v1469 = vpop.f32.mrf.mxu0
    %v1470 = vadd.f32 0.0, %v1469
    %v1471 = vpop.f32.mrf.mxu0
    %1472 = vmatprep.mubr.f32.mxu0 0.0
    %1473 = vmatmul.mubr.f32.gmra.mxu0 %v1401
    %v1474 = vpop.f32.mrf.mxu0
    %v1475 = vadd.f32 0.0, %v1474
    %v1476 = vpop.f32.mrf.mxu0
    %1477 = vdwg.mxu0
    %1478 = vxpose.xlu0.b32.start [1/16] %v414, 128
    %1479 = vxpose.xlu0.b32.cont [2/16] 0.0, 128
    %1480 = vxpose.xlu0.b32.cont [3/16] 0.0, 128
    %1481 = vxpose.xlu0.b32.cont [4/16] 0.0, 128
    %1482 = vxpose.xlu0.b32.cont [5/16] 0.0, 128
    %1483 = vxpose.xlu0.b32.cont [6/16] 0.0, 128
    %1484 = vxpose.xlu0.b32.cont [7/16] 0.0, 128
    %1485 = vxpose.xlu0.b32.cont [8/16] 0.0, 128
    %1486 = vxpose.xlu0.b32.cont [9/16] 0.0, 128
    %1487 = vxpose.xlu0.b32.cont [10/16] 0.0, 128
    %1488 = vxpose.xlu0.b32.cont [11/16] 0.0, 128
    %1489 = vxpose.xlu0.b32.cont [12/16] 0.0, 128
    %1490 = vxpose.xlu0.b32.cont [13/16] 0.0, 128
    %1491 = vxpose.xlu0.b32.cont [14/16] 0.0, 128
    %1492 = vxpose.xlu0.b32.cont [15/16] 0.0, 128
    %1493 = vxpose.xlu0.b32.end [16/16] 0.0, 128
    %v1494 = vpop.trf.xlu0
    %v1495 = vpop.trf.xlu0
    %v1496 = vpop.trf.xlu0
    %v1497 = vpop.trf.xlu0
    %v1498 = vpop.trf.xlu0
    %v1499 = vpop.trf.xlu0
    %v1500 = vpop.trf.xlu0
    %v1501 = vpop.trf.xlu0
    %v1502 = vpop.trf.xlu0
    %v1503 = vpop.trf.xlu0
    %v1504 = vpop.trf.xlu0
    %v1505 = vpop.trf.xlu0
    %v1506 = vpop.trf.xlu0
    %v1507 = vpop.trf.xlu0
    %v1508 = vpop.trf.xlu0
    %v1509 = vpop.trf.xlu0
    %v1511 = vsel %vm1050, %v1494, 0
    %v1514 = vsel %vm1050, %v1495, 0
    %1516 = vmatprep.subr.mxu0 0.0
    %1517 = vmatpush1.msra.mxu0 0.0
    %1518 = vmatprep.subr.mxu0 0.0
    %1519 = vmatpush1.msra.mxu0 0.0
    %1520 = vmatprep.subr.mxu0 0.0
    %1521 = vmatpush1.msra.mxu0 0.0
    %1522 = vmatprep.subr.mxu0 0.0
    %1523 = vmatpush1.msra.mxu0 0.0
    %1524 = vmatprep.subr.mxu0 0.0
    %1525 = vmatpush1.msra.mxu0 0.0
    %1526 = vmatprep.subr.mxu0 0.0
    %1527 = vmatpush1.msra.mxu0 0.0
    %1528 = vmatprep.subr.mxu0 0.0
    %1529 = vmatpush1.msra.mxu0 0.0
    %1530 = vmatprep.subr.mxu0 0.0
    %1531 = vmatpush1.msra.mxu0 0.0
    %1532 = vmatprep.subr.mxu0 0.0
    %1533 = vmatpush1.msra.mxu0 0.0
    %1534 = vmatprep.subr.mxu0 0.0
    %1535 = vmatpush1.msra.mxu0 0.0
    %1536 = vmatprep.subr.mxu0 0.0
    %1537 = vmatpush1.msra.mxu0 0.0
    %1538 = vmatprep.subr.mxu0 0.0
    %1539 = vmatpush1.msra.mxu0 0.0
    %1540 = vmatprep.subr.mxu0 0.0
    %1541 = vmatpush1.msra.mxu0 0.0
    %1542 = vmatprep.subr.mxu0 0.0
    %1543 = vmatpush1.msra.mxu0 0.0
    %1544 = vmatprep.subr.mxu0 0.0
    %1545 = vmatpush1.msra.mxu0 0.0
    %1546 = vmatprep.subr.mxu0 0.0
    %1547 = vmatpush1.msra.mxu0 %v1130
    %1548 = vmatprep.subr.mxu0 0.0
    %1549 = vmatpush2.msra.mxu0 0.0
    %1550 = vmatprep.subr.mxu0 0.0
    %1551 = vmatpush2.msra.mxu0 0.0
    %1552 = vmatprep.subr.mxu0 0.0
    %1553 = vmatpush2.msra.mxu0 0.0
    %1554 = vmatprep.subr.mxu0 0.0
    %1555 = vmatpush2.msra.mxu0 0.0
    %1556 = vmatprep.subr.mxu0 0.0
    %1557 = vmatpush2.msra.mxu0 0.0
    %1558 = vmatprep.subr.mxu0 0.0
    %1559 = vmatpush2.msra.mxu0 0.0
    %1560 = vmatprep.subr.mxu0 0.0
    %1561 = vmatpush2.msra.mxu0 0.0
    %1562 = vmatprep.subr.mxu0 0.0
    %1563 = vmatpush2.msra.mxu0 0.0
    %1564 = vmatprep.subr.mxu0 0.0
    %1565 = vmatpush2.msra.mxu0 0.0
    %1566 = vmatprep.subr.mxu0 0.0
    %1567 = vmatpush2.msra.mxu0 0.0
    %1568 = vmatprep.subr.mxu0 0.0
    %1569 = vmatpush2.msra.mxu0 0.0
    %1570 = vmatprep.subr.mxu0 0.0
    %1571 = vmatpush2.msra.mxu0 0.0
    %1572 = vmatprep.subr.mxu0 0.0
    %1573 = vmatpush2.msra.mxu0 0.0
    %1574 = vmatprep.subr.mxu0 0.0
    %1575 = vmatpush2.msra.mxu0 0.0
    %1576 = vmatprep.subr.mxu0 0.0
    %1577 = vmatpush2.msra.mxu0 0.0
    %1578 = vmatprep.subr.mxu0 0.0
    %1579 = vmatpush2.msra.mxu0 0.0
    %1580 = vmatprep.mubr.f32.mxu0 0.0
    %1581 = vmatmul.mubr.f32.gmra.mxu0 %v1511
    %v1582 = vpop.f32.mrf.mxu0
    %v1583 = vadd.f32 0.0, %v1582
    %v1584 = vpop.f32.mrf.mxu0
    %1585 = vmatprep.mubr.f32.mxu0 0.0
    %1586 = vmatmul.mubr.f32.gmra.mxu0 %v1514
    %v1587 = vpop.f32.mrf.mxu0
    %v1588 = vadd.f32 0.0, %v1587
    %v1589 = vpop.f32.mrf.mxu0
    %1590 = vdwg.mxu0
    %1591 = vxpose.xlu0.b32.start [1/16] %v446, 128
    %1592 = vxpose.xlu0.b32.cont [2/16] 0.0, 128
    %1593 = vxpose.xlu0.b32.cont [3/16] 0.0, 128
    %1594 = vxpose.xlu0.b32.cont [4/16] 0.0, 128
    %1595 = vxpose.xlu0.b32.cont [5/16] 0.0, 128
    %1596 = vxpose.xlu0.b32.cont [6/16] 0.0, 128
    %1597 = vxpose.xlu0.b32.cont [7/16] 0.0, 128
    %1598 = vxpose.xlu0.b32.cont [8/16] 0.0, 128
    %1599 = vxpose.xlu0.b32.cont [9/16] 0.0, 128
    %1600 = vxpose.xlu0.b32.cont [10/16] 0.0, 128
    %1601 = vxpose.xlu0.b32.cont [11/16] 0.0, 128
    %1602 = vxpose.xlu0.b32.cont [12/16] 0.0, 128
    %1603 = vxpose.xlu0.b32.cont [13/16] 0.0, 128
    %1604 = vxpose.xlu0.b32.cont [14/16] 0.0, 128
    %1605 = vxpose.xlu0.b32.cont [15/16] 0.0, 128
    %1606 = vxpose.xlu0.b32.end [16/16] 0.0, 128
    %v1607 = vpop.trf.xlu0
    %v1608 = vpop.trf.xlu0
    %v1609 = vpop.trf.xlu0
    %v1610 = vpop.trf.xlu0
    %v1611 = vpop.trf.xlu0
    %v1612 = vpop.trf.xlu0
    %v1613 = vpop.trf.xlu0
    %v1614 = vpop.trf.xlu0
    %v1615 = vpop.trf.xlu0
    %v1616 = vpop.trf.xlu0
    %v1617 = vpop.trf.xlu0
    %v1618 = vpop.trf.xlu0
    %v1619 = vpop.trf.xlu0
    %v1620 = vpop.trf.xlu0
    %v1621 = vpop.trf.xlu0
    %v1622 = vpop.trf.xlu0
    %v1624 = vsel %vm1050, %v1607, 0
    %v1627 = vsel %vm1050, %v1608, 0
    %1629 = vmatprep.subr.mxu0 0.0
    %1630 = vmatpush1.msra.mxu0 0.0
    %1631 = vmatprep.subr.mxu0 0.0
    %1632 = vmatpush1.msra.mxu0 0.0
    %1633 = vmatprep.subr.mxu0 0.0
    %1634 = vmatpush1.msra.mxu0 0.0
    %1635 = vmatprep.subr.mxu0 0.0
    %1636 = vmatpush1.msra.mxu0 0.0
    %1637 = vmatprep.subr.mxu0 0.0
    %1638 = vmatpush1.msra.mxu0 0.0
    %1639 = vmatprep.subr.mxu0 0.0
    %1640 = vmatpush1.msra.mxu0 0.0
    %1641 = vmatprep.subr.mxu0 0.0
    %1642 = vmatpush1.msra.mxu0 0.0
    %1643 = vmatprep.subr.mxu0 0.0
    %1644 = vmatpush1.msra.mxu0 0.0
    %1645 = vmatprep.subr.mxu0 0.0
    %1646 = vmatpush1.msra.mxu0 0.0
    %1647 = vmatprep.subr.mxu0 0.0
    %1648 = vmatpush1.msra.mxu0 0.0
    %1649 = vmatprep.subr.mxu0 0.0
    %1650 = vmatpush1.msra.mxu0 0.0
    %1651 = vmatprep.subr.mxu0 0.0
    %1652 = vmatpush1.msra.mxu0 0.0
    %1653 = vmatprep.subr.mxu0 0.0
    %1654 = vmatpush1.msra.mxu0 0.0
    %1655 = vmatprep.subr.mxu0 0.0
    %1656 = vmatpush1.msra.mxu0 0.0
    %1657 = vmatprep.subr.mxu0 0.0
    %1658 = vmatpush1.msra.mxu0 0.0
    %1659 = vmatprep.subr.mxu0 0.0
    %1660 = vmatpush1.msra.mxu0 %v1132
    %1661 = vmatprep.subr.mxu0 0.0
    %1662 = vmatpush2.msra.mxu0 0.0
    %1663 = vmatprep.subr.mxu0 0.0
    %1664 = vmatpush2.msra.mxu0 0.0
    %1665 = vmatprep.subr.mxu0 0.0
    %1666 = vmatpush2.msra.mxu0 0.0
    %1667 = vmatprep.subr.mxu0 0.0
    %1668 = vmatpush2.msra.mxu0 0.0
    %1669 = vmatprep.subr.mxu0 0.0
    %1670 = vmatpush2.msra.mxu0 0.0
    %1671 = vmatprep.subr.mxu0 0.0
    %1672 = vmatpush2.msra.mxu0 0.0
    %1673 = vmatprep.subr.mxu0 0.0
    %1674 = vmatpush2.msra.mxu0 0.0
    %1675 = vmatprep.subr.mxu0 0.0
    %1676 = vmatpush2.msra.mxu0 0.0
    %1677 = vmatprep.subr.mxu0 0.0
    %1678 = vmatpush2.msra.mxu0 0.0
    %1679 = vmatprep.subr.mxu0 0.0
    %1680 = vmatpush2.msra.mxu0 0.0
    %1681 = vmatprep.subr.mxu0 0.0
    %1682 = vmatpush2.msra.mxu0 0.0
    %1683 = vmatprep.subr.mxu0 0.0
    %1684 = vmatpush2.msra.mxu0 0.0
    %1685 = vmatprep.subr.mxu0 0.0
    %1686 = vmatpush2.msra.mxu0 0.0
    %1687 = vmatprep.subr.mxu0 0.0
    %1688 = vmatpush2.msra.mxu0 0.0
    %1689 = vmatprep.subr.mxu0 0.0
    %1690 = vmatpush2.msra.mxu0 0.0
    %1691 = vmatprep.subr.mxu0 0.0
    %1692 = vmatpush2.msra.mxu0 0.0
    %1693 = vmatprep.mubr.f32.mxu0 0.0
    %1694 = vmatmul.mubr.f32.gmra.mxu0 %v1624
    %v1695 = vpop.f32.mrf.mxu0
    %v1696 = vadd.f32 0.0, %v1695
    %v1697 = vpop.f32.mrf.mxu0
    %1698 = vmatprep.mubr.f32.mxu0 0.0
    %1699 = vmatmul.mubr.f32.gmra.mxu0 %v1627
    %v1700 = vpop.f32.mrf.mxu0
    %v1701 = vadd.f32 0.0, %v1700
    %v1702 = vpop.f32.mrf.mxu0
    %1703 = vdwg.mxu0
    %1704 = vxpose.xlu0.b32.start [1/16] %v448, 128
    %1705 = vxpose.xlu0.b32.cont [2/16] 0.0, 128
    %1706 = vxpose.xlu0.b32.cont [3/16] 0.0, 128
    %1707 = vxpose.xlu0.b32.cont [4/16] 0.0, 128
    %1708 = vxpose.xlu0.b32.cont [5/16] 0.0, 128
    %1709 = vxpose.xlu0.b32.cont [6/16] 0.0, 128
    %1710 = vxpose.xlu0.b32.cont [7/16] 0.0, 128
    %1711 = vxpose.xlu0.b32.cont [8/16] 0.0, 128
    %1712 = vxpose.xlu0.b32.cont [9/16] 0.0, 128
    %1713 = vxpose.xlu0.b32.cont [10/16] 0.0, 128
    %1714 = vxpose.xlu0.b32.cont [11/16] 0.0, 128
    %1715 = vxpose.xlu0.b32.cont [12/16] 0.0, 128
    %1716 = vxpose.xlu0.b32.cont [13/16] 0.0, 128
    %1717 = vxpose.xlu0.b32.cont [14/16] 0.0, 128
    %1718 = vxpose.xlu0.b32.cont [15/16] 0.0, 128
    %1719 = vxpose.xlu0.b32.end [16/16] 0.0, 128
    %v1720 = vpop.trf.xlu0
    %v1721 = vpop.trf.xlu0
    %v1722 = vpop.trf.xlu0
    %v1723 = vpop.trf.xlu0
    %v1724 = vpop.trf.xlu0
    %v1725 = vpop.trf.xlu0
    %v1726 = vpop.trf.xlu0
    %v1727 = vpop.trf.xlu0
    %v1728 = vpop.trf.xlu0
    %v1729 = vpop.trf.xlu0
    %v1730 = vpop.trf.xlu0
    %v1731 = vpop.trf.xlu0
    %v1732 = vpop.trf.xlu0
    %v1733 = vpop.trf.xlu0
    %v1734 = vpop.trf.xlu0
    %v1735 = vpop.trf.xlu0
    %v1737 = vsel %vm1050, %v1720, 0
    %v1740 = vsel %vm1050, %v1721, 0
    %1742 = vmatprep.subr.mxu0 0.0
    %1743 = vmatpush1.msra.mxu0 0.0
    %1744 = vmatprep.subr.mxu0 0.0
    %1745 = vmatpush1.msra.mxu0 0.0
    %1746 = vmatprep.subr.mxu0 0.0
    %1747 = vmatpush1.msra.mxu0 0.0
    %1748 = vmatprep.subr.mxu0 0.0
    %1749 = vmatpush1.msra.mxu0 0.0
    %1750 = vmatprep.subr.mxu0 0.0
    %1751 = vmatpush1.msra.mxu0 0.0
    %1752 = vmatprep.subr.mxu0 0.0
    %1753 = vmatpush1.msra.mxu0 0.0
    %1754 = vmatprep.subr.mxu0 0.0
    %1755 = vmatpush1.msra.mxu0 0.0
    %1756 = vmatprep.subr.mxu0 0.0
    %1757 = vmatpush1.msra.mxu0 0.0
    %1758 = vmatprep.subr.mxu0 0.0
    %1759 = vmatpush1.msra.mxu0 0.0
    %1760 = vmatprep.subr.mxu0 0.0
    %1761 = vmatpush1.msra.mxu0 0.0
    %1762 = vmatprep.subr.mxu0 0.0
    %1763 = vmatpush1.msra.mxu0 0.0
    %1764 = vmatprep.subr.mxu0 0.0
    %1765 = vmatpush1.msra.mxu0 0.0
    %1766 = vmatprep.subr.mxu0 0.0
    %1767 = vmatpush1.msra.mxu0 0.0
    %1768 = vmatprep.subr.mxu0 0.0
    %1769 = vmatpush1.msra.mxu0 0.0
    %1770 = vmatprep.subr.mxu0 0.0
    %1771 = vmatpush1.msra.mxu0 0.0
    %1772 = vmatprep.subr.mxu0 0.0
    %1773 = vmatpush1.msra.mxu0 %v1134
    %1774 = vmatprep.subr.mxu0 0.0
    %1775 = vmatpush2.msra.mxu0 0.0
    %1776 = vmatprep.subr.mxu0 0.0
    %1777 = vmatpush2.msra.mxu0 0.0
    %1778 = vmatprep.subr.mxu0 0.0
    %1779 = vmatpush2.msra.mxu0 0.0
    %1780 = vmatprep.subr.mxu0 0.0
    %1781 = vmatpush2.msra.mxu0 0.0
    %1782 = vmatprep.subr.mxu0 0.0
    %1783 = vmatpush2.msra.mxu0 0.0
    %1784 = vmatprep.subr.mxu0 0.0
    %1785 = vmatpush2.msra.mxu0 0.0
    %1786 = vmatprep.subr.mxu0 0.0
    %1787 = vmatpush2.msra.mxu0 0.0
    %1788 = vmatprep.subr.mxu0 0.0
    %1789 = vmatpush2.msra.mxu0 0.0
    %1790 = vmatprep.subr.mxu0 0.0
    %1791 = vmatpush2.msra.mxu0 0.0
    %1792 = vmatprep.subr.mxu0 0.0
    %1793 = vmatpush2.msra.mxu0 0.0
    %1794 = vmatprep.subr.mxu0 0.0
    %1795 = vmatpush2.msra.mxu0 0.0
    %1796 = vmatprep.subr.mxu0 0.0
    %1797 = vmatpush2.msra.mxu0 0.0
    %1798 = vmatprep.subr.mxu0 0.0
    %1799 = vmatpush2.msra.mxu0 0.0
    %1800 = vmatprep.subr.mxu0 0.0
    %1801 = vmatpush2.msra.mxu0 0.0
    %1802 = vmatprep.subr.mxu0 0.0
    %1803 = vmatpush2.msra.mxu0 0.0
    %1804 = vmatprep.subr.mxu0 0.0
    %1805 = vmatpush2.msra.mxu0 0.0
    %1806 = vmatprep.mubr.f32.mxu0 0.0
    %1807 = vmatmul.mubr.f32.gmra.mxu0 %v1737
    %v1808 = vpop.f32.mrf.mxu0
    %v1809 = vadd.f32 0.0, %v1808
    %v1810 = vpop.f32.mrf.mxu0
    %1811 = vmatprep.mubr.f32.mxu0 0.0
    %1812 = vmatmul.mubr.f32.gmra.mxu0 %v1740
    %v1813 = vpop.f32.mrf.mxu0
    %v1814 = vadd.f32 0.0, %v1813
    %v1815 = vpop.f32.mrf.mxu0
    %1816 = vdwg.mxu0
    %1817 = vxpose.xlu0.b32.start [1/16] %v450, 128
    %1818 = vxpose.xlu0.b32.cont [2/16] 0.0, 128
    %1819 = vxpose.xlu0.b32.cont [3/16] 0.0, 128
    %1820 = vxpose.xlu0.b32.cont [4/16] 0.0, 128
    %1821 = vxpose.xlu0.b32.cont [5/16] 0.0, 128
    %1822 = vxpose.xlu0.b32.cont [6/16] 0.0, 128
    %1823 = vxpose.xlu0.b32.cont [7/16] 0.0, 128
    %1824 = vxpose.xlu0.b32.cont [8/16] 0.0, 128
    %1825 = vxpose.xlu0.b32.cont [9/16] 0.0, 128
    %1826 = vxpose.xlu0.b32.cont [10/16] 0.0, 128
    %1827 = vxpose.xlu0.b32.cont [11/16] 0.0, 128
    %1828 = vxpose.xlu0.b32.cont [12/16] 0.0, 128
    %1829 = vxpose.xlu0.b32.cont [13/16] 0.0, 128
    %1830 = vxpose.xlu0.b32.cont [14/16] 0.0, 128
    %1831 = vxpose.xlu0.b32.cont [15/16] 0.0, 128
    %1832 = vxpose.xlu0.b32.end [16/16] 0.0, 128
    %v1833 = vpop.trf.xlu0
    %v1834 = vpop.trf.xlu0
    %v1835 = vpop.trf.xlu0
    %v1836 = vpop.trf.xlu0
    %v1837 = vpop.trf.xlu0
    %v1838 = vpop.trf.xlu0
    %v1839 = vpop.trf.xlu0
    %v1840 = vpop.trf.xlu0
    %v1841 = vpop.trf.xlu0
    %v1842 = vpop.trf.xlu0
    %v1843 = vpop.trf.xlu0
    %v1844 = vpop.trf.xlu0
    %v1845 = vpop.trf.xlu0
    %v1846 = vpop.trf.xlu0
    %v1847 = vpop.trf.xlu0
    %v1848 = vpop.trf.xlu0
    %v1850 = vsel %vm1050, %v1833, 0
    %v1853 = vsel %vm1050, %v1834, 0
    %1855 = vmatprep.subr.mxu0 0.0
    %1856 = vmatpush1.msra.mxu0 0.0
    %1857 = vmatprep.subr.mxu0 0.0
    %1858 = vmatpush1.msra.mxu0 0.0
    %1859 = vmatprep.subr.mxu0 0.0
    %1860 = vmatpush1.msra.mxu0 0.0
    %1861 = vmatprep.subr.mxu0 0.0
    %1862 = vmatpush1.msra.mxu0 0.0
    %1863 = vmatprep.subr.mxu0 0.0
    %1864 = vmatpush1.msra.mxu0 0.0
    %1865 = vmatprep.subr.mxu0 0.0
    %1866 = vmatpush1.msra.mxu0 0.0
    %1867 = vmatprep.subr.mxu0 0.0
    %1868 = vmatpush1.msra.mxu0 0.0
    %1869 = vmatprep.subr.mxu0 0.0
    %1870 = vmatpush1.msra.mxu0 0.0
    %1871 = vmatprep.subr.mxu0 0.0
    %1872 = vmatpush1.msra.mxu0 0.0
    %1873 = vmatprep.subr.mxu0 0.0
    %1874 = vmatpush1.msra.mxu0 0.0
    %1875 = vmatprep.subr.mxu0 0.0
    %1876 = vmatpush1.msra.mxu0 0.0
    %1877 = vmatprep.subr.mxu0 0.0
    %1878 = vmatpush1.msra.mxu0 0.0
    %1879 = vmatprep.subr.mxu0 0.0
    %1880 = vmatpush1.msra.mxu0 0.0
    %1881 = vmatprep.subr.mxu0 0.0
    %1882 = vmatpush1.msra.mxu0 0.0
    %1883 = vmatprep.subr.mxu0 0.0
    %1884 = vmatpush1.msra.mxu0 0.0
    %1885 = vmatprep.subr.mxu0 0.0
    %1886 = vmatpush1.msra.mxu0 %v1136
    %1887 = vmatprep.subr.mxu0 0.0
    %1888 = vmatpush2.msra.mxu0 0.0
    %1889 = vmatprep.subr.mxu0 0.0
    %1890 = vmatpush2.msra.mxu0 0.0
    %1891 = vmatprep.subr.mxu0 0.0
    %1892 = vmatpush2.msra.mxu0 0.0
    %1893 = vmatprep.subr.mxu0 0.0
    %1894 = vmatpush2.msra.mxu0 0.0
    %1895 = vmatprep.subr.mxu0 0.0
    %1896 = vmatpush2.msra.mxu0 0.0
    %1897 = vmatprep.subr.mxu0 0.0
    %1898 = vmatpush2.msra.mxu0 0.0
    %1899 = vmatprep.subr.mxu0 0.0
    %1900 = vmatpush2.msra.mxu0 0.0
    %1901 = vmatprep.subr.mxu0 0.0
    %1902 = vmatpush2.msra.mxu0 0.0
    %1903 = vmatprep.subr.mxu0 0.0
    %1904 = vmatpush2.msra.mxu0 0.0
    %1905 = vmatprep.subr.mxu0 0.0
    %1906 = vmatpush2.msra.mxu0 0.0
    %1907 = vmatprep.subr.mxu0 0.0
    %1908 = vmatpush2.msra.mxu0 0.0
    %1909 = vmatprep.subr.mxu0 0.0
    %1910 = vmatpush2.msra.mxu0 0.0
    %1911 = vmatprep.subr.mxu0 0.0
    %1912 = vmatpush2.msra.mxu0 0.0
    %1913 = vmatprep.subr.mxu0 0.0
    %1914 = vmatpush2.msra.mxu0 0.0
    %1915 = vmatprep.subr.mxu0 0.0
    %1916 = vmatpush2.msra.mxu0 0.0
    %1917 = vmatprep.subr.mxu0 0.0
    %1918 = vmatpush2.msra.mxu0 0.0
    %1919 = vmatprep.mubr.f32.mxu0 0.0
    %1920 = vmatmul.mubr.f32.gmra.mxu0 %v1850
    %v1921 = vpop.f32.mrf.mxu0
    %v1922 = vadd.f32 0.0, %v1921
    %v1923 = vpop.f32.mrf.mxu0
    %1924 = vmatprep.mubr.f32.mxu0 0.0
    %1925 = vmatmul.mubr.f32.gmra.mxu0 %v1853
    %v1926 = vpop.f32.mrf.mxu0
    %v1927 = vadd.f32 0.0, %v1926
    %v1928 = vpop.f32.mrf.mxu0
    %1929 = vdwg.mxu0
    %1930 = vxpose.xlu0.b32.start [1/16] %v452, 128
    %1931 = vxpose.xlu0.b32.cont [2/16] 0.0, 128
    %1932 = vxpose.xlu0.b32.cont [3/16] 0.0, 128
    %1933 = vxpose.xlu0.b32.cont [4/16] 0.0, 128
    %1934 = vxpose.xlu0.b32.cont [5/16] 0.0, 128
    %1935 = vxpose.xlu0.b32.cont [6/16] 0.0, 128
    %1936 = vxpose.xlu0.b32.cont [7/16] 0.0, 128
    %1937 = vxpose.xlu0.b32.cont [8/16] 0.0, 128
    %1938 = vxpose.xlu0.b32.cont [9/16] 0.0, 128
    %1939 = vxpose.xlu0.b32.cont [10/16] 0.0, 128
    %1940 = vxpose.xlu0.b32.cont [11/16] 0.0, 128
    %1941 = vxpose.xlu0.b32.cont [12/16] 0.0, 128
    %1942 = vxpose.xlu0.b32.cont [13/16] 0.0, 128
    %1943 = vxpose.xlu0.b32.cont [14/16] 0.0, 128
    %1944 = vxpose.xlu0.b32.cont [15/16] 0.0, 128
    %1945 = vxpose.xlu0.b32.end [16/16] 0.0, 128
    %v1946 = vpop.trf.xlu0
    %v1947 = vpop.trf.xlu0
    %v1948 = vpop.trf.xlu0
    %v1949 = vpop.trf.xlu0
    %v1950 = vpop.trf.xlu0
    %v1951 = vpop.trf.xlu0
    %v1952 = vpop.trf.xlu0
    %v1953 = vpop.trf.xlu0
    %v1954 = vpop.trf.xlu0
    %v1955 = vpop.trf.xlu0
    %v1956 = vpop.trf.xlu0
    %v1957 = vpop.trf.xlu0
    %v1958 = vpop.trf.xlu0
    %v1959 = vpop.trf.xlu0
    %v1960 = vpop.trf.xlu0
    %v1961 = vpop.trf.xlu0
    %v1963 = vsel %vm1050, %v1946, 0
    %v1966 = vsel %vm1050, %v1947, 0
    %1968 = vmatprep.subr.mxu0 0.0
    %1969 = vmatpush1.msra.mxu0 0.0
    %1970 = vmatprep.subr.mxu0 0.0
    %1971 = vmatpush1.msra.mxu0 0.0
    %1972 = vmatprep.subr.mxu0 0.0
    %1973 = vmatpush1.msra.mxu0 0.0
    %1974 = vmatprep.subr.mxu0 0.0
    %1975 = vmatpush1.msra.mxu0 0.0
    %1976 = vmatprep.subr.mxu0 0.0
    %1977 = vmatpush1.msra.mxu0 0.0
    %1978 = vmatprep.subr.mxu0 0.0
    %1979 = vmatpush1.msra.mxu0 0.0
    %1980 = vmatprep.subr.mxu0 0.0
    %1981 = vmatpush1.msra.mxu0 0.0
    %1982 = vmatprep.subr.mxu0 0.0
    %1983 = vmatpush1.msra.mxu0 0.0
    %1984 = vmatprep.subr.mxu0 0.0
    %1985 = vmatpush1.msra.mxu0 0.0
    %1986 = vmatprep.subr.mxu0 0.0
    %1987 = vmatpush1.msra.mxu0 0.0
    %1988 = vmatprep.subr.mxu0 0.0
    %1989 = vmatpush1.msra.mxu0 0.0
    %1990 = vmatprep.subr.mxu0 0.0
    %1991 = vmatpush1.msra.mxu0 0.0
    %1992 = vmatprep.subr.mxu0 0.0
    %1993 = vmatpush1.msra.mxu0 0.0
    %1994 = vmatprep.subr.mxu0 0.0
    %1995 = vmatpush1.msra.mxu0 0.0
    %1996 = vmatprep.subr.mxu0 0.0
    %1997 = vmatpush1.msra.mxu0 0.0
    %1998 = vmatprep.subr.mxu0 0.0
    %1999 = vmatpush1.msra.mxu0 %v1138
    %2000 = vmatprep.subr.mxu0 0.0
    %2001 = vmatpush2.msra.mxu0 0.0
    %2002 = vmatprep.subr.mxu0 0.0
    %2003 = vmatpush2.msra.mxu0 0.0
    %2004 = vmatprep.subr.mxu0 0.0
    %2005 = vmatpush2.msra.mxu0 0.0
    %2006 = vmatprep.subr.mxu0 0.0
    %2007 = vmatpush2.msra.mxu0 0.0
    %2008 = vmatprep.subr.mxu0 0.0
    %2009 = vmatpush2.msra.mxu0 0.0
    %2010 = vmatprep.subr.mxu0 0.0
    %2011 = vmatpush2.msra.mxu0 0.0
    %2012 = vmatprep.subr.mxu0 0.0
    %2013 = vmatpush2.msra.mxu0 0.0
    %2014 = vmatprep.subr.mxu0 0.0
    %2015 = vmatpush2.msra.mxu0 0.0
    %2016 = vmatprep.subr.mxu0 0.0
    %2017 = vmatpush2.msra.mxu0 0.0
    %2018 = vmatprep.subr.mxu0 0.0
    %2019 = vmatpush2.msra.mxu0 0.0
    %2020 = vmatprep.subr.mxu0 0.0
    %2021 = vmatpush2.msra.mxu0 0.0
    %2022 = vmatprep.subr.mxu0 0.0
    %2023 = vmatpush2.msra.mxu0 0.0
    %2024 = vmatprep.subr.mxu0 0.0
    %2025 = vmatpush2.msra.mxu0 0.0
    %2026 = vmatprep.subr.mxu0 0.0
    %2027 = vmatpush2.msra.mxu0 0.0
    %2028 = vmatprep.subr.mxu0 0.0
    %2029 = vmatpush2.msra.mxu0 0.0
    %2030 = vmatprep.subr.mxu0 0.0
    %2031 = vmatpush2.msra.mxu0 0.0
    %2032 = vmatprep.mubr.f32.mxu0 0.0
    %2033 = vmatmul.mubr.f32.gmra.mxu0 %v1963
    %v2034 = vpop.f32.mrf.mxu0
    %v2035 = vadd.f32 0.0, %v2034
    %v2036 = vpop.f32.mrf.mxu0
    %2037 = vmatprep.mubr.f32.mxu0 0.0
    %2038 = vmatmul.mubr.f32.gmra.mxu0 %v1966
    %v2039 = vpop.f32.mrf.mxu0
    %v2040 = vadd.f32 0.0, %v2039
    %v2041 = vpop.f32.mrf.mxu0
    %2042 = vdwg.mxu0
    %v2044 = vsel %vm1050, %v1244, 0
    %v2047 = vsel %vm1050, %v1249, 0
    %2049 = vmatprep.subr.mxu0 0.0
    %2050 = vmatpush1.msra.mxu0 0.0
    %2051 = vmatprep.subr.mxu0 0.0
    %2052 = vmatpush1.msra.mxu0 0.0
    %2053 = vmatprep.subr.mxu0 0.0
    %2054 = vmatpush1.msra.mxu0 0.0
    %2055 = vmatprep.subr.mxu0 0.0
    %2056 = vmatpush1.msra.mxu0 0.0
    %2057 = vmatprep.subr.mxu0 0.0
    %2058 = vmatpush1.msra.mxu0 0.0
    %2059 = vmatprep.subr.mxu0 0.0
    %2060 = vmatpush1.msra.mxu0 0.0
    %2061 = vmatprep.subr.mxu0 0.0
    %2062 = vmatpush1.msra.mxu0 0.0
    %2063 = vmatprep.subr.mxu0 0.0
    %2064 = vmatpush1.msra.mxu0 0.0
    %2065 = vmatprep.subr.mxu0 0.0
    %2066 = vmatpush1.msra.mxu0 0.0
    %2067 = vmatprep.subr.mxu0 0.0
    %2068 = vmatpush1.msra.mxu0 0.0
    %2069 = vmatprep.subr.mxu0 0.0
    %2070 = vmatpush1.msra.mxu0 0.0
    %2071 = vmatprep.subr.mxu0 0.0
    %2072 = vmatpush1.msra.mxu0 0.0
    %2073 = vmatprep.subr.mxu0 0.0
    %2074 = vmatpush1.msra.mxu0 0.0
    %2075 = vmatprep.subr.mxu0 0.0
    %2076 = vmatpush1.msra.mxu0 0.0
    %2077 = vmatprep.subr.mxu0 0.0
    %2078 = vmatpush1.msra.mxu0 0.0
    %2079 = vmatprep.subr.mxu0 0.0
    %2080 = vmatpush1.msra.mxu0 %v399
    %2081 = vmatprep.subr.mxu0 0.0
    %2082 = vmatpush2.msra.mxu0 0.0
    %2083 = vmatprep.subr.mxu0 0.0
    %2084 = vmatpush2.msra.mxu0 0.0
    %2085 = vmatprep.subr.mxu0 0.0
    %2086 = vmatpush2.msra.mxu0 0.0
    %2087 = vmatprep.subr.mxu0 0.0
    %2088 = vmatpush2.msra.mxu0 0.0
    %2089 = vmatprep.subr.mxu0 0.0
    %2090 = vmatpush2.msra.mxu0 0.0
    %2091 = vmatprep.subr.mxu0 0.0
    %2092 = vmatpush2.msra.mxu0 0.0
    %2093 = vmatprep.subr.mxu0 0.0
    %2094 = vmatpush2.msra.mxu0 0.0
    %2095 = vmatprep.subr.mxu0 0.0
    %2096 = vmatpush2.msra.mxu0 0.0
    %2097 = vmatprep.subr.mxu0 0.0
    %2098 = vmatpush2.msra.mxu0 0.0
    %2099 = vmatprep.subr.mxu0 0.0
    %2100 = vmatpush2.msra.mxu0 0.0
    %2101 = vmatprep.subr.mxu0 0.0
    %2102 = vmatpush2.msra.mxu0 0.0
    %2103 = vmatprep.subr.mxu0 0.0
    %2104 = vmatpush2.msra.mxu0 0.0
    %2105 = vmatprep.subr.mxu0 0.0
    %2106 = vmatpush2.msra.mxu0 0.0
    %2107 = vmatprep.subr.mxu0 0.0
    %2108 = vmatpush2.msra.mxu0 0.0
    %2109 = vmatprep.subr.mxu0 0.0
    %2110 = vmatpush2.msra.mxu0 0.0
    %2111 = vmatprep.subr.mxu0 0.0
    %2112 = vmatpush2.msra.mxu0 0.0
    %2113 = vmatprep.mubr.f32.mxu0 0.0
    %2114 = vmatmul.mubr.f32.gmra.mxu0 %v2044
    %v2115 = vpop.f32.mrf.mxu0
    %v2116 = vadd.f32 0.0, %v2115
    %v2117 = vpop.f32.mrf.mxu0
    %2118 = vmatprep.mubr.f32.mxu0 0.0
    %2119 = vmatmul.mubr.f32.gmra.mxu0 %v2047
    %v2120 = vpop.f32.mrf.mxu0
    %v2121 = vadd.f32 0.0, %v2120
    %v2122 = vpop.f32.mrf.mxu0
    %2123 = vdwg.mxu0
    %v2125 = vsel %vm1050, %v1357, 0
    %v2128 = vsel %vm1050, %v1362, 0
    %2130 = vmatprep.subr.mxu0 0.0
    %2131 = vmatpush1.msra.mxu0 0.0
    %2132 = vmatprep.subr.mxu0 0.0
    %2133 = vmatpush1.msra.mxu0 0.0
    %2134 = vmatprep.subr.mxu0 0.0
    %2135 = vmatpush1.msra.mxu0 0.0
    %2136 = vmatprep.subr.mxu0 0.0
    %2137 = vmatpush1.msra.mxu0 0.0
    %2138 = vmatprep.subr.mxu0 0.0
    %2139 = vmatpush1.msra.mxu0 0.0
    %2140 = vmatprep.subr.mxu0 0.0
    %2141 = vmatpush1.msra.mxu0 0.0
    %2142 = vmatprep.subr.mxu0 0.0
    %2143 = vmatpush1.msra.mxu0 0.0
    %2144 = vmatprep.subr.mxu0 0.0
    %2145 = vmatpush1.msra.mxu0 0.0
    %2146 = vmatprep.subr.mxu0 0.0
    %2147 = vmatpush1.msra.mxu0 0.0
    %2148 = vmatprep.subr.mxu0 0.0
    %2149 = vmatpush1.msra.mxu0 0.0
    %2150 = vmatprep.subr.mxu0 0.0
    %2151 = vmatpush1.msra.mxu0 0.0
    %2152 = vmatprep.subr.mxu0 0.0
    %2153 = vmatpush1.msra.mxu0 0.0
    %2154 = vmatprep.subr.mxu0 0.0
    %2155 = vmatpush1.msra.mxu0 0.0
    %2156 = vmatprep.subr.mxu0 0.0
    %2157 = vmatpush1.msra.mxu0 0.0
    %2158 = vmatprep.subr.mxu0 0.0
    %2159 = vmatpush1.msra.mxu0 0.0
    %2160 = vmatprep.subr.mxu0 0.0
    %2161 = vmatpush1.msra.mxu0 %v404
    %2162 = vmatprep.subr.mxu0 0.0
    %2163 = vmatpush2.msra.mxu0 0.0
    %2164 = vmatprep.subr.mxu0 0.0
    %2165 = vmatpush2.msra.mxu0 0.0
    %2166 = vmatprep.subr.mxu0 0.0
    %2167 = vmatpush2.msra.mxu0 0.0
    %2168 = vmatprep.subr.mxu0 0.0
    %2169 = vmatpush2.msra.mxu0 0.0
    %2170 = vmatprep.subr.mxu0 0.0
    %2171 = vmatpush2.msra.mxu0 0.0
    %2172 = vmatprep.subr.mxu0 0.0
    %2173 = vmatpush2.msra.mxu0 0.0
    %2174 = vmatprep.subr.mxu0 0.0
    %2175 = vmatpush2.msra.mxu0 0.0
    %2176 = vmatprep.subr.mxu0 0.0
    %2177 = vmatpush2.msra.mxu0 0.0
    %2178 = vmatprep.subr.mxu0 0.0
    %2179 = vmatpush2.msra.mxu0 0.0
    %2180 = vmatprep.subr.mxu0 0.0
    %2181 = vmatpush2.msra.mxu0 0.0
    %2182 = vmatprep.subr.mxu0 0.0
    %2183 = vmatpush2.msra.mxu0 0.0
    %2184 = vmatprep.subr.mxu0 0.0
    %2185 = vmatpush2.msra.mxu0 0.0
    %2186 = vmatprep.subr.mxu0 0.0
    %2187 = vmatpush2.msra.mxu0 0.0
    %2188 = vmatprep.subr.mxu0 0.0
    %2189 = vmatpush2.msra.mxu0 0.0
    %2190 = vmatprep.subr.mxu0 0.0
    %2191 = vmatpush2.msra.mxu0 0.0
    %2192 = vmatprep.subr.mxu0 0.0
    %2193 = vmatpush2.msra.mxu0 0.0
    %2194 = vmatprep.mubr.f32.mxu0 0.0
    %2195 = vmatmul.mubr.f32.gmra.mxu0 %v2125
    %v2196 = vpop.f32.mrf.mxu0
    %v2197 = vadd.f32 0.0, %v2196
    %v2198 = vpop.f32.mrf.mxu0
    %2199 = vmatprep.mubr.f32.mxu0 0.0
    %2200 = vmatmul.mubr.f32.gmra.mxu0 %v2128
    %v2201 = vpop.f32.mrf.mxu0
    %v2202 = vadd.f32 0.0, %v2201
    %v2203 = vpop.f32.mrf.mxu0
    %2204 = vdwg.mxu0
    %v2206 = vsel %vm1050, %v1470, 0
    %v2209 = vsel %vm1050, %v1475, 0
    %2211 = vmatprep.subr.mxu0 0.0
    %2212 = vmatpush1.msra.mxu0 0.0
    %2213 = vmatprep.subr.mxu0 0.0
    %2214 = vmatpush1.msra.mxu0 0.0
    %2215 = vmatprep.subr.mxu0 0.0
    %2216 = vmatpush1.msra.mxu0 0.0
    %2217 = vmatprep.subr.mxu0 0.0
    %2218 = vmatpush1.msra.mxu0 0.0
    %2219 = vmatprep.subr.mxu0 0.0
    %2220 = vmatpush1.msra.mxu0 0.0
    %2221 = vmatprep.subr.mxu0 0.0
    %2222 = vmatpush1.msra.mxu0 0.0
    %2223 = vmatprep.subr.mxu0 0.0
    %2224 = vmatpush1.msra.mxu0 0.0
    %2225 = vmatprep.subr.mxu0 0.0
    %2226 = vmatpush1.msra.mxu0 0.0
    %2227 = vmatprep.subr.mxu0 0.0
    %2228 = vmatpush1.msra.mxu0 0.0
    %2229 = vmatprep.subr.mxu0 0.0
    %2230 = vmatpush1.msra.mxu0 0.0
    %2231 = vmatprep.subr.mxu0 0.0
    %2232 = vmatpush1.msra.mxu0 0.0
    %2233 = vmatprep.subr.mxu0 0.0
    %2234 = vmatpush1.msra.mxu0 0.0
    %2235 = vmatprep.subr.mxu0 0.0
    %2236 = vmatpush1.msra.mxu0 0.0
    %2237 = vmatprep.subr.mxu0 0.0
    %2238 = vmatpush1.msra.mxu0 0.0
    %2239 = vmatprep.subr.mxu0 0.0
    %2240 = vmatpush1.msra.mxu0 0.0
    %2241 = vmatprep.subr.mxu0 0.0
    %2242 = vmatpush1.msra.mxu0 %v409
    %2243 = vmatprep.subr.mxu0 0.0
    %2244 = vmatpush2.msra.mxu0 0.0
    %2245 = vmatprep.subr.mxu0 0.0
    %2246 = vmatpush2.msra.mxu0 0.0
    %2247 = vmatprep.subr.mxu0 0.0
    %2248 = vmatpush2.msra.mxu0 0.0
    %2249 = vmatprep.subr.mxu0 0.0
    %2250 = vmatpush2.msra.mxu0 0.0
    %2251 = vmatprep.subr.mxu0 0.0
    %2252 = vmatpush2.msra.mxu0 0.0
    %2253 = vmatprep.subr.mxu0 0.0
    %2254 = vmatpush2.msra.mxu0 0.0
    %2255 = vmatprep.subr.mxu0 0.0
    %2256 = vmatpush2.msra.mxu0 0.0
    %2257 = vmatprep.subr.mxu0 0.0
    %2258 = vmatpush2.msra.mxu0 0.0
    %2259 = vmatprep.subr.mxu0 0.0
    %2260 = vmatpush2.msra.mxu0 0.0
    %2261 = vmatprep.subr.mxu0 0.0
    %2262 = vmatpush2.msra.mxu0 0.0
    %2263 = vmatprep.subr.mxu0 0.0
    %2264 = vmatpush2.msra.mxu0 0.0
    %2265 = vmatprep.subr.mxu0 0.0
    %2266 = vmatpush2.msra.mxu0 0.0
    %2267 = vmatprep.subr.mxu0 0.0
    %2268 = vmatpush2.msra.mxu0 0.0
    %2269 = vmatprep.subr.mxu0 0.0
    %2270 = vmatpush2.msra.mxu0 0.0
    %2271 = vmatprep.subr.mxu0 0.0
    %2272 = vmatpush2.msra.mxu0 0.0
    %2273 = vmatprep.subr.mxu0 0.0
    %2274 = vmatpush2.msra.mxu0 0.0
    %2275 = vmatprep.mubr.f32.mxu0 0.0
    %2276 = vmatmul.mubr.f32.gmra.mxu0 %v2206
    %v2277 = vpop.f32.mrf.mxu0
    %v2278 = vadd.f32 0.0, %v2277
    %v2279 = vpop.f32.mrf.mxu0
    %2280 = vmatprep.mubr.f32.mxu0 0.0
    %2281 = vmatmul.mubr.f32.gmra.mxu0 %v2209
    %v2282 = vpop.f32.mrf.mxu0
    %v2283 = vadd.f32 0.0, %v2282
    %v2284 = vpop.f32.mrf.mxu0
    %2285 = vdwg.mxu0
    %v2287 = vsel %vm1050, %v1583, 0
    %v2290 = vsel %vm1050, %v1588, 0
    %2292 = vmatprep.subr.mxu0 0.0
    %2293 = vmatpush1.msra.mxu0 0.0
    %2294 = vmatprep.subr.mxu0 0.0
    %2295 = vmatpush1.msra.mxu0 0.0
    %2296 = vmatprep.subr.mxu0 0.0
    %2297 = vmatpush1.msra.mxu0 0.0
    %2298 = vmatprep.subr.mxu0 0.0
    %2299 = vmatpush1.msra.mxu0 0.0
    %2300 = vmatprep.subr.mxu0 0.0
    %2301 = vmatpush1.msra.mxu0 0.0
    %2302 = vmatprep.subr.mxu0 0.0
    %2303 = vmatpush1.msra.mxu0 0.0
    %2304 = vmatprep.subr.mxu0 0.0
    %2305 = vmatpush1.msra.mxu0 0.0
    %2306 = vmatprep.subr.mxu0 0.0
    %2307 = vmatpush1.msra.mxu0 0.0
    %2308 = vmatprep.subr.mxu0 0.0
    %2309 = vmatpush1.msra.mxu0 0.0
    %2310 = vmatprep.subr.mxu0 0.0
    %2311 = vmatpush1.msra.mxu0 0.0
    %2312 = vmatprep.subr.mxu0 0.0
    %2313 = vmatpush1.msra.mxu0 0.0
    %2314 = vmatprep.subr.mxu0 0.0
    %2315 = vmatpush1.msra.mxu0 0.0
    %2316 = vmatprep.subr.mxu0 0.0
    %2317 = vmatpush1.msra.mxu0 0.0
    %2318 = vmatprep.subr.mxu0 0.0
    %2319 = vmatpush1.msra.mxu0 0.0
    %2320 = vmatprep.subr.mxu0 0.0
    %2321 = vmatpush1.msra.mxu0 0.0
    %2322 = vmatprep.subr.mxu0 0.0
    %2323 = vmatpush1.msra.mxu0 %v414
    %2324 = vmatprep.subr.mxu0 0.0
    %2325 = vmatpush2.msra.mxu0 0.0
    %2326 = vmatprep.subr.mxu0 0.0
    %2327 = vmatpush2.msra.mxu0 0.0
    %2328 = vmatprep.subr.mxu0 0.0
    %2329 = vmatpush2.msra.mxu0 0.0
    %2330 = vmatprep.subr.mxu0 0.0
    %2331 = vmatpush2.msra.mxu0 0.0
    %2332 = vmatprep.subr.mxu0 0.0
    %2333 = vmatpush2.msra.mxu0 0.0
    %2334 = vmatprep.subr.mxu0 0.0
    %2335 = vmatpush2.msra.mxu0 0.0
    %2336 = vmatprep.subr.mxu0 0.0
    %2337 = vmatpush2.msra.mxu0 0.0
    %2338 = vmatprep.subr.mxu0 0.0
    %2339 = vmatpush2.msra.mxu0 0.0
    %2340 = vmatprep.subr.mxu0 0.0
    %2341 = vmatpush2.msra.mxu0 0.0
    %2342 = vmatprep.subr.mxu0 0.0
    %2343 = vmatpush2.msra.mxu0 0.0
    %2344 = vmatprep.subr.mxu0 0.0
    %2345 = vmatpush2.msra.mxu0 0.0
    %2346 = vmatprep.subr.mxu0 0.0
    %2347 = vmatpush2.msra.mxu0 0.0
    %2348 = vmatprep.subr.mxu0 0.0
    %2349 = vmatpush2.msra.mxu0 0.0
    %2350 = vmatprep.subr.mxu0 0.0
    %2351 = vmatpush2.msra.mxu0 0.0
    %2352 = vmatprep.subr.mxu0 0.0
    %2353 = vmatpush2.msra.mxu0 0.0
    %2354 = vmatprep.subr.mxu0 0.0
    %2355 = vmatpush2.msra.mxu0 0.0
    %2356 = vmatprep.mubr.f32.mxu0 0.0
    %2357 = vmatmul.mubr.f32.gmra.mxu0 %v2287
    %v2358 = vpop.f32.mrf.mxu0
    %v2359 = vadd.f32 0.0, %v2358
    %v2360 = vpop.f32.mrf.mxu0
    %2361 = vmatprep.mubr.f32.mxu0 0.0
    %2362 = vmatmul.mubr.f32.gmra.mxu0 %v2290
    %v2363 = vpop.f32.mrf.mxu0
    %v2364 = vadd.f32 0.0, %v2363
    %v2365 = vpop.f32.mrf.mxu0
    %2366 = vdwg.mxu0
    %v2368 = vsel %vm1050, %v1696, 0
    %v2371 = vsel %vm1050, %v1701, 0
    %2373 = vmatprep.subr.mxu0 0.0
    %2374 = vmatpush1.msra.mxu0 0.0
    %2375 = vmatprep.subr.mxu0 0.0
    %2376 = vmatpush1.msra.mxu0 0.0
    %2377 = vmatprep.subr.mxu0 0.0
    %2378 = vmatpush1.msra.mxu0 0.0
    %2379 = vmatprep.subr.mxu0 0.0
    %2380 = vmatpush1.msra.mxu0 0.0
    %2381 = vmatprep.subr.mxu0 0.0
    %2382 = vmatpush1.msra.mxu0 0.0
    %2383 = vmatprep.subr.mxu0 0.0
    %2384 = vmatpush1.msra.mxu0 0.0
    %2385 = vmatprep.subr.mxu0 0.0
    %2386 = vmatpush1.msra.mxu0 0.0
    %2387 = vmatprep.subr.mxu0 0.0
    %2388 = vmatpush1.msra.mxu0 0.0
    %2389 = vmatprep.subr.mxu0 0.0
    %2390 = vmatpush1.msra.mxu0 0.0
    %2391 = vmatprep.subr.mxu0 0.0
    %2392 = vmatpush1.msra.mxu0 0.0
    %2393 = vmatprep.subr.mxu0 0.0
    %2394 = vmatpush1.msra.mxu0 0.0
    %2395 = vmatprep.subr.mxu0 0.0
    %2396 = vmatpush1.msra.mxu0 0.0
    %2397 = vmatprep.subr.mxu0 0.0
    %2398 = vmatpush1.msra.mxu0 0.0
    %2399 = vmatprep.subr.mxu0 0.0
    %2400 = vmatpush1.msra.mxu0 0.0
    %2401 = vmatprep.subr.mxu0 0.0
    %2402 = vmatpush1.msra.mxu0 0.0
    %2403 = vmatprep.subr.mxu0 0.0
    %2404 = vmatpush1.msra.mxu0 %v446
    %2405 = vmatprep.subr.mxu0 0.0
    %2406 = vmatpush2.msra.mxu0 0.0
    %2407 = vmatprep.subr.mxu0 0.0
    %2408 = vmatpush2.msra.mxu0 0.0
    %2409 = vmatprep.subr.mxu0 0.0
    %2410 = vmatpush2.msra.mxu0 0.0
    %2411 = vmatprep.subr.mxu0 0.0
    %2412 = vmatpush2.msra.mxu0 0.0
    %2413 = vmatprep.subr.mxu0 0.0
    %2414 = vmatpush2.msra.mxu0 0.0
    %2415 = vmatprep.subr.mxu0 0.0
    %2416 = vmatpush2.msra.mxu0 0.0
    %2417 = vmatprep.subr.mxu0 0.0
    %2418 = vmatpush2.msra.mxu0 0.0
    %2419 = vmatprep.subr.mxu0 0.0
    %2420 = vmatpush2.msra.mxu0 0.0
    %2421 = vmatprep.subr.mxu0 0.0
    %2422 = vmatpush2.msra.mxu0 0.0
    %2423 = vmatprep.subr.mxu0 0.0
    %2424 = vmatpush2.msra.mxu0 0.0
    %2425 = vmatprep.subr.mxu0 0.0
    %2426 = vmatpush2.msra.mxu0 0.0
    %2427 = vmatprep.subr.mxu0 0.0
    %2428 = vmatpush2.msra.mxu0 0.0
    %2429 = vmatprep.subr.mxu0 0.0
    %2430 = vmatpush2.msra.mxu0 0.0
    %2431 = vmatprep.subr.mxu0 0.0
    %2432 = vmatpush2.msra.mxu0 0.0
    %2433 = vmatprep.subr.mxu0 0.0
    %2434 = vmatpush2.msra.mxu0 0.0
    %2435 = vmatprep.subr.mxu0 0.0
    %2436 = vmatpush2.msra.mxu0 0.0
    %2437 = vmatprep.mubr.f32.mxu0 0.0
    %2438 = vmatmul.mubr.f32.gmra.mxu0 %v2368
    %v2439 = vpop.f32.mrf.mxu0
    %v2440 = vadd.f32 0.0, %v2439
    %v2441 = vpop.f32.mrf.mxu0
    %2442 = vmatprep.mubr.f32.mxu0 0.0
    %2443 = vmatmul.mubr.f32.gmra.mxu0 %v2371
    %v2444 = vpop.f32.mrf.mxu0
    %v2445 = vadd.f32 0.0, %v2444
    %v2446 = vpop.f32.mrf.mxu0
    %2447 = vdwg.mxu0
    %v2449 = vsel %vm1050, %v1809, 0
    %v2452 = vsel %vm1050, %v1814, 0
    %2454 = vmatprep.subr.mxu0 0.0
    %2455 = vmatpush1.msra.mxu0 0.0
    %2456 = vmatprep.subr.mxu0 0.0
    %2457 = vmatpush1.msra.mxu0 0.0
    %2458 = vmatprep.subr.mxu0 0.0
    %2459 = vmatpush1.msra.mxu0 0.0
    %2460 = vmatprep.subr.mxu0 0.0
    %2461 = vmatpush1.msra.mxu0 0.0
    %2462 = vmatprep.subr.mxu0 0.0
    %2463 = vmatpush1.msra.mxu0 0.0
    %2464 = vmatprep.subr.mxu0 0.0
    %2465 = vmatpush1.msra.mxu0 0.0
    %2466 = vmatprep.subr.mxu0 0.0
    %2467 = vmatpush1.msra.mxu0 0.0
    %2468 = vmatprep.subr.mxu0 0.0
    %2469 = vmatpush1.msra.mxu0 0.0
    %2470 = vmatprep.subr.mxu0 0.0
    %2471 = vmatpush1.msra.mxu0 0.0
    %2472 = vmatprep.subr.mxu0 0.0
    %2473 = vmatpush1.msra.mxu0 0.0
    %2474 = vmatprep.subr.mxu0 0.0
    %2475 = vmatpush1.msra.mxu0 0.0
    %2476 = vmatprep.subr.mxu0 0.0
    %2477 = vmatpush1.msra.mxu0 0.0
    %2478 = vmatprep.subr.mxu0 0.0
    %2479 = vmatpush1.msra.mxu0 0.0
    %2480 = vmatprep.subr.mxu0 0.0
    %2481 = vmatpush1.msra.mxu0 0.0
    %2482 = vmatprep.subr.mxu0 0.0
    %2483 = vmatpush1.msra.mxu0 0.0
    %2484 = vmatprep.subr.mxu0 0.0
    %2485 = vmatpush1.msra.mxu0 %v448
    %2486 = vmatprep.subr.mxu0 0.0
    %2487 = vmatpush2.msra.mxu0 0.0
    %2488 = vmatprep.subr.mxu0 0.0
    %2489 = vmatpush2.msra.mxu0 0.0
    %2490 = vmatprep.subr.mxu0 0.0
    %2491 = vmatpush2.msra.mxu0 0.0
    %2492 = vmatprep.subr.mxu0 0.0
    %2493 = vmatpush2.msra.mxu0 0.0
    %2494 = vmatprep.subr.mxu0 0.0
    %2495 = vmatpush2.msra.mxu0 0.0
    %2496 = vmatprep.subr.mxu0 0.0
    %2497 = vmatpush2.msra.mxu0 0.0
    %2498 = vmatprep.subr.mxu0 0.0
    %2499 = vmatpush2.msra.mxu0 0.0
    %2500 = vmatprep.subr.mxu0 0.0
    %2501 = vmatpush2.msra.mxu0 0.0
    %2502 = vmatprep.subr.mxu0 0.0
    %2503 = vmatpush2.msra.mxu0 0.0
    %2504 = vmatprep.subr.mxu0 0.0
    %2505 = vmatpush2.msra.mxu0 0.0
    %2506 = vmatprep.subr.mxu0 0.0
    %2507 = vmatpush2.msra.mxu0 0.0
    %2508 = vmatprep.subr.mxu0 0.0
    %2509 = vmatpush2.msra.mxu0 0.0
    %2510 = vmatprep.subr.mxu0 0.0
    %2511 = vmatpush2.msra.mxu0 0.0
    %2512 = vmatprep.subr.mxu0 0.0
    %2513 = vmatpush2.msra.mxu0 0.0
    %2514 = vmatprep.subr.mxu0 0.0
    %2515 = vmatpush2.msra.mxu0 0.0
    %2516 = vmatprep.subr.mxu0 0.0
    %2517 = vmatpush2.msra.mxu0 0.0
    %2518 = vmatprep.mubr.f32.mxu0 0.0
    %2519 = vmatmul.mubr.f32.gmra.mxu0 %v2449
    %v2520 = vpop.f32.mrf.mxu0
    %v2521 = vadd.f32 0.0, %v2520
    %v2522 = vpop.f32.mrf.mxu0
    %2523 = vmatprep.mubr.f32.mxu0 0.0
    %2524 = vmatmul.mubr.f32.gmra.mxu0 %v2452
    %v2525 = vpop.f32.mrf.mxu0
    %v2526 = vadd.f32 0.0, %v2525
    %v2527 = vpop.f32.mrf.mxu0
    %2528 = vdwg.mxu0
    %v2530 = vsel %vm1050, %v1922, 0
    %v2533 = vsel %vm1050, %v1927, 0
    %2535 = vmatprep.subr.mxu0 0.0
    %2536 = vmatpush1.msra.mxu0 0.0
    %2537 = vmatprep.subr.mxu0 0.0
    %2538 = vmatpush1.msra.mxu0 0.0
    %2539 = vmatprep.subr.mxu0 0.0
    %2540 = vmatpush1.msra.mxu0 0.0
    %2541 = vmatprep.subr.mxu0 0.0
    %2542 = vmatpush1.msra.mxu0 0.0
    %2543 = vmatprep.subr.mxu0 0.0
    %2544 = vmatpush1.msra.mxu0 0.0
    %2545 = vmatprep.subr.mxu0 0.0
    %2546 = vmatpush1.msra.mxu0 0.0
    %2547 = vmatprep.subr.mxu0 0.0
    %2548 = vmatpush1.msra.mxu0 0.0
    %2549 = vmatprep.subr.mxu0 0.0
    %2550 = vmatpush1.msra.mxu0 0.0
    %2551 = vmatprep.subr.mxu0 0.0
    %2552 = vmatpush1.msra.mxu0 0.0
    %2553 = vmatprep.subr.mxu0 0.0
    %2554 = vmatpush1.msra.mxu0 0.0
    %2555 = vmatprep.subr.mxu0 0.0
    %2556 = vmatpush1.msra.mxu0 0.0
    %2557 = vmatprep.subr.mxu0 0.0
    %2558 = vmatpush1.msra.mxu0 0.0
    %2559 = vmatprep.subr.mxu0 0.0
    %2560 = vmatpush1.msra.mxu0 0.0
    %2561 = vmatprep.subr.mxu0 0.0
    %2562 = vmatpush1.msra.mxu0 0.0
    %2563 = vmatprep.subr.mxu0 0.0
    %2564 = vmatpush1.msra.mxu0 0.0
    %2565 = vmatprep.subr.mxu0 0.0
    %2566 = vmatpush1.msra.mxu0 %v450
    %2567 = vmatprep.subr.mxu0 0.0
    %2568 = vmatpush2.msra.mxu0 0.0
    %2569 = vmatprep.subr.mxu0 0.0
    %2570 = vmatpush2.msra.mxu0 0.0
    %2571 = vmatprep.subr.mxu0 0.0
    %2572 = vmatpush2.msra.mxu0 0.0
    %2573 = vmatprep.subr.mxu0 0.0
    %2574 = vmatpush2.msra.mxu0 0.0
    %2575 = vmatprep.subr.mxu0 0.0
    %2576 = vmatpush2.msra.mxu0 0.0
    %2577 = vmatprep.subr.mxu0 0.0
    %2578 = vmatpush2.msra.mxu0 0.0
    %2579 = vmatprep.subr.mxu0 0.0
    %2580 = vmatpush2.msra.mxu0 0.0
    %2581 = vmatprep.subr.mxu0 0.0
    %2582 = vmatpush2.msra.mxu0 0.0
    %2583 = vmatprep.subr.mxu0 0.0
    %2584 = vmatpush2.msra.mxu0 0.0
    %2585 = vmatprep.subr.mxu0 0.0
    %2586 = vmatpush2.msra.mxu0 0.0
    %2587 = vmatprep.subr.mxu0 0.0
    %2588 = vmatpush2.msra.mxu0 0.0
    %2589 = vmatprep.subr.mxu0 0.0
    %2590 = vmatpush2.msra.mxu0 0.0
    %2591 = vmatprep.subr.mxu0 0.0
    %2592 = vmatpush2.msra.mxu0 0.0
    %2593 = vmatprep.subr.mxu0 0.0
    %2594 = vmatpush2.msra.mxu0 0.0
    %2595 = vmatprep.subr.mxu0 0.0
    %2596 = vmatpush2.msra.mxu0 0.0
    %2597 = vmatprep.subr.mxu0 0.0
    %2598 = vmatpush2.msra.mxu0 0.0
    %2599 = vmatprep.mubr.f32.mxu0 0.0
    %2600 = vmatmul.mubr.f32.gmra.mxu0 %v2530
    %v2601 = vpop.f32.mrf.mxu0
    %v2602 = vadd.f32 0.0, %v2601
    %v2603 = vpop.f32.mrf.mxu0
    %2604 = vmatprep.mubr.f32.mxu0 0.0
    %2605 = vmatmul.mubr.f32.gmra.mxu0 %v2533
    %v2606 = vpop.f32.mrf.mxu0
    %v2607 = vadd.f32 0.0, %v2606
    %v2608 = vpop.f32.mrf.mxu0
    %2609 = vdwg.mxu0
    %v2611 = vsel %vm1050, %v2035, 0
    %v2614 = vsel %vm1050, %v2040, 0
    %2616 = vmatprep.subr.mxu0 0.0
    %2617 = vmatpush1.msra.mxu0 0.0
    %2618 = vmatprep.subr.mxu0 0.0
    %2619 = vmatpush1.msra.mxu0 0.0
    %2620 = vmatprep.subr.mxu0 0.0
    %2621 = vmatpush1.msra.mxu0 0.0
    %2622 = vmatprep.subr.mxu0 0.0
    %2623 = vmatpush1.msra.mxu0 0.0
    %2624 = vmatprep.subr.mxu0 0.0
    %2625 = vmatpush1.msra.mxu0 0.0
    %2626 = vmatprep.subr.mxu0 0.0
    %2627 = vmatpush1.msra.mxu0 0.0
    %2628 = vmatprep.subr.mxu0 0.0
    %2629 = vmatpush1.msra.mxu0 0.0
    %2630 = vmatprep.subr.mxu0 0.0
    %2631 = vmatpush1.msra.mxu0 0.0
    %2632 = vmatprep.subr.mxu0 0.0
    %2633 = vmatpush1.msra.mxu0 0.0
    %2634 = vmatprep.subr.mxu0 0.0
    %2635 = vmatpush1.msra.mxu0 0.0
    %2636 = vmatprep.subr.mxu0 0.0
    %2637 = vmatpush1.msra.mxu0 0.0
    %2638 = vmatprep.subr.mxu0 0.0
    %2639 = vmatpush1.msra.mxu0 0.0
    %2640 = vmatprep.subr.mxu0 0.0
    %2641 = vmatpush1.msra.mxu0 0.0
    %2642 = vmatprep.subr.mxu0 0.0
    %2643 = vmatpush1.msra.mxu0 0.0
    %2644 = vmatprep.subr.mxu0 0.0
    %2645 = vmatpush1.msra.mxu0 0.0
    %2646 = vmatprep.subr.mxu0 0.0
    %2647 = vmatpush1.msra.mxu0 %v452
    %2648 = vmatprep.subr.mxu0 0.0
    %2649 = vmatpush2.msra.mxu0 0.0
    %2650 = vmatprep.subr.mxu0 0.0
    %2651 = vmatpush2.msra.mxu0 0.0
    %2652 = vmatprep.subr.mxu0 0.0
    %2653 = vmatpush2.msra.mxu0 0.0
    %2654 = vmatprep.subr.mxu0 0.0
    %2655 = vmatpush2.msra.mxu0 0.0
    %2656 = vmatprep.subr.mxu0 0.0
    %2657 = vmatpush2.msra.mxu0 0.0
    %2658 = vmatprep.subr.mxu0 0.0
    %2659 = vmatpush2.msra.mxu0 0.0
    %2660 = vmatprep.subr.mxu0 0.0
    %2661 = vmatpush2.msra.mxu0 0.0
    %2662 = vmatprep.subr.mxu0 0.0
    %2663 = vmatpush2.msra.mxu0 0.0
    %2664 = vmatprep.subr.mxu0 0.0
    %2665 = vmatpush2.msra.mxu0 0.0
    %2666 = vmatprep.subr.mxu0 0.0
    %2667 = vmatpush2.msra.mxu0 0.0
    %2668 = vmatprep.subr.mxu0 0.0
    %2669 = vmatpush2.msra.mxu0 0.0
    %2670 = vmatprep.subr.mxu0 0.0
    %2671 = vmatpush2.msra.mxu0 0.0
    %2672 = vmatprep.subr.mxu0 0.0
    %2673 = vmatpush2.msra.mxu0 0.0
    %2674 = vmatprep.subr.mxu0 0.0
    %2675 = vmatpush2.msra.mxu0 0.0
    %2676 = vmatprep.subr.mxu0 0.0
    %2677 = vmatpush2.msra.mxu0 0.0
    %2678 = vmatprep.subr.mxu0 0.0
    %2679 = vmatpush2.msra.mxu0 0.0
    %2680 = vmatprep.mubr.f32.mxu0 0.0
    %2681 = vmatmul.mubr.f32.gmra.mxu0 %v2611
    %v2682 = vpop.f32.mrf.mxu0
    %v2683 = vadd.f32 0.0, %v2682
    %v2684 = vpop.f32.mrf.mxu0
    %2685 = vmatprep.mubr.f32.mxu0 0.0
    %2686 = vmatmul.mubr.f32.gmra.mxu0 %v2614
    %v2687 = vpop.f32.mrf.mxu0
    %v2688 = vadd.f32 0.0, %v2687
    %v2689 = vpop.f32.mrf.mxu0
    %2690 = vdwg.mxu0
    %2699 = vrot.lane.b32.xlu0 %v2440, 16
    %v2700 = vpop.permute.xlu0 %2699
    %2701 = vrot.lane.b32.xlu0 %v2445, 16
    %v2702 = vpop.permute.xlu0 %2701
    %2703 = vrot.lane.b32.xlu0 %v2521, 16
    %v2704 = vpop.permute.xlu0 %2703
    %2705 = vrot.lane.b32.xlu0 %v2526, 16
    %v2706 = vpop.permute.xlu0 %2705
    %2707 = vrot.lane.b32.xlu0 %v2602, 16
    %v2708 = vpop.permute.xlu0 %2707
    %2709 = vrot.lane.b32.xlu0 %v2607, 16
    %v2710 = vpop.permute.xlu0 %2709
    %2711 = vrot.lane.b32.xlu0 %v2683, 16
    %v2712 = vpop.permute.xlu0 %2711
    %2713 = vrot.lane.b32.xlu0 %v2688, 16
    %v2714 = vpop.permute.xlu0 %2713
    %v2723 = vsel %vm457, %v2116, %v2700
    %v2724 = vsel %vm457, %v2121, %v2702
    %v2725 = vsel %vm457, %v2197, %v2704
    %v2726 = vsel %vm457, %v2202, %v2706
    %v2727 = vsel %vm457, %v2278, %v2708
    %v2728 = vsel %vm457, %v2283, %v2710
    %v2729 = vsel %vm457, %v2359, %v2712
    %v2730 = vsel %vm457, %v2364, %v2714
    %v2731 = vld [vmem:[%s6] sm:$0xff]
    %v2732 = vld [vmem:[%s6 + $0x8] sm:$0xff]
    %v2733 = vld [vmem:[%s6 + $0x10] sm:$0xff]
    %v2734 = vld [vmem:[%s6 + $0x18] sm:$0xff]
    %v2736 = vsel %vm117, %v2723, 0
    %v2739 = vsel %vm117, %v2724, 0
    %v2742 = vsel %vm117, %v2725, 0
    %v2745 = vsel %vm117, %v2726, 0
    %v2748 = vsel %vm117, %v2727, 0
    %v2751 = vsel %vm117, %v2728, 0
    %v2754 = vsel %vm117, %v2729, 0
    %v2757 = vsel %vm117, %v2730, 0
    %2759 = vmatprep.subr.mxu0 0.0
    %2760 = vmatpush1.msra.mxu0 0.0
    %2761 = vmatprep.subr.mxu0 0.0
    %2762 = vmatpush1.msra.mxu0 0.0
    %2763 = vmatprep.subr.mxu0 0.0
    %2764 = vmatpush1.msra.mxu0 0.0
    %2765 = vmatprep.subr.mxu0 0.0
    %2766 = vmatpush1.msra.mxu0 0.0
    %2767 = vmatprep.subr.mxu0 0.0
    %2768 = vmatpush1.msra.mxu0 0.0
    %2769 = vmatprep.subr.mxu0 0.0
    %2770 = vmatpush1.msra.mxu0 0.0
    %2771 = vmatprep.subr.mxu0 0.0
    %2772 = vmatpush1.msra.mxu0 0.0
    %2773 = vmatprep.subr.mxu0 0.0
    %2774 = vmatpush1.msra.mxu0 0.0
    %2775 = vmatprep.subr.mxu0 0.0
    %2776 = vmatpush1.msra.mxu0 0.0
    %2777 = vmatprep.subr.mxu0 0.0
    %2778 = vmatpush1.msra.mxu0 0.0
    %2779 = vmatprep.subr.mxu0 0.0
    %2780 = vmatpush1.msra.mxu0 0.0
    %2781 = vmatprep.subr.mxu0 0.0
    %2782 = vmatpush1.msra.mxu0 0.0
    %2783 = vmatprep.subr.mxu0 0.0
    %2784 = vmatpush1.msra.mxu0 %v2734
    %2785 = vmatprep.subr.mxu0 0.0
    %2786 = vmatpush1.msra.mxu0 %v2733
    %2787 = vmatprep.subr.mxu0 0.0
    %2788 = vmatpush1.msra.mxu0 %v2732
    %2789 = vmatprep.subr.mxu0 0.0
    %2790 = vmatpush1.msra.mxu0 %v2731
    %2791 = vmatprep.subr.mxu0 0.0
    %2792 = vmatpush2.msra.mxu0 0.0
    %2793 = vmatprep.subr.mxu0 0.0
    %2794 = vmatpush2.msra.mxu0 0.0
    %2795 = vmatprep.subr.mxu0 0.0
    %2796 = vmatpush2.msra.mxu0 0.0
    %2797 = vmatprep.subr.mxu0 0.0
    %2798 = vmatpush2.msra.mxu0 0.0
    %2799 = vmatprep.subr.mxu0 0.0
    %2800 = vmatpush2.msra.mxu0 0.0
    %2801 = vmatprep.subr.mxu0 0.0
    %2802 = vmatpush2.msra.mxu0 0.0
    %2803 = vmatprep.subr.mxu0 0.0
    %2804 = vmatpush2.msra.mxu0 0.0
    %2805 = vmatprep.subr.mxu0 0.0
    %2806 = vmatpush2.msra.mxu0 0.0
    %2807 = vmatprep.subr.mxu0 0.0
    %2808 = vmatpush2.msra.mxu0 0.0
    %2809 = vmatprep.subr.mxu0 0.0
    %2810 = vmatpush2.msra.mxu0 0.0
    %2811 = vmatprep.subr.mxu0 0.0
    %2812 = vmatpush2.msra.mxu0 0.0
    %2813 = vmatprep.subr.mxu0 0.0
    %2814 = vmatpush2.msra.mxu0 0.0
    %2815 = vmatprep.subr.mxu0 0.0
    %2816 = vmatpush2.msra.mxu0 0.0
    %2817 = vmatprep.subr.mxu0 0.0
    %2818 = vmatpush2.msra.mxu0 0.0
    %2819 = vmatprep.subr.mxu0 0.0
    %2820 = vmatpush2.msra.mxu0 0.0
    %2821 = vmatprep.subr.mxu0 0.0
    %2822 = vmatpush2.msra.mxu0 0.0
    %2823 = vmatprep.mubr.f32.mxu0 0.0
    %2824 = vmatmul.mubr.f32.gmra.mxu0 %v2736
    %v2825 = vpop.f32.mrf.mxu0
    %v2826 = vadd.f32 0.0, %v2825
    %v2827 = vpop.f32.mrf.mxu0
    %2828 = vmatprep.mubr.f32.mxu0 0.0
    %2829 = vmatmul.mubr.f32.gmra.mxu0 %v2739
    %v2830 = vpop.f32.mrf.mxu0
    %v2831 = vadd.f32 0.0, %v2830
    %v2832 = vpop.f32.mrf.mxu0
    %2833 = vmatprep.mubr.f32.mxu0 0.0
    %2834 = vmatmul.mubr.f32.gmra.mxu0 %v2742
    %v2835 = vpop.f32.mrf.mxu0
    %v2836 = vadd.f32 0.0, %v2835
    %v2837 = vpop.f32.mrf.mxu0
    %2838 = vmatprep.mubr.f32.mxu0 0.0
    %2839 = vmatmul.mubr.f32.gmra.mxu0 %v2745
    %v2840 = vpop.f32.mrf.mxu0
    %v2841 = vadd.f32 0.0, %v2840
    %v2842 = vpop.f32.mrf.mxu0
    %2843 = vmatprep.mubr.f32.mxu0 0.0
    %2844 = vmatmul.mubr.f32.gmra.mxu0 %v2748
    %v2845 = vpop.f32.mrf.mxu0
    %v2846 = vadd.f32 0.0, %v2845
    %v2847 = vpop.f32.mrf.mxu0
    %2848 = vmatprep.mubr.f32.mxu0 0.0
    %2849 = vmatmul.mubr.f32.gmra.mxu0 %v2751
    %v2850 = vpop.f32.mrf.mxu0
    %v2851 = vadd.f32 0.0, %v2850
    %v2852 = vpop.f32.mrf.mxu0
    %2853 = vmatprep.mubr.f32.mxu0 0.0
    %2854 = vmatmul.mubr.f32.gmra.mxu0 %v2754
    %v2855 = vpop.f32.mrf.mxu0
    %v2856 = vadd.f32 0.0, %v2855
    %v2857 = vpop.f32.mrf.mxu0
    %2858 = vmatprep.mubr.f32.mxu0 0.0
    %2859 = vmatmul.mubr.f32.gmra.mxu0 %v2757
    %v2860 = vpop.f32.mrf.mxu0
    %v2861 = vadd.f32 0.0, %v2860
    %v2862 = vpop.f32.mrf.mxu0
    %2863 = vdwg.mxu0
    %v2864 = vsel %vm457, %v2826, 0.0
    %2865 = vadd.xlane.f32.xlu0 %v2864
    %v2866 = vpop.xlane.xlu0 %2865
    %v2867 = vsel %vm457, %v2831, 0.0
    %2868 = vadd.xlane.f32.xlu0 %v2867
    %v2869 = vpop.xlane.xlu0 %2868
    %v2870 = vsel %vm457, %v2836, 0.0
    %2871 = vadd.xlane.f32.xlu0 %v2870
    %v2872 = vpop.xlane.xlu0 %2871
    %v2873 = vsel %vm457, %v2841, 0.0
    %2874 = vadd.xlane.f32.xlu0 %v2873
    %v2875 = vpop.xlane.xlu0 %2874
    %v2876 = vsel %vm457, %v2846, 0.0
    %2877 = vadd.xlane.f32.xlu0 %v2876
    %v2878 = vpop.xlane.xlu0 %2877
    %v2879 = vsel %vm457, %v2851, 0.0
    %2880 = vadd.xlane.f32.xlu0 %v2879
    %v2881 = vpop.xlane.xlu0 %2880
    %v2882 = vsel %vm457, %v2856, 0.0
    %2883 = vadd.xlane.f32.xlu0 %v2882
    %v2884 = vpop.xlane.xlu0 %2883
    %v2885 = vsel %vm457, %v2861, 0.0
    %2886 = vadd.xlane.f32.xlu0 %v2885
    %v2887 = vpop.xlane.xlu0 %2886
    %v2888 = vrcp.pop 16.0
    %v2889 = vmul.f32 %v2866, %v2888
    %v2890 = vmul.f32 %v2869, %v2888
    %v2891 = vmul.f32 %v2872, %v2888
    %v2892 = vmul.f32 %v2875, %v2888
    %v2893 = vmul.f32 %v2878, %v2888
    %v2894 = vmul.f32 %v2881, %v2888
    %v2895 = vmul.f32 %v2884, %v2888
    %v2896 = vmul.f32 %v2887, %v2888
    %v2897 = vsub.f32 %v2826, %v2889
    %v2898 = vsub.f32 %v2831, %v2890
    %v2899 = vsub.f32 %v2836, %v2891
    %v2900 = vsub.f32 %v2841, %v2892
    %v2901 = vsub.f32 %v2846, %v2893
    %v2902 = vsub.f32 %v2851, %v2894
    %v2903 = vsub.f32 %v2856, %v2895
    %v2904 = vsub.f32 %v2861, %v2896
    %v2905 = vmul.f32 %v2897, %v2897
    %v2906 = vmul.f32 %v2898, %v2898
    %v2907 = vmul.f32 %v2899, %v2899
    %v2908 = vmul.f32 %v2900, %v2900
    %v2909 = vmul.f32 %v2901, %v2901
    %v2910 = vmul.f32 %v2902, %v2902
    %v2911 = vmul.f32 %v2903, %v2903
    %v2912 = vmul.f32 %v2904, %v2904
    %v2913 = vsel %vm457, %v2905, 0.0
    %2914 = vadd.xlane.f32.xlu0 %v2913
    %v2915 = vpop.xlane.xlu0 %2914
    %v2916 = vsel %vm457, %v2906, 0.0
    %2917 = vadd.xlane.f32.xlu0 %v2916
    %v2918 = vpop.xlane.xlu0 %2917
    %v2919 = vsel %vm457, %v2907, 0.0
    %2920 = vadd.xlane.f32.xlu0 %v2919
    %v2921 = vpop.xlane.xlu0 %2920
    %v2922 = vsel %vm457, %v2908, 0.0
    %2923 = vadd.xlane.f32.xlu0 %v2922
    %v2924 = vpop.xlane.xlu0 %2923
    %v2925 = vsel %vm457, %v2909, 0.0
    %2926 = vadd.xlane.f32.xlu0 %v2925
    %v2927 = vpop.xlane.xlu0 %2926
    %v2928 = vsel %vm457, %v2910, 0.0
    %2929 = vadd.xlane.f32.xlu0 %v2928
    %v2930 = vpop.xlane.xlu0 %2929
    %v2931 = vsel %vm457, %v2911, 0.0
    %2932 = vadd.xlane.f32.xlu0 %v2931
    %v2933 = vpop.xlane.xlu0 %2932
    %v2934 = vsel %vm457, %v2912, 0.0
    %2935 = vadd.xlane.f32.xlu0 %v2934
    %v2936 = vpop.xlane.xlu0 %2935
    %v2937 = vmul.f32 %v2915, %v2888
    %v2938 = vmul.f32 %v2918, %v2888
    %v2939 = vmul.f32 %v2921, %v2888
    %v2940 = vmul.f32 %v2924, %v2888
    %v2941 = vmul.f32 %v2927, %v2888
    %v2942 = vmul.f32 %v2930, %v2888
    %v2943 = vmul.f32 %v2933, %v2888
    %v2944 = vmul.f32 %v2936, %v2888
    %v2945 = vadd.f32 %v2937, 1e-06
    %v2946 = vadd.f32 %v2938, 1e-06
    %v2947 = vadd.f32 %v2939, 1e-06
    %v2948 = vadd.f32 %v2940, 1e-06
    %v2949 = vadd.f32 %v2941, 1e-06
    %v2950 = vadd.f32 %v2942, 1e-06
    %v2951 = vadd.f32 %v2943, 1e-06
    %v2952 = vadd.f32 %v2944, 1e-06
    %v2953 = vrsqrt.pop %v2945
    %v2954 = vrsqrt.pop %v2946
    %v2955 = vrsqrt.pop %v2947
    %v2956 = vrsqrt.pop %v2948
    %v2957 = vrsqrt.pop %v2949
    %v2958 = vrsqrt.pop %v2950
    %v2959 = vrsqrt.pop %v2951
    %v2960 = vrsqrt.pop %v2952
    %v2961 = vmul.f32 %v2897, %v2953
    %v2962 = vmul.f32 %v2898, %v2954
    %v2963 = vmul.f32 %v2899, %v2955
    %v2964 = vmul.f32 %v2900, %v2956
    %v2965 = vmul.f32 %v2901, %v2957
    %v2966 = vmul.f32 %v2902, %v2958
    %v2967 = vmul.f32 %v2903, %v2959
    %v2968 = vmul.f32 %v2904, %v2960
    %v2969 = vld [vmem:[%s7] sm:$0x1]
    %v2971 = vlaneseq
    %v2972 = vshrl.u32 %v2971, 7
    %v2973 = vsub.s32 0, %v2972
    %v2974 = vrot.slane %v2969, %v2973
    %v2976 = vmul.f32 %v2961, %v2974
    %v2977 = vmul.f32 %v2962, %v2974
    %v2978 = vmul.f32 %v2963, %v2974
    %v2979 = vmul.f32 %v2964, %v2974
    %v2980 = vmul.f32 %v2965, %v2974
    %v2981 = vmul.f32 %v2966, %v2974
    %v2982 = vmul.f32 %v2967, %v2974
    %v2983 = vmul.f32 %v2968, %v2974
    %v2984 = vld [vmem:[%s8] sm:$0x1]
    %v2986 = vlaneseq
    %v2987 = vshrl.u32 %v2986, 7
    %v2988 = vsub.s32 0, %v2987
    %v2989 = vrot.slane %v2984, %v2988
    %v2991 = vadd.f32 %v2976, %v2989
    %v2992 = vadd.f32 %v2977, %v2989
    %v2993 = vadd.f32 %v2978, %v2989
    %v2994 = vadd.f32 %v2979, %v2989
    %v2995 = vadd.f32 %v2980, %v2989
    %v2996 = vadd.f32 %v2981, %v2989
    %v2997 = vadd.f32 %v2982, %v2989
    %v2998 = vadd.f32 %v2983, %v2989
    %2999 = vst.msk [vmem:[#allocation2] sm:$0xff] %vm457, %v2991
    %3000 = vst.msk [vmem:[#allocation2 + $0x8] sm:$0xff] %vm457, %v2992
    %3001 = vst.msk [vmem:[#allocation2 + $0x10] sm:$0xff] %vm457, %v2993
    %3002 = vst.msk [vmem:[#allocation2 + $0x18] sm:$0xff] %vm457, %v2994
    %3003 = vst.msk [vmem:[#allocation2 + $0x20] sm:$0xff] %vm457, %v2995
    %3004 = vst.msk [vmem:[#allocation2 + $0x28] sm:$0xff] %vm457, %v2996
    %3005 = vst.msk [vmem:[#allocation2 + $0x30] sm:$0xff] %vm457, %v2997
    %3006 = vst.msk [vmem:[#allocation2 + $0x38] sm:$0xff] %vm457, %v2998
    %v3007 = vld [vmem:[#allocation2] sm:$0x1]
    %v3008 = vld [vmem:[#allocation2 + $0x10] sm:$0x1]
    %v3009 = vld [vmem:[#allocation2 + $0x20] sm:$0x1]
    %v3010 = vld [vmem:[#allocation2 + $0x30] sm:$0x1]
    %v3015 = vrot.slane %v3008, 7
    %vm3016 = vcmask 1041409
    %v3017 = vsel %vm3016, %v3015, %v3007
    %vm3018 = vcmask 1045509
    %v3019 = vsel %vm3018, %v3015, %v3017
    %v3020 = vrot.slane %v3009, 6
    %vm3021 = vcmask 1042434
    %v3022 = vsel %vm3021, %v3020, %v3019
    %vm3023 = vcmask 1046534
    %v3024 = vsel %vm3023, %v3020, %v3022
    %v3025 = vrot.slane %v3010, 5
    %vm3026 = vcmask 1043459
    %v3027 = vsel %vm3026, %v3025, %v3024
    %vm3028 = vcmask 1047559
    %v3029 = vsel %vm3028, %v3025, %v3027
    %vm3031 = vcmask 125952
    %3032 = vst.msk [vmem:[#allocation12] sm:$0xf] %vm3031, %v3029
    %v3033 = vld [vmem:[#allocation2 + $0x1] sm:$0x1]
    %v3034 = vld [vmem:[#allocation2 + $0x11] sm:$0x1]
    %v3035 = vld [vmem:[#allocation2 + $0x21] sm:$0x1]
    %v3036 = vld [vmem:[#allocation2 + $0x31] sm:$0x1]
    %v3041 = vrot.slane %v3034, 7
    %v3042 = vsel %vm3016, %v3041, %v3033
    %v3043 = vsel %vm3018, %v3041, %v3042
    %v3044 = vrot.slane %v3035, 6
    %v3045 = vsel %vm3021, %v3044, %v3043
    %v3046 = vsel %vm3023, %v3044, %v3045
    %v3047 = vrot.slane %v3036, 5
    %v3048 = vsel %vm3026, %v3047, %v3046
    %v3049 = vsel %vm3028, %v3047, %v3048
    %3050 = vrot.lane.b32.xlu0 %v3049, 16
    %v3051 = vpop.permute.xlu0 %3050
    %vm3053 = vcmask 257152
    %3054 = vst.msk [vmem:[#allocation12] sm:$0xf] %vm3053, %v3051
    %v3055 = vld [vmem:[#allocation2 + $0x2] sm:$0x1]
    %v3056 = vld [vmem:[#allocation2 + $0x12] sm:$0x1]
    %v3057 = vld [vmem:[#allocation2 + $0x22] sm:$0x1]
    %v3058 = vld [vmem:[#allocation2 + $0x32] sm:$0x1]
    %v3063 = vrot.slane %v3056, 7
    %v3064 = vsel %vm3016, %v3063, %v3055
    %v3065 = vsel %vm3018, %v3063, %v3064
    %v3066 = vrot.slane %v3057, 6
    %v3067 = vsel %vm3021, %v3066, %v3065
    %v3068 = vsel %vm3023, %v3066, %v3067
    %v3069 = vrot.slane %v3058, 5
    %v3070 = vsel %vm3026, %v3069, %v3068
    %v3071 = vsel %vm3028, %v3069, %v3070
    %3072 = vrot.lane.b32.xlu0 %v3071, 32
    %v3073 = vpop.permute.xlu0 %3072
    %vm3075 = vcmask 388352
    %3076 = vst.msk [vmem:[#allocation12] sm:$0xf] %vm3075, %v3073
    %v3077 = vld [vmem:[#allocation2 + $0x3] sm:$0x1]
    %v3078 = vld [vmem:[#allocation2 + $0x13] sm:$0x1]
    %v3079 = vld [vmem:[#allocation2 + $0x23] sm:$0x1]
    %v3080 = vld [vmem:[#allocation2 + $0x33] sm:$0x1]
    %v3085 = vrot.slane %v3078, 7
    %v3086 = vsel %vm3016, %v3085, %v3077
    %v3087 = vsel %vm3018, %v3085, %v3086
    %v3088 = vrot.slane %v3079, 6
    %v3089 = vsel %vm3021, %v3088, %v3087
    %v3090 = vsel %vm3023, %v3088, %v3089
    %v3091 = vrot.slane %v3080, 5
    %v3092 = vsel %vm3026, %v3091, %v3090
    %v3093 = vsel %vm3028, %v3091, %v3092
    %3094 = vrot.lane.b32.xlu0 %v3093, 48
    %v3095 = vpop.permute.xlu0 %3094
    %vm3097 = vcmask 519552
    %3098 = vst.msk [vmem:[#allocation12] sm:$0xf] %vm3097, %v3095
    %v3099 = vld [vmem:[#allocation2 + $0x4] sm:$0x1]
    %v3100 = vld [vmem:[#allocation2 + $0x14] sm:$0x1]
    %v3101 = vld [vmem:[#allocation2 + $0x24] sm:$0x1]
    %v3102 = vld [vmem:[#allocation2 + $0x34] sm:$0x1]
    %v3107 = vrot.slane %v3100, 7
    %v3108 = vsel %vm3016, %v3107, %v3099
    %v3109 = vsel %vm3018, %v3107, %v3108
    %v3110 = vrot.slane %v3101, 6
    %v3111 = vsel %vm3021, %v3110, %v3109
    %v3112 = vsel %vm3023, %v3110, %v3111
    %v3113 = vrot.slane %v3102, 5
    %v3114 = vsel %vm3026, %v3113, %v3112
    %v3115 = vsel %vm3028, %v3113, %v3114
    %3116 = vrot.lane.b32.xlu0 %v3115, 64
    %v3117 = vpop.permute.xlu0 %3116
    %vm3119 = vcmask 650752
    %3120 = vst.msk [vmem:[#allocation12] sm:$0xf] %vm3119, %v3117
    %v3121 = vld [vmem:[#allocation2 + $0x5] sm:$0x1]
    %v3122 = vld [vmem:[#allocation2 + $0x15] sm:$0x1]
    %v3123 = vld [vmem:[#allocation2 + $0x25] sm:$0x1]
    %v3124 = vld [vmem:[#allocation2 + $0x35] sm:$0x1]
    %v3129 = vrot.slane %v3122, 7
    %v3130 = vsel %vm3016, %v3129, %v3121
    %v3131 = vsel %vm3018, %v3129, %v3130
    %v3132 = vrot.slane %v3123, 6
    %v3133 = vsel %vm3021, %v3132, %v3131
    %v3134 = vsel %vm3023, %v3132, %v3133
    %v3135 = vrot.slane %v3124, 5
    %v3136 = vsel %vm3026, %v3135, %v3134
    %v3137 = vsel %vm3028, %v3135, %v3136
    %3138 = vrot.lane.b32.xlu0 %v3137, 80
    %v3139 = vpop.permute.xlu0 %3138
    %vm3141 = vcmask 781952
    %3142 = vst.msk [vmem:[#allocation12] sm:$0xf] %vm3141, %v3139
    %v3143 = vld [vmem:[#allocation2 + $0x6] sm:$0x1]
    %v3144 = vld [vmem:[#allocation2 + $0x16] sm:$0x1]
    %v3145 = vld [vmem:[#allocation2 + $0x26] sm:$0x1]
    %v3146 = vld [vmem:[#allocation2 + $0x36] sm:$0x1]
    %v3151 = vrot.slane %v3144, 7
    %v3152 = vsel %vm3016, %v3151, %v3143
    %v3153 = vsel %vm3018, %v3151, %v3152
    %v3154 = vrot.slane %v3145, 6
    %v3155 = vsel %vm3021, %v3154, %v3153
    %v3156 = vsel %vm3023, %v3154, %v3155
    %v3157 = vrot.slane %v3146, 5
    %v3158 = vsel %vm3026, %v3157, %v3156
    %v3159 = vsel %vm3028, %v3157, %v3158
    %3160 = vrot.lane.b32.xlu0 %v3159, 96
    %v3161 = vpop.permute.xlu0 %3160
    %vm3163 = vcmask 913152
    %3164 = vst.msk [vmem:[#allocation12] sm:$0xf] %vm3163, %v3161
    %v3165 = vld [vmem:[#allocation2 + $0x7] sm:$0x1]
    %v3166 = vld [vmem:[#allocation2 + $0x17] sm:$0x1]
    %v3167 = vld [vmem:[#allocation2 + $0x27] sm:$0x1]
    %v3168 = vld [vmem:[#allocation2 + $0x37] sm:$0x1]
    %v3173 = vrot.slane %v3166, 7
    %v3174 = vsel %vm3016, %v3173, %v3165
    %v3175 = vsel %vm3018, %v3173, %v3174
    %v3176 = vrot.slane %v3167, 6
    %v3177 = vsel %vm3021, %v3176, %v3175
    %v3178 = vsel %vm3023, %v3176, %v3177
    %v3179 = vrot.slane %v3168, 5
    %v3180 = vsel %vm3026, %v3179, %v3178
    %v3181 = vsel %vm3028, %v3179, %v3180
    %3182 = vrot.lane.b32.xlu0 %v3181, 112
    %v3183 = vpop.permute.xlu0 %3182
    %vm3185 = vcmask 1044352
    %3186 = vst.msk [vmem:[#allocation12] sm:$0xf] %vm3185, %v3183
    %v3187 = vld [vmem:[#allocation2 + $0x8] sm:$0x1]
    %v3188 = vld [vmem:[#allocation2 + $0x18] sm:$0x1]
    %v3189 = vld [vmem:[#allocation2 + $0x28] sm:$0x1]
    %v3190 = vld [vmem:[#allocation2 + $0x38] sm:$0x1]
    %v3195 = vrot.slane %v3188, 7
    %v3196 = vsel %vm3016, %v3195, %v3187
    %v3197 = vsel %vm3018, %v3195, %v3196
    %v3198 = vrot.slane %v3189, 6
    %v3199 = vsel %vm3021, %v3198, %v3197
    %v3200 = vsel %vm3023, %v3198, %v3199
    %v3201 = vrot.slane %v3190, 5
    %v3202 = vsel %vm3026, %v3201, %v3200
    %v3203 = vsel %vm3028, %v3201, %v3202
    %3205 = vst.msk [vmem:[#allocation12 + $0x4] sm:$0xf] %vm3031, %v3203
    %v3206 = vld [vmem:[#allocation2 + $0x9] sm:$0x1]
    %v3207 = vld [vmem:[#allocation2 + $0x19] sm:$0x1]
    %v3208 = vld [vmem:[#allocation2 + $0x29] sm:$0x1]
    %v3209 = vld [vmem:[#allocation2 + $0x39] sm:$0x1]
    %v3214 = vrot.slane %v3207, 7
    %v3215 = vsel %vm3016, %v3214, %v3206
    %v3216 = vsel %vm3018, %v3214, %v3215
    %v3217 = vrot.slane %v3208, 6
    %v3218 = vsel %vm3021, %v3217, %v3216
    %v3219 = vsel %vm3023, %v3217, %v3218
    %v3220 = vrot.slane %v3209, 5
    %v3221 = vsel %vm3026, %v3220, %v3219
    %v3222 = vsel %vm3028, %v3220, %v3221
    %3223 = vrot.lane.b32.xlu0 %v3222, 16
    %v3224 = vpop.permute.xlu0 %3223
    %3226 = vst.msk [vmem:[#allocation12 + $0x4] sm:$0xf] %vm3053, %v3224
    %v3227 = vld [vmem:[#allocation2 + $0xa] sm:$0x1]
    %v3228 = vld [vmem:[#allocation2 + $0x1a] sm:$0x1]
    %v3229 = vld [vmem:[#allocation2 + $0x2a] sm:$0x1]
    %v3230 = vld [vmem:[#allocation2 + $0x3a] sm:$0x1]
    %v3235 = vrot.slane %v3228, 7
    %v3236 = vsel %vm3016, %v3235, %v3227
    %v3237 = vsel %vm3018, %v3235, %v3236
    %v3238 = vrot.slane %v3229, 6
    %v3239 = vsel %vm3021, %v3238, %v3237
    %v3240 = vsel %vm3023, %v3238, %v3239
    %v3241 = vrot.slane %v3230, 5
    %v3242 = vsel %vm3026, %v3241, %v3240
    %v3243 = vsel %vm3028, %v3241, %v3242
    %3244 = vrot.lane.b32.xlu0 %v3243, 32
    %v3245 = vpop.permute.xlu0 %3244
    %3247 = vst.msk [vmem:[#allocation12 + $0x4] sm:$0xf] %vm3075, %v3245
    %v3248 = vld [vmem:[#allocation2 + $0xb] sm:$0x1]
    %v3249 = vld [vmem:[#allocation2 + $0x1b] sm:$0x1]
    %v3250 = vld [vmem:[#allocation2 + $0x2b] sm:$0x1]
    %v3251 = vld [vmem:[#allocation2 + $0x3b] sm:$0x1]
    %v3256 = vrot.slane %v3249, 7
    %v3257 = vsel %vm3016, %v3256, %v3248
    %v3258 = vsel %vm3018, %v3256, %v3257
    %v3259 = vrot.slane %v3250, 6
    %v3260 = vsel %vm3021, %v3259, %v3258
    %v3261 = vsel %vm3023, %v3259, %v3260
    %v3262 = vrot.slane %v3251, 5
    %v3263 = vsel %vm3026, %v3262, %v3261
    %v3264 = vsel %vm3028, %v3262, %v3263
    %3265 = vrot.lane.b32.xlu0 %v3264, 48
    %v3266 = vpop.permute.xlu0 %3265
    %3268 = vst.msk [vmem:[#allocation12 + $0x4] sm:$0xf] %vm3097, %v3266
    %v3269 = vld [vmem:[#allocation2 + $0xc] sm:$0x1]
    %v3270 = vld [vmem:[#allocation2 + $0x1c] sm:$0x1]
    %v3271 = vld [vmem:[#allocation2 + $0x2c] sm:$0x1]
    %v3272 = vld [vmem:[#allocation2 + $0x3c] sm:$0x1]
    %v3277 = vrot.slane %v3270, 7
    %v3278 = vsel %vm3016, %v3277, %v3269
    %v3279 = vsel %vm3018, %v3277, %v3278
    %v3280 = vrot.slane %v3271, 6
    %v3281 = vsel %vm3021, %v3280, %v3279
    %v3282 = vsel %vm3023, %v3280, %v3281
    %v3283 = vrot.slane %v3272, 5
    %v3284 = vsel %vm3026, %v3283, %v3282
    %v3285 = vsel %vm3028, %v3283, %v3284
    %3286 = vrot.lane.b32.xlu0 %v3285, 64
    %v3287 = vpop.permute.xlu0 %3286
    %3289 = vst.msk [vmem:[#allocation12 + $0x4] sm:$0xf] %vm3119, %v3287
    %v3290 = vld [vmem:[#allocation2 + $0xd] sm:$0x1]
    %v3291 = vld [vmem:[#allocation2 + $0x1d] sm:$0x1]
    %v3292 = vld [vmem:[#allocation2 + $0x2d] sm:$0x1]
    %v3293 = vld [vmem:[#allocation2 + $0x3d] sm:$0x1]
    %v3298 = vrot.slane %v3291, 7
    %v3299 = vsel %vm3016, %v3298, %v3290
    %v3300 = vsel %vm3018, %v3298, %v3299
    %v3301 = vrot.slane %v3292, 6
    %v3302 = vsel %vm3021, %v3301, %v3300
    %v3303 = vsel %vm3023, %v3301, %v3302
    %v3304 = vrot.slane %v3293, 5
    %v3305 = vsel %vm3026, %v3304, %v3303
    %v3306 = vsel %vm3028, %v3304, %v3305
    %3307 = vrot.lane.b32.xlu0 %v3306, 80
    %v3308 = vpop.permute.xlu0 %3307
    %3310 = vst.msk [vmem:[#allocation12 + $0x4] sm:$0xf] %vm3141, %v3308
    %v3311 = vld [vmem:[#allocation2 + $0xe] sm:$0x1]
    %v3312 = vld [vmem:[#allocation2 + $0x1e] sm:$0x1]
    %v3313 = vld [vmem:[#allocation2 + $0x2e] sm:$0x1]
    %v3314 = vld [vmem:[#allocation2 + $0x3e] sm:$0x1]
    %v3319 = vrot.slane %v3312, 7
    %v3320 = vsel %vm3016, %v3319, %v3311
    %v3321 = vsel %vm3018, %v3319, %v3320
    %v3322 = vrot.slane %v3313, 6
    %v3323 = vsel %vm3021, %v3322, %v3321
    %v3324 = vsel %vm3023, %v3322, %v3323
    %v3325 = vrot.slane %v3314, 5
    %v3326 = vsel %vm3026, %v3325, %v3324
    %v3327 = vsel %vm3028, %v3325, %v3326
    %3328 = vrot.lane.b32.xlu0 %v3327, 96
    %v3329 = vpop.permute.xlu0 %3328
    %3331 = vst.msk [vmem:[#allocation12 + $0x4] sm:$0xf] %vm3163, %v3329
    %v3332 = vld [vmem:[#allocation2 + $0xf] sm:$0x1]
    %v3333 = vld [vmem:[#allocation2 + $0x1f] sm:$0x1]
    %v3334 = vld [vmem:[#allocation2 + $0x2f] sm:$0x1]
    %v3335 = vld [vmem:[#allocation2 + $0x3f] sm:$0x1]
    %v3340 = vrot.slane %v3333, 7
    %v3341 = vsel %vm3016, %v3340, %v3332
    %v3342 = vsel %vm3018, %v3340, %v3341
    %v3343 = vrot.slane %v3334, 6
    %v3344 = vsel %vm3021, %v3343, %v3342
    %v3345 = vsel %vm3023, %v3343, %v3344
    %v3346 = vrot.slane %v3335, 5
    %v3347 = vsel %vm3026, %v3346, %v3345
    %v3348 = vsel %vm3028, %v3346, %v3347
    %3349 = vrot.lane.b32.xlu0 %v3348, 112
    %v3350 = vpop.permute.xlu0 %3349
    %3352 = vst.msk [vmem:[#allocation12 + $0x4] sm:$0xf] %vm3185, %v3350
    // Predicated region
    $region58: #{tpu_custom_call.1} parent=1 // pred_check
      _
    $region59: #{tpu_custom_call.1} parent=1 // pred_check_branch
      %3354 = sbr.rel (0) target = $region61
    $region60: #{tpu_custom_call.1} parent=1 // pred_region
      %s3356 = ssub.s32 128, 128
      %3357 = vsyncadd [#allocation5], %s3356
      %s3359 = sshll.u32 [#allocation12], 4
      %s3360 = int_to_ptr.vmem [resolvable:$true] %s3359
      %3362 = dma.vmem_to_hbm [thread:$0]  %s3360, 128, %s9, [#allocation5]
    $region61: #{tpu_custom_call.1} parent=1 // pred_fallthru
      _
    // Predicated region
    $region62: #{tpu_custom_call.1} parent=1 // pred_check
      _
    $region63: #{tpu_custom_call.1} parent=1 // pred_check_branch
      %3364 = sbr.rel (0) target = $region65
    $region64: #{tpu_custom_call.1} parent=1 // pred_region
      %3365 = dma.done [#allocation5], 128
    $region65: #{tpu_custom_call.1} parent=1 // pred_fallthru
      _
    %3366 = vsyncpa [#allocation4], 1
    %3367 = vsyncpa [#allocation7], 1
    %3368 = vsyncpa [#allocation10], 1
    %3369 = vsyncpa [#allocation5], 1

</llo_original>
